<compile_context>
chip_gen: v7x
topology: tpu7x:2x2x1
jax: 0.10.0
libtpu: 0.0.40
codegen_flags: <defaults>
</compile_context>

<pallas_src>
import functools

import jax
import jax.numpy as jnp
import numpy as np
from jax.experimental import pallas as pl
from jax.experimental.pallas import tpu as pltpu


def _round_up(x, m):
    return ((x + m - 1) // m) * m


def _nbytes(shape, dtype):
    return int(np.prod(shape)) * jnp.dtype(dtype).itemsize


# ----------------------------------------------------------------------------
# Kernel: one (batch-element, layer) step of the decoder stack.
# ----------------------------------------------------------------------------
def decoder_layer_kernel(
    # inputs
    x_ref, enc_ref, mask_ref,
    wqkv_ref, wo_ref, bqkv_ref, w1_ref, b1_ref, w2_ref, vece_ref,
    outw_ref, outb_ref,
    # outputs
    logits_ref, sa_ref, ca_ref,
    # scratch
    x_res,
    *, num_heads):
    H = num_heads
    T, E = x_ref.shape[1], x_ref.shape[2]
    S = enc_ref.shape[1]
    D = E // H
    scale = 1.0 / float(np.sqrt(D))
    layer = pl.program_id(1)

    # Load the residual stream into the VMEM accumulator on the first layer.
    @pl.when(layer == 0)
    def _():
        x_res[...] = x_ref[0]

    x = x_res[...]                          # (T, E) f32 residual stream
    mask = mask_ref[...]                    # (T, T) additive causal mask

    # ---- per-layer parameters (weights bf16, vectors f32) -------------------
    w_sa_qkv = wqkv_ref[0, 0]               # (E, 3E)
    w_ca_qkv = wqkv_ref[0, 1]
    w_sa_o = wo_ref[0, 0]                   # (E, E)
    w_ca_o = wo_ref[0, 1]
    b_sa_qkv = bqkv_ref[0, 0:1, :]          # (1, 3E)
    b_ca_qkv = bqkv_ref[0, 1:2, :]
    vec = vece_ref[0]                       # (9, E) packed small params
    b_sa_o, b_ca_o, ff_b2 = vec[0:1], vec[1:2], vec[2:3]
    ln1_g, ln1_b = vec[3:4], vec[4:5]
    ln2_g, ln2_b = vec[5:6], vec[6:7]
    ln3_g, ln3_b = vec[7:8], vec[8:9]
    w1 = w1_ref[0]                          # (E, F)
    b1 = b1_ref[0]                          # (1, F)
    w2 = w2_ref[0]                          # (F, E)

    def layernorm(v, g, b, eps=1e-5):
        mu = jnp.mean(v, axis=-1, keepdims=True)
        var = jnp.mean(jnp.square(v - mu), axis=-1, keepdims=True)
        return (v - mu) * jax.lax.rsqrt(var + eps) * g + b

    def split_heads(a2d):
        # (N, E) f32 -> (H, N, D): static lane slices, no activation replication.
        return jnp.stack([a2d[:, h * D:(h + 1) * D] for h in range(H)], axis=0)

    def attention(q2d, k2d, v2d, add_mask):
        qh = split_heads(q2d).astype(jnp.bfloat16)     # (H, Nq, D)
        kh = split_heads(k2d).astype(jnp.bfloat16)     # (H, Nk, D)
        vh = split_heads(v2d).astype(jnp.bfloat16)
        s = jnp.einsum('hqd,hkd->hqk', qh, kh,
                       preferred_element_type=jnp.float32) * scale
        if add_mask is not None:
            s = s + add_mask
        s = s - jnp.max(s, axis=-1, keepdims=True)
        p = jnp.exp(s)
        p = p * pl.reciprocal(jnp.sum(p, axis=-1, keepdims=True), approx=True)
        o = jnp.einsum('hqk,hkd->hqd', p.astype(jnp.bfloat16), vh,
                       preferred_element_type=jnp.float32)
        o2d = jnp.concatenate([o[h] for h in range(H)], axis=-1)   # (Nq, E)
        return o2d, jnp.mean(p, axis=0)                            # (Nq, Nk)

    # ---- 1) masked self-attention + residual + LayerNorm --------------------
    qkv = jnp.dot(x.astype(jnp.bfloat16), w_sa_qkv,
                  preferred_element_type=jnp.float32) + b_sa_qkv   # (T, 3E)
    sa_o2d, sa_w = attention(qkv[:, :E], qkv[:, E:2 * E], qkv[:, 2 * E:], mask)
    sa_out = jnp.dot(sa_o2d.astype(jnp.bfloat16), w_sa_o,
                     preferred_element_type=jnp.float32) + b_sa_o
    x = layernorm(x + sa_out, ln1_g, ln1_b)

    # ---- 2) cross-attention over encoder output + residual + LayerNorm ------
    enc2d = enc_ref[0].astype(jnp.bfloat16)                        # (S, E)
    q_c = jnp.dot(x.astype(jnp.bfloat16), w_ca_qkv[:, :E],
                  preferred_element_type=jnp.float32) + b_ca_qkv[:, :E]
    kv_c = jnp.dot(enc2d, w_ca_qkv[:, E:],
                   preferred_element_type=jnp.float32) + b_ca_qkv[:, E:]
    ca_o2d, ca_w = attention(q_c, kv_c[:, :E], kv_c[:, E:], None)
    ca_out = jnp.dot(ca_o2d.astype(jnp.bfloat16), w_ca_o,
                     preferred_element_type=jnp.float32) + b_ca_o
    x = layernorm(x + ca_out, ln2_g, ln2_b)

    # ---- 3) feed-forward + residual + LayerNorm ------------------------------
    h1 = jnp.maximum(
        jnp.dot(x.astype(jnp.bfloat16), w1,
                preferred_element_type=jnp.float32) + b1, 0.0)
    ff = jnp.dot(h1.astype(jnp.bfloat16), w2,
                 preferred_element_type=jnp.float32) + ff_b2
    x = layernorm(x + ff, ln3_g, ln3_b)

    x_res[...] = x
    sa_ref[0, 0] = sa_w
    ca_ref[0, 0] = ca_w

    # ---- final vocabulary projection (last layer only) ----------------------
    @pl.when(layer == pl.num_programs(1) - 1)
    def _():
        logits = jnp.dot(x.astype(jnp.bfloat16), outw_ref[...],
                         preferred_element_type=jnp.float32) + outb_ref[...]
        logits_ref[0] = logits


# ----------------------------------------------------------------------------
# pallas_call wrapper
# ----------------------------------------------------------------------------
def fused_transformer_decoder(x, enc, mask, params, *, num_heads):
    B, T, E = x.shape
    S = enc.shape[1]
    L = params["wqkv"].shape[0]
    F = params["w1"].shape[-1]
    Vp = params["out_w_p"].shape[1]
    assert E % num_heads == 0

    grid = (B, L)   # (batch element: "parallel", decoder layer: "arbitrary")

    in_specs = [
        pl.BlockSpec((1, T, E), lambda b, l: (b, 0, 0)),            # x
        pl.BlockSpec((1, S, E), lambda b, l: (b, 0, 0)),            # enc
        pl.BlockSpec((T, T), lambda b, l: (0, 0)),                  # mask
        pl.BlockSpec((1, 2, E, 3 * E), lambda b, l: (l, 0, 0, 0)),  # qkv weights
        pl.BlockSpec((1, 2, E, E), lambda b, l: (l, 0, 0, 0)),      # out-proj weights
        pl.BlockSpec((1, 2, 3 * E), lambda b, l: (l, 0, 0)),        # qkv biases
        pl.BlockSpec((1, E, F), lambda b, l: (l, 0, 0)),            # ffn w1
        pl.BlockSpec((1, 1, F), lambda b, l: (l, 0, 0)),            # ffn b1
        pl.BlockSpec((1, F, E), lambda b, l: (l, 0, 0)),            # ffn w2
        pl.BlockSpec((1, 9, E), lambda b, l: (l, 0, 0)),            # packed vecs
        pl.BlockSpec((E, Vp), lambda b, l: (0, 0)),                 # vocab proj W
        pl.BlockSpec((1, Vp), lambda b, l: (0, 0)),                 # vocab proj b
    ]
    out_specs = [
        pl.BlockSpec((1, T, Vp), lambda b, l: (b, 0, 0)),           # logits
        pl.BlockSpec((1, 1, T, T), lambda b, l: (l, b, 0, 0)),      # self-attn w
        pl.BlockSpec((1, 1, T, S), lambda b, l: (l, b, 0, 0)),      # cross-attn w
    ]
    out_shape = [
        jax.ShapeDtypeStruct((B, T, Vp), jnp.float32),
        jax.ShapeDtypeStruct((L, B, T, T), jnp.float32),
        jax.ShapeDtypeStruct((L, B, T, S), jnp.float32),
    ]

    # VMEM budget: double-buffered blocks + headroom for in-kernel temporaries.
    block_bytes = (
        _nbytes((1, T, E), jnp.float32) + _nbytes((1, S, E), jnp.float32)
        + _nbytes((T, T), jnp.float32)
        + _nbytes((1, 2, E, 3 * E), jnp.bfloat16)
        + _nbytes((1, 2, E, E), jnp.bfloat16)
        + _nbytes((1, 2, 3 * E), jnp.float32)
        + _nbytes((1, E, F), jnp.bfloat16) + _nbytes((1, 1, F), jnp.float32)
        + _nbytes((1, F, E), jnp.bfloat16) + _nbytes((1, 9, E), jnp.float32)
        + _nbytes((E, Vp), jnp.bfloat16) + _nbytes((1, Vp), jnp.float32)
        + _nbytes((1, T, Vp), jnp.float32) + _nbytes((1, 1, T, T), jnp.float32)
        + _nbytes((1, 1, T, S), jnp.float32) + _nbytes((T, E), jnp.float32))
    vmem_limit = int(2 * block_bytes + (8 << 20))

    # Advisory cost estimate for the XLA scheduler.
    H, D = num_heads, E // num_heads
    flops_self = 2 * T * E * 3 * E + 4 * H * T * T * D + 2 * T * E * E
    flops_cross = (2 * T * E * E + 2 * S * E * 2 * E
                   + 4 * H * T * S * D + 2 * T * E * E)
    flops_ffn = 4 * T * E * F
    flops = B * (L * (flops_self + flops_cross + flops_ffn) + 2 * T * E * Vp)
    transcendentals = B * L * H * T * (T + S)
    bytes_accessed = (
        _nbytes((B, T, E), jnp.float32) + _nbytes((B, S, E), jnp.float32)
        + L * (_nbytes((2, E, 3 * E), jnp.bfloat16)
               + _nbytes((2, E, E), jnp.bfloat16)
               + _nbytes((E, F), jnp.bfloat16) + _nbytes((F, E), jnp.bfloat16))
        + _nbytes((E, Vp), jnp.bfloat16)
        + _nbytes((B, T, Vp), jnp.float32)
        + _nbytes((L, B, T, T + S), jnp.float32))

    kernel = functools.partial(decoder_layer_kernel, num_heads=num_heads)

    logits_p, sa, ca = pl.pallas_call(
        kernel,
        grid=grid,
        in_specs=in_specs,
        out_specs=out_specs,
        out_shape=out_shape,
        scratch_shapes=[pltpu.VMEM((T, E), jnp.float32)],
        compiler_params=pltpu.CompilerParams(
            dimension_semantics=("parallel", "arbitrary"),
            vmem_limit_bytes=vmem_limit),
        cost_estimate=pl.CostEstimate(
            flops=int(flops),
            transcendentals=int(transcendentals),
            bytes_accessed=int(bytes_accessed)),
    )(x, enc, mask,
      params["wqkv"], params["wo"], params["bqkv"],
      params["w1"], params["b1"], params["w2"], params["vece"],
      params["out_w_p"], params["out_b_p"])
    return logits_p, sa, ca


# ----------------------------------------------------------------------------
# Glue: embedding / positional encoding / parameter packing / forward
# ----------------------------------------------------------------------------
def sinusoidal_pos_encoding(max_len, embed_dim):
    pe = np.zeros((max_len, embed_dim), dtype=np.float32)
    position = np.arange(0, max_len, dtype=np.float32)[:, None]
    div_term = np.exp(np.arange(0, embed_dim, 2, dtype=np.float32)
                      * -(np.log(10000.0) / embed_dim))
    pe[:, 0::2] = np.sin(position * div_term)
    pe[:, 1::2] = np.cos(position * div_term)
    return jnp.asarray(pe)[None]          # (1, max_len, E)


def causal_mask(seq_len):
    # Large finite negative (not -inf) so masked rows can never produce NaN.
    return jnp.triu(jnp.full((seq_len, seq_len), -1e9, dtype=jnp.float32), k=1)


def init_block_params(key, embed_dim, ff_dim):
    E, F = embed_dim, ff_dim
    ks = jax.random.split(key, 12)
    w = lambda k, s: 0.05 * jax.random.normal(k, s, jnp.float32)
    b = lambda k, s: 0.01 * jax.random.normal(k, s, jnp.float32)
    return dict(
        sa_w_in=w(ks[0], (E, 3 * E)), sa_b_in=b(ks[1], (3 * E,)),
        sa_w_out=w(ks[2], (E, E)),    sa_b_out=b(ks[3], (E,)),
        ca_w_in=w(ks[4], (E, 3 * E)), ca_b_in=b(ks[5], (3 * E,)),
        ca_w_out=w(ks[6], (E, E)),    ca_b_out=b(ks[7], (E,)),
        ff_w1=w(ks[8], (E, F)),       ff_b1=b(ks[9], (F,)),
        ff_w2=w(ks[10], (F, E)),      ff_b2=b(ks[11], (E,)),
        ln1_g=jnp.ones((E,), jnp.float32), ln1_b=jnp.zeros((E,), jnp.float32),
        ln2_g=jnp.ones((E,), jnp.float32), ln2_b=jnp.zeros((E,), jnp.float32),
        ln3_g=jnp.ones((E,), jnp.float32), ln3_b=jnp.zeros((E,), jnp.float32),
    )


def pack_params(raw_layers, emb_table, pos_enc, out_w, out_b):
    """Consolidate per-layer params into a few stacked arrays (done once)."""
    def stack(fn):
        return jnp.stack([fn(p) for p in raw_layers], axis=0)

    wqkv = stack(lambda p: jnp.stack([p["sa_w_in"], p["ca_w_in"]])
                 ).astype(jnp.bfloat16)                       # (L, 2, E, 3E)
    wo = stack(lambda p: jnp.stack([p["sa_w_out"], p["ca_w_out"]])
               ).astype(jnp.bfloat16)                         # (L, 2, E, E)
    bqkv = stack(lambda p: jnp.stack([p["sa_b_in"], p["ca_b_in"]]))  # (L, 2, 3E)
    w1 = stack(lambda p: p["ff_w1"]).astype(jnp.bfloat16)     # (L, E, F)
    b1 = stack(lambda p: p["ff_b1"].reshape(1, -1))           # (L, 1, F)
    w2 = stack(lambda p: p["ff_w2"]).astype(jnp.bfloat16)     # (L, F, E)
    vece = stack(lambda p: jnp.stack([                        # (L, 9, E)
        p["sa_b_out"], p["ca_b_out"], p["ff_b2"],
        p["ln1_g"], p["ln1_b"], p["ln2_g"], p["ln2_b"],
        p["ln3_g"], p["ln3_b"]]))

    E, V = out_w.shape
    Vp = _round_up(V, 128)
    out_w_p = jnp.zeros((E, Vp), jnp.bfloat16).at[:, :V].set(
        out_w.astype(jnp.bfloat16))
    out_b_p = jnp.zeros((1, Vp), jnp.float32).at[:, :V].set(out_b.reshape(1, -1))
    return dict(emb=emb_table, pos=pos_enc, wqkv=wqkv, wo=wo, bqkv=bqkv,
                w1=w1, b1=b1, w2=w2, vece=vece,
                out_w_p=out_w_p, out_b_p=out_b_p)


def transformer_decoder_forward(tgt, encoder_output, params, *, num_heads,
                                vocab_size):
    T = tgt.shape[1]
    # Embedding + positional encoding (dropout = identity, eval mode).
    x = jnp.take(params["emb"], tgt, axis=0) + params["pos"][:, :T, :]
    mask = causal_mask(T)
    logits_p, sa, ca = fused_transformer_decoder(
        x, encoder_output, mask, params, num_heads=num_heads)
    L = sa.shape[0]
    logits = logits_p[:, :, :vocab_size]
    return logits, {"self_attention": [sa[l] for l in range(L)],
                    "cross_attention": [ca[l] for l in range(L)]}


# ----------------------------------------------------------------------------
# Pure-JAX f32 reference (for correctness validation)
# ----------------------------------------------------------------------------
def reference_forward(tgt, enc, raw_layers, emb, pos, out_w, out_b, num_heads):
    B, T = tgt.shape
    E = emb.shape[1]
    H = num_heads
    D = E // H
    x = jnp.take(emb, tgt, axis=0) + pos[:, :T, :]
    mask = causal_mask(T)

    def ln(v, g, b, eps=1e-5):
        mu = v.mean(-1, keepdims=True)
        var = ((v - mu) ** 2).mean(-1, keepdims=True)
        return (v - mu) / jnp.sqrt(var + eps) * g + b

    def mha(qx, kvx, w_in, b_in, w_out, b_out, m):
        q = qx @ w_in[:, :E] + b_in[:E]
        k = kvx @ w_in[:, E:2 * E] + b_in[E:2 * E]
        v = kvx @ w_in[:, 2 * E:] + b_in[2 * E:]
        heads = lambda a: a.reshape(B, -1, H, D).transpose(0, 2, 1, 3)
        qh, kh, vh = heads(q), heads(k), heads(v)
        s = jnp.einsum('bhqd,bhkd->bhqk', qh, kh) / np.sqrt(D)
        if m is not None:
            s = s + m
        p = jax.nn.softmax(s, axis=-1)
        o = jnp.einsum('bhqk,bhkd->bhqd', p, vh)
        o = o.transpose(0, 2, 1, 3).reshape(B, -1, E)
        return o @ w_out + b_out, p.mean(axis=1)

    sa_list, ca_list = [], []
    for prm in raw_layers:
        sa_o, sa_w = mha(x, x, prm["sa_w_in"], prm["sa_b_in"],
                         prm["sa_w_out"], prm["sa_b_out"], mask)
        x = ln(x + sa_o, prm["ln1_g"], prm["ln1_b"])
        ca_o, ca_w = mha(x, enc, prm["ca_w_in"], prm["ca_b_in"],
                         prm["ca_w_out"], prm["ca_b_out"], None)
        x = ln(x + ca_o, prm["ln2_g"], prm["ln2_b"])
        h = jax.nn.relu(x @ prm["ff_w1"] + prm["ff_b1"])
        x = ln(x + h @ prm["ff_w2"] + prm["ff_b2"], prm["ln3_g"], prm["ln3_b"])
        sa_list.append(sa_w)
        ca_list.append(ca_w)
    return x @ out_w + out_b, sa_list, ca_list


# ----------------------------------------------------------------------------
if __name__ == "__main__":
    num_blocks = 2
    embed_dim = 32
    num_heads = 4
    ff_dim = 64
    vocab_size = 50
    max_seq_len = 100
    batch = 2
    tgt_len = 8
    src_len = 10

    root = jax.random.PRNGKey(0)
    k_tgt, k_enc, k_emb, k_out, k_blocks = jax.random.split(root, 5)

    tgt = jax.random.randint(k_tgt, (batch, tgt_len), 0, vocab_size,
                             dtype=jnp.int32)
    encoder_output = jax.random.normal(
        k_enc, (batch, src_len, embed_dim), jnp.float32)

    emb_table = 0.1 * jax.random.normal(
        k_emb, (vocab_size, embed_dim), jnp.float32)
    pos_enc = sinusoidal_pos_encoding(max_seq_len, embed_dim)
    out_w = 0.05 * jax.random.normal(
        k_out, (embed_dim, vocab_size), jnp.float32)
    out_b = jnp.zeros((vocab_size,), jnp.float32)

    block_keys = jax.random.split(k_blocks, num_blocks)
    raw_layers = [init_block_params(k, embed_dim, ff_dim) for k in block_keys]
    params = pack_params(raw_layers, emb_table, pos_enc, out_w, out_b)

    fwd = jax.jit(functools.partial(
        transformer_decoder_forward, num_heads=num_heads,
        vocab_size=vocab_size))

    logits, attn = fwd(tgt, encoder_output, params)
    jax.block_until_ready(logits)
    jax.block_until_ready(attn["self_attention"][-1])
    jax.block_until_ready(attn["cross_attention"][-1])

    # Shape checks.
    assert logits.shape == (batch, tgt_len, vocab_size)
    assert attn["self_attention"][0].shape == (batch, tgt_len, tgt_len)
    assert attn["cross_attention"][0].shape == (batch, tgt_len, src_len)

    # Softmax sanity: head-averaged attention rows sum to ~1.
    rs = np.asarray(jnp.sum(attn["self_attention"][0], axis=-1))
    assert np.allclose(rs, 1.0, atol=2e-2), f"self-attn row sums off: {rs}"
    rsx = np.asarray(jnp.sum(attn["cross_attention"][0], axis=-1))
    assert np.allclose(rsx, 1.0, atol=2e-2), f"cross-attn row sums off: {rsx}"

    # Numerical check against a pure f32 JAX reference (bf16 matmul tolerance).
    ref_logits, ref_sa, ref_ca = reference_forward(
        tgt, encoder_output, raw_layers, emb_table, pos_enc, out_w, out_b,
        num_heads)
    ld = float(jnp.max(jnp.abs(logits - ref_logits)))
    assert ld < 5e-2, f"logits mismatch vs f32 reference: max|diff|={ld}"
    for l in range(num_blocks):
        sd = float(jnp.max(jnp.abs(attn["self_attention"][l] - ref_sa[l])))
        cd = float(jnp.max(jnp.abs(attn["cross_attention"][l] - ref_ca[l])))
        assert sd < 2e-2, f"self-attn weights mismatch (layer {l}): {sd}"
        assert cd < 2e-2, f"cross-attn weights mismatch (layer {l}): {cd}"

    print("KERNEL_OK")
</pallas_src>

<mosaic_0001>
module attributes {stable_mosaic.version = 11 : i64} {
  func.func @decoder_layer_kernel(%arg0: i32, %arg1: i32, %arg2: memref<1x8x32xf32, #tpu.memory_space<vmem>>, %arg3: memref<1x10x32xf32, #tpu.memory_space<vmem>>, %arg4: memref<8x8xf32, #tpu.memory_space<vmem>>, %arg5: memref<1x2x32x96xbf16, #tpu.memory_space<vmem>>, %arg6: memref<1x2x32x32xbf16, #tpu.memory_space<vmem>>, %arg7: memref<1x2x96xf32, #tpu.memory_space<vmem>>, %arg8: memref<1x32x64xbf16, #tpu.memory_space<vmem>>, %arg9: memref<1x1x64xf32, #tpu.memory_space<vmem>>, %arg10: memref<1x64x32xbf16, #tpu.memory_space<vmem>>, %arg11: memref<1x9x32xf32, #tpu.memory_space<vmem>>, %arg12: memref<32x128xbf16, #tpu.memory_space<vmem>>, %arg13: memref<1x128xf32, #tpu.memory_space<vmem>>, %arg14: memref<1x8x128xf32, #tpu.memory_space<vmem>>, %arg15: memref<1x1x8x8xf32, #tpu.memory_space<vmem>>, %arg16: memref<1x1x8x10xf32, #tpu.memory_space<vmem>>, %arg17: memref<8x32xf32, #tpu.memory_space<vmem>>) attributes {dimension_semantics = [#tpu.dimension_semantics<parallel>, #tpu.dimension_semantics<arbitrary>], iteration_bounds = array<i64: 2, 2>, scalar_prefetch = 0 : i64, scratch_operands = 1 : i64, tpu.core_type = #tpu.core_type<tc>, window_params = [{transform_indices = @transform_0, window_bounds = array<i64: 1, 8, 32>}, {transform_indices = @transform_1, window_bounds = array<i64: 1, 10, 32>}, {pipeline_mode = #tpu.pipeline_mode<synchronous>, transform_indices = @transform_2, window_bounds = array<i64: 8, 8>}, {transform_indices = @transform_3, window_bounds = array<i64: 1, 2, 32, 96>}, {transform_indices = @transform_4, window_bounds = array<i64: 1, 2, 32, 32>}, {transform_indices = @transform_5, window_bounds = array<i64: 1, 2, 96>}, {transform_indices = @transform_6, window_bounds = array<i64: 1, 32, 64>}, {transform_indices = @transform_7, window_bounds = array<i64: 1, 1, 64>}, {transform_indices = @transform_8, window_bounds = array<i64: 1, 64, 32>}, {transform_indices = @transform_9, window_bounds = array<i64: 1, 9, 32>}, {pipeline_mode = #tpu.pipeline_mode<synchronous>, transform_indices = @transform_10, window_bounds = array<i64: 32, 128>}, {pipeline_mode = #tpu.pipeline_mode<synchronous>, transform_indices = @transform_11, window_bounds = array<i64: 1, 128>}, {transform_indices = @transform_12, window_bounds = array<i64: 1, 8, 128>}, {transform_indices = @transform_13, window_bounds = array<i64: 1, 1, 8, 8>}, {transform_indices = @transform_14, window_bounds = array<i64: 1, 1, 8, 10>}]} {
    %c0_i32 = arith.constant 0 : i32
    %0 = arith.cmpi eq, %arg1, %c0_i32 : i32
    %1 = arith.extui %0 : i1 to i32
    %c0_i32_0 = arith.constant 0 : i32
    %2 = arith.cmpi ne, %1, %c0_i32_0 : i32
    scf.if %2 {
      %c0_87 = arith.constant 0 : index
      %c0_88 = arith.constant 0 : index
      %c0_89 = arith.constant 0 : index
      %271 = vector.load %arg2[%c0_87, %c0_88, %c0_89] : memref<1x8x32xf32, #tpu.memory_space<vmem>>, vector<1x8x32xf32>
      %272 = vector.shape_cast %271 : vector<1x8x32xf32> to vector<8x32xf32>
      %c0_90 = arith.constant 0 : index
      %c0_91 = arith.constant 0 : index
      %273 = vector.load %arg17[%c0_90, %c0_91] : memref<8x32xf32, #tpu.memory_space<vmem>>, vector<8x32xf32>
      tpu.vector_store %arg17[%c0_90, %c0_91], %272 {strides = array<i32>} : memref<8x32xf32, #tpu.memory_space<vmem>>, vector<8x32xf32>,
    } else {
    }
    %c0 = arith.constant 0 : index
    %c0_1 = arith.constant 0 : index
    %3 = vector.load %arg17[%c0, %c0_1] : memref<8x32xf32, #tpu.memory_space<vmem>>, vector<8x32xf32>
    %c0_2 = arith.constant 0 : index
    %c0_3 = arith.constant 0 : index
    %4 = vector.load %arg4[%c0_2, %c0_3] : memref<8x8xf32, #tpu.memory_space<vmem>>, vector<8x8xf32>
    %c0_4 = arith.constant 0 : index
    %c0_5 = arith.constant 0 : index
    %c0_6 = arith.constant 0 : index
    %c0_7 = arith.constant 0 : index
    %5 = vector.load %arg5[%c0_4, %c0_5, %c0_6, %c0_7] : memref<1x2x32x96xbf16, #tpu.memory_space<vmem>>, vector<1x1x32x96xbf16>
    %6 = vector.shape_cast %5 : vector<1x1x32x96xbf16> to vector<32x96xbf16>
    %c0_8 = arith.constant 0 : index
    %c1 = arith.constant 1 : index
    %c0_9 = arith.constant 0 : index
    %c0_10 = arith.constant 0 : index
    %7 = vector.load %arg5[%c0_8, %c1, %c0_9, %c0_10] : memref<1x2x32x96xbf16, #tpu.memory_space<vmem>>, vector<1x1x32x96xbf16>
    %8 = vector.shape_cast %7 : vector<1x1x32x96xbf16> to vector<32x96xbf16>
    %c0_11 = arith.constant 0 : index
    %c0_12 = arith.constant 0 : index
    %c0_13 = arith.constant 0 : index
    %c0_14 = arith.constant 0 : index
    %9 = vector.load %arg6[%c0_11, %c0_12, %c0_13, %c0_14] : memref<1x2x32x32xbf16, #tpu.memory_space<vmem>>, vector<1x1x32x32xbf16>
    %10 = vector.shape_cast %9 : vector<1x1x32x32xbf16> to vector<32x32xbf16>
    %c0_15 = arith.constant 0 : index
    %c1_16 = arith.constant 1 : index
    %c0_17 = arith.constant 0 : index
    %c0_18 = arith.constant 0 : index
    %11 = vector.load %arg6[%c0_15, %c1_16, %c0_17, %c0_18] : memref<1x2x32x32xbf16, #tpu.memory_space<vmem>>, vector<1x1x32x32xbf16>
    %12 = vector.shape_cast %11 : vector<1x1x32x32xbf16> to vector<32x32xbf16>
    %c0_19 = arith.constant 0 : index
    %c0_20 = arith.constant 0 : index
    %c0_21 = arith.constant 0 : index
    %13 = vector.load %arg7[%c0_19, %c0_20, %c0_21] : memref<1x2x96xf32, #tpu.memory_space<vmem>>, vector<1x1x96xf32>
    %14 = vector.shape_cast %13 : vector<1x1x96xf32> to vector<1x96xf32>
    %c0_22 = arith.constant 0 : index
    %c1_23 = arith.constant 1 : index
    %c0_24 = arith.constant 0 : index
    %15 = vector.load %arg7[%c0_22, %c1_23, %c0_24] : memref<1x2x96xf32, #tpu.memory_space<vmem>>, vector<1x1x96xf32>
    %16 = vector.shape_cast %15 : vector<1x1x96xf32> to vector<1x96xf32>
    %c0_25 = arith.constant 0 : index
    %c0_26 = arith.constant 0 : index
    %c0_27 = arith.constant 0 : index
    %17 = vector.load %arg11[%c0_25, %c0_26, %c0_27] : memref<1x9x32xf32, #tpu.memory_space<vmem>>, vector<1x9x32xf32>
    %18 = vector.shape_cast %17 : vector<1x9x32xf32> to vector<9x32xf32>
    %19 = vector.extract_strided_slice %18 {offsets = [0, 0], sizes = [1, 32], strides = [1, 1]} : vector<9x32xf32> to vector<1x32xf32>
    %20 = vector.extract_strided_slice %18 {offsets = [1, 0], sizes = [1, 32], strides = [1, 1]} : vector<9x32xf32> to vector<1x32xf32>
    %21 = vector.extract_strided_slice %18 {offsets = [2, 0], sizes = [1, 32], strides = [1, 1]} : vector<9x32xf32> to vector<1x32xf32>
    %22 = vector.extract_strided_slice %18 {offsets = [3, 0], sizes = [1, 32], strides = [1, 1]} : vector<9x32xf32> to vector<1x32xf32>
    %23 = vector.extract_strided_slice %18 {offsets = [4, 0], sizes = [1, 32], strides = [1, 1]} : vector<9x32xf32> to vector<1x32xf32>
    %24 = vector.extract_strided_slice %18 {offsets = [5, 0], sizes = [1, 32], strides = [1, 1]} : vector<9x32xf32> to vector<1x32xf32>
    %25 = vector.extract_strided_slice %18 {offsets = [6, 0], sizes = [1, 32], strides = [1, 1]} : vector<9x32xf32> to vector<1x32xf32>
    %26 = vector.extract_strided_slice %18 {offsets = [7, 0], sizes = [1, 32], strides = [1, 1]} : vector<9x32xf32> to vector<1x32xf32>
    %27 = vector.extract_strided_slice %18 {offsets = [8, 0], sizes = [1, 32], strides = [1, 1]} : vector<9x32xf32> to vector<1x32xf32>
    %c0_28 = arith.constant 0 : index
    %c0_29 = arith.constant 0 : index
    %c0_30 = arith.constant 0 : index
    %28 = vector.load %arg8[%c0_28, %c0_29, %c0_30] : memref<1x32x64xbf16, #tpu.memory_space<vmem>>, vector<1x32x64xbf16>
    %29 = vector.shape_cast %28 : vector<1x32x64xbf16> to vector<32x64xbf16>
    %c0_31 = arith.constant 0 : index
    %c0_32 = arith.constant 0 : index
    %c0_33 = arith.constant 0 : index
    %30 = vector.load %arg9[%c0_31, %c0_32, %c0_33] : memref<1x1x64xf32, #tpu.memory_space<vmem>>, vector<1x1x64xf32>
    %31 = vector.shape_cast %30 : vector<1x1x64xf32> to vector<1x64xf32>
    %c0_34 = arith.constant 0 : index
    %c0_35 = arith.constant 0 : index
    %c0_36 = arith.constant 0 : index
    %32 = vector.load %arg10[%c0_34, %c0_35, %c0_36] : memref<1x64x32xbf16, #tpu.memory_space<vmem>>, vector<1x64x32xbf16>
    %33 = vector.shape_cast %32 : vector<1x64x32xbf16> to vector<64x32xbf16>
    %34 = arith.truncf %3 : vector<8x32xf32> to vector<8x32xbf16>
    %cst = arith.constant dense<0.000000e+00> : vector<8x96xf32>
    %35 = tpu.matmul %34, %6, %cst {dimension_numbers = #tpu.dot_dimension_numbers<[1], [0], [0], [1], [0, 0, 1, 1], [], []>} : vector<8x32xbf16>, vector<32x96xbf16>, vector<8x96xf32> -> vector<8x96xf32>
    %36 = vector.broadcast %14 : vector<1x96xf32> to vector<8x96xf32>
    %37 = arith.addf %35, %36 : vector<8x96xf32>
    %38 = vector.extract_strided_slice %37 {offsets = [0, 0], sizes = [8, 32], strides = [1, 1]} : vector<8x96xf32> to vector<8x32xf32>
    %39 = vector.extract_strided_slice %37 {offsets = [0, 32], sizes = [8, 32], strides = [1, 1]} : vector<8x96xf32> to vector<8x32xf32>
    %40 = vector.extract_strided_slice %37 {offsets = [0, 64], sizes = [8, 32], strides = [1, 1]} : vector<8x96xf32> to vector<8x32xf32>
    %41 = vector.extract_strided_slice %38 {offsets = [0, 0], sizes = [8, 8], strides = [1, 1]} : vector<8x32xf32> to vector<8x8xf32>
    %42 = vector.extract_strided_slice %38 {offsets = [0, 8], sizes = [8, 8], strides = [1, 1]} : vector<8x32xf32> to vector<8x8xf32>
    %43 = vector.extract_strided_slice %38 {offsets = [0, 16], sizes = [8, 8], strides = [1, 1]} : vector<8x32xf32> to vector<8x8xf32>
    %44 = vector.extract_strided_slice %38 {offsets = [0, 24], sizes = [8, 8], strides = [1, 1]} : vector<8x32xf32> to vector<8x8xf32>
    %45 = vector.shape_cast %41 : vector<8x8xf32> to vector<1x8x8xf32>
    %46 = vector.shape_cast %42 : vector<8x8xf32> to vector<1x8x8xf32>
    %47 = vector.shape_cast %43 : vector<8x8xf32> to vector<1x8x8xf32>
    %48 = vector.shape_cast %44 : vector<8x8xf32> to vector<1x8x8xf32>
    %49 = tpu.concatenate %45, %46, %47, %48 in 0 : vector<1x8x8xf32>, vector<1x8x8xf32>, vector<1x8x8xf32>, vector<1x8x8xf32> -> vector<4x8x8xf32>
    %50 = arith.truncf %49 : vector<4x8x8xf32> to vector<4x8x8xbf16>
    %51 = vector.extract_strided_slice %39 {offsets = [0, 0], sizes = [8, 8], strides = [1, 1]} : vector<8x32xf32> to vector<8x8xf32>
    %52 = vector.extract_strided_slice %39 {offsets = [0, 8], sizes = [8, 8], strides = [1, 1]} : vector<8x32xf32> to vector<8x8xf32>
    %53 = vector.extract_strided_slice %39 {offsets = [0, 16], sizes = [8, 8], strides = [1, 1]} : vector<8x32xf32> to vector<8x8xf32>
    %54 = vector.extract_strided_slice %39 {offsets = [0, 24], sizes = [8, 8], strides = [1, 1]} : vector<8x32xf32> to vector<8x8xf32>
    %55 = vector.shape_cast %51 : vector<8x8xf32> to vector<1x8x8xf32>
    %56 = vector.shape_cast %52 : vector<8x8xf32> to vector<1x8x8xf32>
    %57 = vector.shape_cast %53 : vector<8x8xf32> to vector<1x8x8xf32>
    %58 = vector.shape_cast %54 : vector<8x8xf32> to vector<1x8x8xf32>
    %59 = tpu.concatenate %55, %56, %57, %58 in 0 : vector<1x8x8xf32>, vector<1x8x8xf32>, vector<1x8x8xf32>, vector<1x8x8xf32> -> vector<4x8x8xf32>
    %60 = arith.truncf %59 : vector<4x8x8xf32> to vector<4x8x8xbf16>
    %61 = vector.extract_strided_slice %40 {offsets = [0, 0], sizes = [8, 8], strides = [1, 1]} : vector<8x32xf32> to vector<8x8xf32>
    %62 = vector.extract_strided_slice %40 {offsets = [0, 8], sizes = [8, 8], strides = [1, 1]} : vector<8x32xf32> to vector<8x8xf32>
    %63 = vector.extract_strided_slice %40 {offsets = [0, 16], sizes = [8, 8], strides = [1, 1]} : vector<8x32xf32> to vector<8x8xf32>
    %64 = vector.extract_strided_slice %40 {offsets = [0, 24], sizes = [8, 8], strides = [1, 1]} : vector<8x32xf32> to vector<8x8xf32>
    %65 = vector.shape_cast %61 : vector<8x8xf32> to vector<1x8x8xf32>
    %66 = vector.shape_cast %62 : vector<8x8xf32> to vector<1x8x8xf32>
    %67 = vector.shape_cast %63 : vector<8x8xf32> to vector<1x8x8xf32>
    %68 = vector.shape_cast %64 : vector<8x8xf32> to vector<1x8x8xf32>
    %69 = tpu.concatenate %65, %66, %67, %68 in 0 : vector<1x8x8xf32>, vector<1x8x8xf32>, vector<1x8x8xf32>, vector<1x8x8xf32> -> vector<4x8x8xf32>
    %70 = arith.truncf %69 : vector<4x8x8xf32> to vector<4x8x8xbf16>
    "tpu.trace_start"() <{level = 10 : i32, message = "hqd,hkd->hqk"}> : () -> ()
    %cst_37 = arith.constant dense<0.000000e+00> : vector<4x8x8xf32>
    %71 = tpu.matmul %50, %60, %cst_37 {dimension_numbers = #tpu.dot_dimension_numbers<[2], [2], [1], [1], [0, 0, 0, 1, 1, 1], [0], [0]>} : vector<4x8x8xbf16>, vector<4x8x8xbf16>, vector<4x8x8xf32> -> vector<4x8x8xf32>
    "tpu.trace_stop"() : () -> ()
    %cst_38 = arith.constant 0.353553385 : f32
    %72 = vector.broadcast %cst_38 : f32 to vector<4x8x8xf32>
    %73 = arith.mulf %71, %72 : vector<4x8x8xf32>
    %74 = vector.shape_cast %4 : vector<8x8xf32> to vector<1x8x8xf32>
    %75 = vector.broadcast %74 : vector<1x8x8xf32> to vector<4x8x8xf32>
    %76 = arith.addf %73, %75 : vector<4x8x8xf32>
    %cst_39 = arith.constant dense<0xFF800000> : vector<4x8xf32>
    %77 = vector.multi_reduction <maximumf>, %76, %cst_39 [2] : vector<4x8x8xf32> to vector<4x8xf32>
    %78 = vector.shape_cast %77 : vector<4x8xf32> to vector<4x8x1xf32>
    %79 = vector.broadcast %78 : vector<4x8x1xf32> to vector<4x8x8xf32>
    %80 = arith.subf %76, %79 : vector<4x8x8xf32>
    %81 = math.exp %80 : vector<4x8x8xf32>
    %cst_40 = arith.constant dense<0.000000e+00> : vector<4x8xf32>
    %82 = vector.multi_reduction <add>, %81, %cst_40 [2] : vector<4x8x8xf32> to vector<4x8xf32>
    %83 = vector.shape_cast %82 : vector<4x8xf32> to vector<4x8x1xf32>
    %84 = tpu.reciprocal %83 {approx = true} : vector<4x8x1xf32> -> vector<4x8x1xf32>
    %85 = vector.broadcast %84 : vector<4x8x1xf32> to vector<4x8x8xf32>
    %86 = arith.mulf %81, %85 : vector<4x8x8xf32>
    %87 = arith.truncf %86 : vector<4x8x8xf32> to vector<4x8x8xbf16>
    "tpu.trace_start"() <{level = 10 : i32, message = "hqk,hkd->hqd"}> : () -> ()
    %cst_41 = arith.constant dense<0.000000e+00> : vector<4x8x8xf32>
    %88 = tpu.matmul %87, %70, %cst_41 {dimension_numbers = #tpu.dot_dimension_numbers<[2], [1], [1], [2], [0, 0, 0, 1, 1, 2], [0], [0]>} : vector<4x8x8xbf16>, vector<4x8x8xbf16>, vector<4x8x8xf32> -> vector<4x8x8xf32>
    "tpu.trace_stop"() : () -> ()
    %89 = vector.extract_strided_slice %88 {offsets = [0, 0, 0], sizes = [1, 8, 8], strides = [1, 1, 1]} : vector<4x8x8xf32> to vector<1x8x8xf32>
    %90 = vector.shape_cast %89 : vector<1x8x8xf32> to vector<8x8xf32>
    %91 = vector.extract_strided_slice %88 {offsets = [1, 0, 0], sizes = [1, 8, 8], strides = [1, 1, 1]} : vector<4x8x8xf32> to vector<1x8x8xf32>
    %92 = vector.shape_cast %91 : vector<1x8x8xf32> to vector<8x8xf32>
    %93 = vector.extract_strided_slice %88 {offsets = [2, 0, 0], sizes = [1, 8, 8], strides = [1, 1, 1]} : vector<4x8x8xf32> to vector<1x8x8xf32>
    %94 = vector.shape_cast %93 : vector<1x8x8xf32> to vector<8x8xf32>
    %95 = vector.extract_strided_slice %88 {offsets = [3, 0, 0], sizes = [1, 8, 8], strides = [1, 1, 1]} : vector<4x8x8xf32> to vector<1x8x8xf32>
    %96 = vector.shape_cast %95 : vector<1x8x8xf32> to vector<8x8xf32>
    %97 = tpu.concatenate %90, %92, %94, %96 in 1 : vector<8x8xf32>, vector<8x8xf32>, vector<8x8xf32>, vector<8x8xf32> -> vector<8x32xf32>
    %cst_42 = arith.constant dense<0.000000e+00> : vector<8x8xf32>
    %98 = vector.multi_reduction <add>, %86, %cst_42 [0] : vector<4x8x8xf32> to vector<8x8xf32>
    %cst_43 = arith.constant 4.000000e+00 : f32
    %99 = vector.broadcast %cst_43 : f32 to vector<8x8xf32>
    %100 = arith.divf %98, %99 : vector<8x8xf32>
    %101 = arith.truncf %97 : vector<8x32xf32> to vector<8x32xbf16>
    %cst_44 = arith.constant dense<0.000000e+00> : vector<8x32xf32>
    %102 = tpu.matmul %101, %10, %cst_44 {dimension_numbers = #tpu.dot_dimension_numbers<[1], [0], [0], [1], [0, 0, 1, 1], [], []>} : vector<8x32xbf16>, vector<32x32xbf16>, vector<8x32xf32> -> vector<8x32xf32>
    %103 = vector.broadcast %19 : vector<1x32xf32> to vector<8x32xf32>
    %104 = arith.addf %102, %103 : vector<8x32xf32>
    %105 = arith.addf %3, %104 : vector<8x32xf32>
    %cst_45 = arith.constant dense<0.000000e+00> : vector<8xf32>
    %106 = vector.multi_reduction <add>, %105, %cst_45 [1] : vector<8x32xf32> to vector<8xf32>
    %107 = vector.shape_cast %106 : vector<8xf32> to vector<8x1xf32>
    %cst_46 = arith.constant 3.200000e+01 : f32
    %108 = vector.broadcast %cst_46 : f32 to vector<8x1xf32>
    %109 = arith.divf %107, %108 : vector<8x1xf32>
    %110 = vector.broadcast %109 : vector<8x1xf32> to vector<8x32xf32>
    %111 = arith.subf %105, %110 : vector<8x32xf32>
    %112 = arith.mulf %111, %111 : vector<8x32xf32>
    %cst_47 = arith.constant dense<0.000000e+00> : vector<8xf32>
    %113 = vector.multi_reduction <add>, %112, %cst_47 [1] : vector<8x32xf32> to vector<8xf32>
    %114 = vector.shape_cast %113 : vector<8xf32> to vector<8x1xf32>
    %cst_48 = arith.constant 3.200000e+01 : f32
    %115 = vector.broadcast %cst_48 : f32 to vector<8x1xf32>
    %116 = arith.divf %114, %115 : vector<8x1xf32>
    %117 = vector.broadcast %109 : vector<8x1xf32> to vector<8x32xf32>
    %118 = arith.subf %105, %117 : vector<8x32xf32>
    %cst_49 = arith.constant 9.99999974E-6 : f32
    %119 = vector.broadcast %cst_49 : f32 to vector<8x1xf32>
    %120 = arith.addf %116, %119 : vector<8x1xf32>
    %121 = math.rsqrt %120 : vector<8x1xf32>
    %122 = vector.broadcast %121 : vector<8x1xf32> to vector<8x32xf32>
    %123 = arith.mulf %118, %122 : vector<8x32xf32>
    %124 = vector.broadcast %22 : vector<1x32xf32> to vector<8x32xf32>
    %125 = arith.mulf %123, %124 : vector<8x32xf32>
    %126 = vector.broadcast %23 : vector<1x32xf32> to vector<8x32xf32>
    %127 = arith.addf %125, %126 : vector<8x32xf32>
    %c0_50 = arith.constant 0 : index
    %c0_51 = arith.constant 0 : index
    %c0_52 = arith.constant 0 : index
    %128 = vector.load %arg3[%c0_50, %c0_51, %c0_52] : memref<1x10x32xf32, #tpu.memory_space<vmem>>, vector<1x10x32xf32>
    %129 = vector.shape_cast %128 : vector<1x10x32xf32> to vector<10x32xf32>
    %130 = arith.truncf %129 : vector<10x32xf32> to vector<10x32xbf16>
    %131 = arith.truncf %127 : vector<8x32xf32> to vector<8x32xbf16>
    %132 = vector.extract_strided_slice %8 {offsets = [0, 0], sizes = [32, 32], strides = [1, 1]} : vector<32x96xbf16> to vector<32x32xbf16>
    %cst_53 = arith.constant dense<0.000000e+00> : vector<8x32xf32>
    %133 = tpu.matmul %131, %132, %cst_53 {dimension_numbers = #tpu.dot_dimension_numbers<[1], [0], [0], [1], [0, 0, 1, 1], [], []>} : vector<8x32xbf16>, vector<32x32xbf16>, vector<8x32xf32> -> vector<8x32xf32>
    %134 = vector.extract_strided_slice %16 {offsets = [0, 0], sizes = [1, 32], strides = [1, 1]} : vector<1x96xf32> to vector<1x32xf32>
    %135 = vector.broadcast %134 : vector<1x32xf32> to vector<8x32xf32>
    %136 = arith.addf %133, %135 : vector<8x32xf32>
    %137 = vector.extract_strided_slice %8 {offsets = [0, 32], sizes = [32, 64], strides = [1, 1]} : vector<32x96xbf16> to vector<32x64xbf16>
    %cst_54 = arith.constant dense<0.000000e+00> : vector<10x64xf32>
    %138 = tpu.matmul %130, %137, %cst_54 {dimension_numbers = #tpu.dot_dimension_numbers<[1], [0], [0], [1], [0, 0, 1, 1], [], []>} : vector<10x32xbf16>, vector<32x64xbf16>, vector<10x64xf32> -> vector<10x64xf32>
    %139 = vector.extract_strided_slice %16 {offsets = [0, 32], sizes = [1, 64], strides = [1, 1]} : vector<1x96xf32> to vector<1x64xf32>
    %140 = vector.broadcast %139 : vector<1x64xf32> to vector<10x64xf32>
    %141 = arith.addf %138, %140 : vector<10x64xf32>
    %142 = vector.extract_strided_slice %141 {offsets = [0, 0], sizes = [10, 32], strides = [1, 1]} : vector<10x64xf32> to vector<10x32xf32>
    %143 = vector.extract_strided_slice %141 {offsets = [0, 32], sizes = [10, 32], strides = [1, 1]} : vector<10x64xf32> to vector<10x32xf32>
    %144 = vector.extract_strided_slice %136 {offsets = [0, 0], sizes = [8, 8], strides = [1, 1]} : vector<8x32xf32> to vector<8x8xf32>
    %145 = vector.extract_strided_slice %136 {offsets = [0, 8], sizes = [8, 8], strides = [1, 1]} : vector<8x32xf32> to vector<8x8xf32>
    %146 = vector.extract_strided_slice %136 {offsets = [0, 16], sizes = [8, 8], strides = [1, 1]} : vector<8x32xf32> to vector<8x8xf32>
    %147 = vector.extract_strided_slice %136 {offsets = [0, 24], sizes = [8, 8], strides = [1, 1]} : vector<8x32xf32> to vector<8x8xf32>
    %148 = vector.shape_cast %144 : vector<8x8xf32> to vector<1x8x8xf32>
    %149 = vector.shape_cast %145 : vector<8x8xf32> to vector<1x8x8xf32>
    %150 = vector.shape_cast %146 : vector<8x8xf32> to vector<1x8x8xf32>
    %151 = vector.shape_cast %147 : vector<8x8xf32> to vector<1x8x8xf32>
    %152 = tpu.concatenate %148, %149, %150, %151 in 0 : vector<1x8x8xf32>, vector<1x8x8xf32>, vector<1x8x8xf32>, vector<1x8x8xf32> -> vector<4x8x8xf32>
    %153 = arith.truncf %152 : vector<4x8x8xf32> to vector<4x8x8xbf16>
    %154 = vector.extract_strided_slice %142 {offsets = [0, 0], sizes = [10, 8], strides = [1, 1]} : vector<10x32xf32> to vector<10x8xf32>
    %155 = vector.extract_strided_slice %142 {offsets = [0, 8], sizes = [10, 8], strides = [1, 1]} : vector<10x32xf32> to vector<10x8xf32>
    %156 = vector.extract_strided_slice %142 {offsets = [0, 16], sizes = [10, 8], strides = [1, 1]} : vector<10x32xf32> to vector<10x8xf32>
    %157 = vector.extract_strided_slice %142 {offsets = [0, 24], sizes = [10, 8], strides = [1, 1]} : vector<10x32xf32> to vector<10x8xf32>
    %158 = vector.shape_cast %154 : vector<10x8xf32> to vector<1x10x8xf32>
    %159 = vector.shape_cast %155 : vector<10x8xf32> to vector<1x10x8xf32>
    %160 = vector.shape_cast %156 : vector<10x8xf32> to vector<1x10x8xf32>
    %161 = vector.shape_cast %157 : vector<10x8xf32> to vector<1x10x8xf32>
    %162 = tpu.concatenate %158, %159, %160, %161 in 0 : vector<1x10x8xf32>, vector<1x10x8xf32>, vector<1x10x8xf32>, vector<1x10x8xf32> -> vector<4x10x8xf32>
    %163 = arith.truncf %162 : vector<4x10x8xf32> to vector<4x10x8xbf16>
    %164 = vector.extract_strided_slice %143 {offsets = [0, 0], sizes = [10, 8], strides = [1, 1]} : vector<10x32xf32> to vector<10x8xf32>
    %165 = vector.extract_strided_slice %143 {offsets = [0, 8], sizes = [10, 8], strides = [1, 1]} : vector<10x32xf32> to vector<10x8xf32>
    %166 = vector.extract_strided_slice %143 {offsets = [0, 16], sizes = [10, 8], strides = [1, 1]} : vector<10x32xf32> to vector<10x8xf32>
    %167 = vector.extract_strided_slice %143 {offsets = [0, 24], sizes = [10, 8], strides = [1, 1]} : vector<10x32xf32> to vector<10x8xf32>
    %168 = vector.shape_cast %164 : vector<10x8xf32> to vector<1x10x8xf32>
    %169 = vector.shape_cast %165 : vector<10x8xf32> to vector<1x10x8xf32>
    %170 = vector.shape_cast %166 : vector<10x8xf32> to vector<1x10x8xf32>
    %171 = vector.shape_cast %167 : vector<10x8xf32> to vector<1x10x8xf32>
    %172 = tpu.concatenate %168, %169, %170, %171 in 0 : vector<1x10x8xf32>, vector<1x10x8xf32>, vector<1x10x8xf32>, vector<1x10x8xf32> -> vector<4x10x8xf32>
    %173 = arith.truncf %172 : vector<4x10x8xf32> to vector<4x10x8xbf16>
    "tpu.trace_start"() <{level = 10 : i32, message = "hqd,hkd->hqk"}> : () -> ()
    %cst_55 = arith.constant dense<0.000000e+00> : vector<4x8x10xf32>
    %174 = tpu.matmul %153, %163, %cst_55 {dimension_numbers = #tpu.dot_dimension_numbers<[2], [2], [1], [1], [0, 0, 0, 1, 1, 1], [0], [0]>} : vector<4x8x8xbf16>, vector<4x10x8xbf16>, vector<4x8x10xf32> -> vector<4x8x10xf32>
    "tpu.trace_stop"() : () -> ()
    %cst_56 = arith.constant 0.353553385 : f32
    %175 = vector.broadcast %cst_56 : f32 to vector<4x8x10xf32>
    %176 = arith.mulf %174, %175 : vector<4x8x10xf32>
    %cst_57 = arith.constant dense<0xFF800000> : vector<4x8xf32>
    %177 = vector.multi_reduction <maximumf>, %176, %cst_57 [2] : vector<4x8x10xf32> to vector<4x8xf32>
    %178 = vector.shape_cast %177 : vector<4x8xf32> to vector<4x8x1xf32>
    %179 = vector.broadcast %178 : vector<4x8x1xf32> to vector<4x8x10xf32>
    %180 = arith.subf %176, %179 : vector<4x8x10xf32>
    %181 = math.exp %180 : vector<4x8x10xf32>
    %cst_58 = arith.constant dense<0.000000e+00> : vector<4x8xf32>
    %182 = vector.multi_reduction <add>, %181, %cst_58 [2] : vector<4x8x10xf32> to vector<4x8xf32>
    %183 = vector.shape_cast %182 : vector<4x8xf32> to vector<4x8x1xf32>
    %184 = tpu.reciprocal %183 {approx = true} : vector<4x8x1xf32> -> vector<4x8x1xf32>
    %185 = vector.broadcast %184 : vector<4x8x1xf32> to vector<4x8x10xf32>
    %186 = arith.mulf %181, %185 : vector<4x8x10xf32>
    %187 = arith.truncf %186 : vector<4x8x10xf32> to vector<4x8x10xbf16>
    "tpu.trace_start"() <{level = 10 : i32, message = "hqk,hkd->hqd"}> : () -> ()
    %cst_59 = arith.constant dense<0.000000e+00> : vector<4x8x8xf32>
    %188 = tpu.matmul %187, %173, %cst_59 {dimension_numbers = #tpu.dot_dimension_numbers<[2], [1], [1], [2], [0, 0, 0, 1, 1, 2], [0], [0]>} : vector<4x8x10xbf16>, vector<4x10x8xbf16>, vector<4x8x8xf32> -> vector<4x8x8xf32>
    "tpu.trace_stop"() : () -> ()
    %189 = vector.extract_strided_slice %188 {offsets = [0, 0, 0], sizes = [1, 8, 8], strides = [1, 1, 1]} : vector<4x8x8xf32> to vector<1x8x8xf32>
    %190 = vector.shape_cast %189 : vector<1x8x8xf32> to vector<8x8xf32>
    %191 = vector.extract_strided_slice %188 {offsets = [1, 0, 0], sizes = [1, 8, 8], strides = [1, 1, 1]} : vector<4x8x8xf32> to vector<1x8x8xf32>
    %192 = vector.shape_cast %191 : vector<1x8x8xf32> to vector<8x8xf32>
    %193 = vector.extract_strided_slice %188 {offsets = [2, 0, 0], sizes = [1, 8, 8], strides = [1, 1, 1]} : vector<4x8x8xf32> to vector<1x8x8xf32>
    %194 = vector.shape_cast %193 : vector<1x8x8xf32> to vector<8x8xf32>
    %195 = vector.extract_strided_slice %188 {offsets = [3, 0, 0], sizes = [1, 8, 8], strides = [1, 1, 1]} : vector<4x8x8xf32> to vector<1x8x8xf32>
    %196 = vector.shape_cast %195 : vector<1x8x8xf32> to vector<8x8xf32>
    %197 = tpu.concatenate %190, %192, %194, %196 in 1 : vector<8x8xf32>, vector<8x8xf32>, vector<8x8xf32>, vector<8x8xf32> -> vector<8x32xf32>
    %cst_60 = arith.constant dense<0.000000e+00> : vector<8x10xf32>
    %198 = vector.multi_reduction <add>, %186, %cst_60 [0] : vector<4x8x10xf32> to vector<8x10xf32>
    %cst_61 = arith.constant 4.000000e+00 : f32
    %199 = vector.broadcast %cst_61 : f32 to vector<8x10xf32>
    %200 = arith.divf %198, %199 : vector<8x10xf32>
    %201 = arith.truncf %197 : vector<8x32xf32> to vector<8x32xbf16>
    %cst_62 = arith.constant dense<0.000000e+00> : vector<8x32xf32>
    %202 = tpu.matmul %201, %12, %cst_62 {dimension_numbers = #tpu.dot_dimension_numbers<[1], [0], [0], [1], [0, 0, 1, 1], [], []>} : vector<8x32xbf16>, vector<32x32xbf16>, vector<8x32xf32> -> vector<8x32xf32>
    %203 = vector.broadcast %20 : vector<1x32xf32> to vector<8x32xf32>
    %204 = arith.addf %202, %203 : vector<8x32xf32>
    %205 = arith.addf %127, %204 : vector<8x32xf32>
    %cst_63 = arith.constant dense<0.000000e+00> : vector<8xf32>
    %206 = vector.multi_reduction <add>, %205, %cst_63 [1] : vector<8x32xf32> to vector<8xf32>
    %207 = vector.shape_cast %206 : vector<8xf32> to vector<8x1xf32>
    %cst_64 = arith.constant 3.200000e+01 : f32
    %208 = vector.broadcast %cst_64 : f32 to vector<8x1xf32>
    %209 = arith.divf %207, %208 : vector<8x1xf32>
    %210 = vector.broadcast %209 : vector<8x1xf32> to vector<8x32xf32>
    %211 = arith.subf %205, %210 : vector<8x32xf32>
    %212 = arith.mulf %211, %211 : vector<8x32xf32>
    %cst_65 = arith.constant dense<0.000000e+00> : vector<8xf32>
    %213 = vector.multi_reduction <add>, %212, %cst_65 [1] : vector<8x32xf32> to vector<8xf32>
    %214 = vector.shape_cast %213 : vector<8xf32> to vector<8x1xf32>
    %cst_66 = arith.constant 3.200000e+01 : f32
    %215 = vector.broadcast %cst_66 : f32 to vector<8x1xf32>
    %216 = arith.divf %214, %215 : vector<8x1xf32>
    %217 = vector.broadcast %209 : vector<8x1xf32> to vector<8x32xf32>
    %218 = arith.subf %205, %217 : vector<8x32xf32>
    %cst_67 = arith.constant 9.99999974E-6 : f32
    %219 = vector.broadcast %cst_67 : f32 to vector<8x1xf32>
    %220 = arith.addf %216, %219 : vector<8x1xf32>
    %221 = math.rsqrt %220 : vector<8x1xf32>
    %222 = vector.broadcast %221 : vector<8x1xf32> to vector<8x32xf32>
    %223 = arith.mulf %218, %222 : vector<8x32xf32>
    %224 = vector.broadcast %24 : vector<1x32xf32> to vector<8x32xf32>
    %225 = arith.mulf %223, %224 : vector<8x32xf32>
    %226 = vector.broadcast %25 : vector<1x32xf32> to vector<8x32xf32>
    %227 = arith.addf %225, %226 : vector<8x32xf32>
    %228 = arith.truncf %227 : vector<8x32xf32> to vector<8x32xbf16>
    %cst_68 = arith.constant dense<0.000000e+00> : vector<8x64xf32>
    %229 = tpu.matmul %228, %29, %cst_68 {dimension_numbers = #tpu.dot_dimension_numbers<[1], [0], [0], [1], [0, 0, 1, 1], [], []>} : vector<8x32xbf16>, vector<32x64xbf16>, vector<8x64xf32> -> vector<8x64xf32>
    %230 = vector.broadcast %31 : vector<1x64xf32> to vector<8x64xf32>
    %231 = arith.addf %229, %230 : vector<8x64xf32>
    %cst_69 = arith.constant 0.000000e+00 : f32
    %232 = vector.broadcast %cst_69 : f32 to vector<8x64xf32>
    %233 = arith.maximumf %231, %232 : vector<8x64xf32>
    %234 = arith.truncf %233 : vector<8x64xf32> to vector<8x64xbf16>
    %cst_70 = arith.constant dense<0.000000e+00> : vector<8x32xf32>
    %235 = tpu.matmul %234, %33, %cst_70 {dimension_numbers = #tpu.dot_dimension_numbers<[1], [0], [0], [1], [0, 0, 1, 1], [], []>} : vector<8x64xbf16>, vector<64x32xbf16>, vector<8x32xf32> -> vector<8x32xf32>
    %236 = vector.broadcast %21 : vector<1x32xf32> to vector<8x32xf32>
    %237 = arith.addf %235, %236 : vector<8x32xf32>
    %238 = arith.addf %227, %237 : vector<8x32xf32>
    %cst_71 = arith.constant dense<0.000000e+00> : vector<8xf32>
    %239 = vector.multi_reduction <add>, %238, %cst_71 [1] : vector<8x32xf32> to vector<8xf32>
    %240 = vector.shape_cast %239 : vector<8xf32> to vector<8x1xf32>
    %cst_72 = arith.constant 3.200000e+01 : f32
    %241 = vector.broadcast %cst_72 : f32 to vector<8x1xf32>
    %242 = arith.divf %240, %241 : vector<8x1xf32>
    %243 = vector.broadcast %242 : vector<8x1xf32> to vector<8x32xf32>
    %244 = arith.subf %238, %243 : vector<8x32xf32>
    %245 = arith.mulf %244, %244 : vector<8x32xf32>
    %cst_73 = arith.constant dense<0.000000e+00> : vector<8xf32>
    %246 = vector.multi_reduction <add>, %245, %cst_73 [1] : vector<8x32xf32> to vector<8xf32>
    %247 = vector.shape_cast %246 : vector<8xf32> to vector<8x1xf32>
    %cst_74 = arith.constant 3.200000e+01 : f32
    %248 = vector.broadcast %cst_74 : f32 to vector<8x1xf32>
    %249 = arith.divf %247, %248 : vector<8x1xf32>
    %250 = vector.broadcast %242 : vector<8x1xf32> to vector<8x32xf32>
    %251 = arith.subf %238, %250 : vector<8x32xf32>
    %cst_75 = arith.constant 9.99999974E-6 : f32
    %252 = vector.broadcast %cst_75 : f32 to vector<8x1xf32>
    %253 = arith.addf %249, %252 : vector<8x1xf32>
    %254 = math.rsqrt %253 : vector<8x1xf32>
    %255 = vector.broadcast %254 : vector<8x1xf32> to vector<8x32xf32>
    %256 = arith.mulf %251, %255 : vector<8x32xf32>
    %257 = vector.broadcast %26 : vector<1x32xf32> to vector<8x32xf32>
    %258 = arith.mulf %256, %257 : vector<8x32xf32>
    %259 = vector.broadcast %27 : vector<1x32xf32> to vector<8x32xf32>
    %260 = arith.addf %258, %259 : vector<8x32xf32>
    %c0_76 = arith.constant 0 : index
    %c0_77 = arith.constant 0 : index
    %261 = vector.load %arg17[%c0_76, %c0_77] : memref<8x32xf32, #tpu.memory_space<vmem>>, vector<8x32xf32>
    tpu.vector_store %arg17[%c0_76, %c0_77], %260 {strides = array<i32>} : memref<8x32xf32, #tpu.memory_space<vmem>>, vector<8x32xf32>,
    %c0_78 = arith.constant 0 : index
    %c0_79 = arith.constant 0 : index
    %c0_80 = arith.constant 0 : index
    %c0_81 = arith.constant 0 : index
    %262 = vector.load %arg15[%c0_78, %c0_79, %c0_80, %c0_81] : memref<1x1x8x8xf32, #tpu.memory_space<vmem>>, vector<1x1x8x8xf32>
    %263 = vector.shape_cast %262 : vector<1x1x8x8xf32> to vector<8x8xf32>
    %264 = vector.shape_cast %100 : vector<8x8xf32> to vector<1x1x8x8xf32>
    tpu.vector_store %arg15[%c0_78, %c0_79, %c0_80, %c0_81], %264 {strides = array<i32>} : memref<1x1x8x8xf32, #tpu.memory_space<vmem>>, vector<1x1x8x8xf32>,
    %c0_82 = arith.constant 0 : index
    %c0_83 = arith.constant 0 : index
    %c0_84 = arith.constant 0 : index
    %c0_85 = arith.constant 0 : index
    %265 = vector.load %arg16[%c0_82, %c0_83, %c0_84, %c0_85] : memref<1x1x8x10xf32, #tpu.memory_space<vmem>>, vector<1x1x8x10xf32>
    %266 = vector.shape_cast %265 : vector<1x1x8x10xf32> to vector<8x10xf32>
    %267 = vector.shape_cast %200 : vector<8x10xf32> to vector<1x1x8x10xf32>
    tpu.vector_store %arg16[%c0_82, %c0_83, %c0_84, %c0_85], %267 {strides = array<i32>} : memref<1x1x8x10xf32, #tpu.memory_space<vmem>>, vector<1x1x8x10xf32>,
    %c1_i32 = arith.constant 1 : i32
    %268 = arith.cmpi eq, %arg1, %c1_i32 : i32
    %269 = arith.extui %268 : i1 to i32
    %c0_i32_86 = arith.constant 0 : i32
    %270 = arith.cmpi ne, %269, %c0_i32_86 : i32
    scf.if %270 {
      %271 = arith.truncf %260 : vector<8x32xf32> to vector<8x32xbf16>
      %c0_87 = arith.constant 0 : index
      %c0_88 = arith.constant 0 : index
      %272 = vector.load %arg12[%c0_87, %c0_88] : memref<32x128xbf16, #tpu.memory_space<vmem>>, vector<32x128xbf16>
      %cst_89 = arith.constant dense<0.000000e+00> : vector<8x128xf32>
      %273 = tpu.matmul %271, %272, %cst_89 {dimension_numbers = #tpu.dot_dimension_numbers<[1], [0], [0], [1], [0, 0, 1, 1], [], []>} : vector<8x32xbf16>, vector<32x128xbf16>, vector<8x128xf32> -> vector<8x128xf32>
      %c0_90 = arith.constant 0 : index
      %c0_91 = arith.constant 0 : index
      %274 = vector.load %arg13[%c0_90, %c0_91] : memref<1x128xf32, #tpu.memory_space<vmem>>, vector<1x128xf32>
      %275 = vector.broadcast %274 : vector<1x128xf32> to vector<8x128xf32>
      %276 = arith.addf %273, %275 : vector<8x128xf32>
      %c0_92 = arith.constant 0 : index
      %c0_93 = arith.constant 0 : index
      %c0_94 = arith.constant 0 : index
      %277 = vector.load %arg14[%c0_92, %c0_93, %c0_94] : memref<1x8x128xf32, #tpu.memory_space<vmem>>, vector<1x8x128xf32>
      %278 = vector.shape_cast %277 : vector<1x8x128xf32> to vector<8x128xf32>
      %279 = vector.shape_cast %276 : vector<8x128xf32> to vector<1x8x128xf32>
      tpu.vector_store %arg14[%c0_92, %c0_93, %c0_94], %279 {strides = array<i32>} : memref<1x8x128xf32, #tpu.memory_space<vmem>>, vector<1x8x128xf32>,
    } else {
    }
    return
  }
  func.func @transform_0(%arg0: i32, %arg1: i32) -> (i32, i32, i32) {
    %c0_i32 = arith.constant 0 : i32
    %c0_i32_0 = arith.constant 0 : i32
    %c0_i32_1 = arith.constant 0 : i32
    return %arg0, %c0_i32, %c0_i32_0 : i32, i32, i32
  }
  func.func @transform_1(%arg0: i32, %arg1: i32) -> (i32, i32, i32) {
    %c0_i32 = arith.constant 0 : i32
    %c0_i32_0 = arith.constant 0 : i32
    %c0_i32_1 = arith.constant 0 : i32
    return %arg0, %c0_i32, %c0_i32_0 : i32, i32, i32
  }
  func.func @transform_2(%arg0: i32, %arg1: i32) -> (i32, i32) {
    %c0_i32 = arith.constant 0 : i32
    %c0_i32_0 = arith.constant 0 : i32
    %c0_i32_1 = arith.constant 0 : i32
    return %c0_i32, %c0_i32_0 : i32, i32
  }
  func.func @transform_3(%arg0: i32, %arg1: i32) -> (i32, i32, i32, i32) {
    %c0_i32 = arith.constant 0 : i32
    %c0_i32_0 = arith.constant 0 : i32
    %c0_i32_1 = arith.constant 0 : i32
    %c0_i32_2 = arith.constant 0 : i32
    return %arg1, %c0_i32, %c0_i32_0, %c0_i32_1 : i32, i32, i32, i32
  }
  func.func @transform_4(%arg0: i32, %arg1: i32) -> (i32, i32, i32, i32) {
    %c0_i32 = arith.constant 0 : i32
    %c0_i32_0 = arith.constant 0 : i32
    %c0_i32_1 = arith.constant 0 : i32
    %c0_i32_2 = arith.constant 0 : i32
    return %arg1, %c0_i32, %c0_i32_0, %c0_i32_1 : i32, i32, i32, i32
  }
  func.func @transform_5(%arg0: i32, %arg1: i32) -> (i32, i32, i32) {
    %c0_i32 = arith.constant 0 : i32
    %c0_i32_0 = arith.constant 0 : i32
    %c0_i32_1 = arith.constant 0 : i32
    return %arg1, %c0_i32, %c0_i32_0 : i32, i32, i32
  }
  func.func @transform_6(%arg0: i32, %arg1: i32) -> (i32, i32, i32) {
    %c0_i32 = arith.constant 0 : i32
    %c0_i32_0 = arith.constant 0 : i32
    %c0_i32_1 = arith.constant 0 : i32
    return %arg1, %c0_i32, %c0_i32_0 : i32, i32, i32
  }
  func.func @transform_7(%arg0: i32, %arg1: i32) -> (i32, i32, i32) {
    %c0_i32 = arith.constant 0 : i32
    %c0_i32_0 = arith.constant 0 : i32
    %c0_i32_1 = arith.constant 0 : i32
    return %arg1, %c0_i32, %c0_i32_0 : i32, i32, i32
  }
  func.func @transform_8(%arg0: i32, %arg1: i32) -> (i32, i32, i32) {
    %c0_i32 = arith.constant 0 : i32
    %c0_i32_0 = arith.constant 0 : i32
    %c0_i32_1 = arith.constant 0 : i32
    return %arg1, %c0_i32, %c0_i32_0 : i32, i32, i32
  }
  func.func @transform_9(%arg0: i32, %arg1: i32) -> (i32, i32, i32) {
    %c0_i32 = arith.constant 0 : i32
    %c0_i32_0 = arith.constant 0 : i32
    %c0_i32_1 = arith.constant 0 : i32
    return %arg1, %c0_i32, %c0_i32_0 : i32, i32, i32
  }
  func.func @transform_10(%arg0: i32, %arg1: i32) -> (i32, i32) {
    %c0_i32 = arith.constant 0 : i32
    %c0_i32_0 = arith.constant 0 : i32
    %c0_i32_1 = arith.constant 0 : i32
    return %c0_i32, %c0_i32_0 : i32, i32
  }
  func.func @transform_11(%arg0: i32, %arg1: i32) -> (i32, i32) {
    %c0_i32 = arith.constant 0 : i32
    %c0_i32_0 = arith.constant 0 : i32
    %c0_i32_1 = arith.constant 0 : i32
    return %c0_i32, %c0_i32_0 : i32, i32
  }
  func.func @transform_12(%arg0: i32, %arg1: i32) -> (i32, i32, i32) {
    %c0_i32 = arith.constant 0 : i32
    %c0_i32_0 = arith.constant 0 : i32
    %c0_i32_1 = arith.constant 0 : i32
    return %arg0, %c0_i32, %c0_i32_0 : i32, i32, i32
  }
  func.func @transform_13(%arg0: i32, %arg1: i32) -> (i32, i32, i32, i32) {
    %c0_i32 = arith.constant 0 : i32
    %c0_i32_0 = arith.constant 0 : i32
    %c0_i32_1 = arith.constant 0 : i32
    return %arg1, %arg0, %c0_i32, %c0_i32_0 : i32, i32, i32, i32
  }
  func.func @transform_14(%arg0: i32, %arg1: i32) -> (i32, i32, i32, i32) {
    %c0_i32 = arith.constant 0 : i32
    %c0_i32_0 = arith.constant 0 : i32
    %c0_i32_1 = arith.constant 0 : i32
    return %arg1, %arg0, %c0_i32, %c0_i32_0 : i32, i32, i32, i32
  }
}

</mosaic_0001>

<llo_original>
// kernel: transformer_decoder_forward.1
$region0: #{transformer_decoder_forward.1}
  #allocation0 [shape = 'u32[]', space=smem, size = 0x4, offset = 0x4, fixed_abs, tag = 'smem constant byte address 0x4 - core index']
  #allocation1 [shape = 'u32[144,128]{1,0:T(1,128)}', space=vmem, size = 0x12000, scoped, tag = 'internal scratch']
  #allocation2 [shape = 'f32[8,32]{1,0:T(8,128)}', space=vmem, size = 0x1000, scoped, tag = 'scratch operand']
  %s0 = inlined_call_operand.vmem [shape: f32[2,8,32], index: 0, kind: input, shape index: {}]
  %s1 = inlined_call_operand.vmem [shape: f32[2,10,32], index: 1, kind: input, shape index: {}]
  %s2 = inlined_call_operand.vmem [shape: f32[8,8], index: 2, kind: input, shape index: {}]
  %s3 = inlined_call_operand.vmem [shape: bf16[2,2,32,96], index: 3, kind: input, shape index: {}]
  %s4 = inlined_call_operand.vmem [shape: bf16[2,2,32,32], index: 4, kind: input, shape index: {}]
  %s5 = inlined_call_operand.vmem [shape: f32[2,2,96], index: 5, kind: input, shape index: {}]
  %s6 = inlined_call_operand.vmem [shape: bf16[2,32,64], index: 6, kind: input, shape index: {}]
  %s7 = inlined_call_operand.vmem [shape: f32[2,1,64], index: 7, kind: input, shape index: {}]
  %s8 = inlined_call_operand.vmem [shape: bf16[2,64,32], index: 8, kind: input, shape index: {}]
  %s9 = inlined_call_operand.vmem [shape: f32[2,9,32], index: 9, kind: input, shape index: {}]
  %s10 = inlined_call_operand.vmem [shape: bf16[32,128], index: 10, kind: input, shape index: {}]
  %s11 = inlined_call_operand.vmem [shape: f32[1,128], index: 11, kind: input, shape index: {}]
  %s12 = inlined_call_operand.hbm [shape: f32[2,8,128], index: 12, kind: output, shape index: {0}]
  %s13 = inlined_call_operand.vmem [shape: f32[2,2,8,8], index: 13, kind: output, shape index: {1}]
  %s14 = inlined_call_operand.vmem [shape: f32[2,2,8,10], index: 14, kind: output, shape index: {2}]
  %15 = xla_tuple %s12, %s13, %s14
  %s16 = sld [smem:[#allocation0]]
  $region105: #{transformer_decoder_forward.1} parent=0
    _
  %s18 = ssub.s32 1, %s16
  %s19 = scalar_select 0, %s18, %s16
  $region1: #{transformer_decoder_forward.1} parent=0
    #allocation3 [shape = 'u8[8192]{0}', space=vmem, size = 0x2000, scoped, tag = 'output window, operand 0']
    #allocation4 [shape = 's32[2]{0}', space=sflag, size = 0x8, scoped, tag = 'scoped memory for transformer_decoder_forward.1']
    %20 = vsyncpa [#allocation4], 0
    %s21 = scalar_lea.sflag [#allocation4], 1
    %22 = vsyncpa %s21, 0
    loop: start=0, step=1, limit=6
    $region2: #{transformer_decoder_forward.1} parent=1 // loop_pre_header
      _
    $region3: #{transformer_decoder_forward.1} parent=1 // loop_header
      %s24 = sphi 0, %s28
      %p25 = scmp.ge.s32.totalorder %s24, 6
      %s31 = sphi 0, %s43
      %s32 = sphi 0, %s39
      %s33 = sphi 0, %s31
      %s34 = sphi 0, %s32
      %s35 = sphi 0, %s33
      %s36 = sphi 0, %s34
      %s46 = sphi 0, %s48
      %s49 = sphi 0, %s46
      %s50 = sphi 0, %s49
      %s66 = sphi 0, %s50
      %s72 = sphi 0, %s74
      %s75 = sphi 0, %s72
      %s76 = sphi 0, %s75
      %s92 = sphi 0, %s76
      %s96 = sphi 0, %s96
      %s98 = sphi 0, %s96
      %s99 = sphi 0, %s98
      %s113 = sphi 0, %s99
      %s119 = sphi 0, %s121
      %s122 = sphi 0, %s119
      %s123 = sphi 0, %s122
      %s139 = sphi 0, %s123
      %s145 = sphi 0, %s147
      %s148 = sphi 0, %s145
      %s149 = sphi 0, %s148
      %s165 = sphi 0, %s149
      %s171 = sphi 0, %s173
      %s174 = sphi 0, %s171
      %s175 = sphi 0, %s174
      %s191 = sphi 0, %s175
      %s197 = sphi 0, %s199
      %s200 = sphi 0, %s197
      %s201 = sphi 0, %s200
      %s217 = sphi 0, %s201
      %s223 = sphi 0, %s225
      %s226 = sphi 0, %s223
      %s227 = sphi 0, %s226
      %s243 = sphi 0, %s227
      %s249 = sphi 0, %s251
      %s252 = sphi 0, %s249
      %s253 = sphi 0, %s252
      %s269 = sphi 0, %s253
      %s275 = sphi 0, %s277
      %s278 = sphi 0, %s275
      %s279 = sphi 0, %s278
      %s295 = sphi 0, %s279
      %s299 = sphi 0, %s299
      %s301 = sphi 0, %s299
      %s302 = sphi 0, %s301
      %s316 = sphi 0, %s302
      %s320 = sphi 0, %s320
      %s322 = sphi 0, %s320
      %s323 = sphi 0, %s322
      %s337 = sphi 0, %s323
      %s343 = sphi 0, %s345
      %s346 = sphi 0, %s343
      %s347 = sphi 0, %s346
      %s363 = sphi 0, %s347
      %s371 = sphi 0, %s373
      %s374 = sphi 0, %s371
      %s375 = sphi 0, %s374
      %s391 = sphi 0, %s375
      %s399 = sphi 0, %s401
      %s402 = sphi 0, %s399
      %s403 = sphi 0, %s402
      %s419 = sphi 0, %s403
    $region4: #{transformer_decoder_forward.1} parent=1 // loop_header_branch
      %27 = sbr.rel (%p25) target = $region8
    $region5: #{transformer_decoder_forward.1} parent=1 // loop_body
      %s29 = ssub.s32 %s24, 1
      %s30 = ssub.s32 %s24, 2
      %s37 = sadd.s32 1, %s32
      %p38 = scmp.ge.s32.totalorder %s37, 2
      %s39 = scalar_select %p38, 0, %s37
      %s40 = sadd.s32 1, %s31
      %s41 = scalar_select %p38, %s40, %s31
      %p42 = scmp.ge.s32.totalorder %s41, 2
      %s43 = scalar_select %p42, 0, %s41
      %s44 = ssub.s32 %s31, %s43
      %p45 = scmp.eq.s32.totalorder %s44, 0
      %s47 = sadd.s32 %s46, 1
      %s48 = scalar_select %p45, %s46, %s47
      %p51 = pneg %p45
      %p52 = scmp.eq.s32.totalorder %s24, 3
      %p53 = por %p51, %p52
      %p54 = scmp.ne.s32.totalorder %s46, %s49
      %p55 = scmp.eq.s32.totalorder %s24, 0
      %p56 = por %p54, %p55
      %p57 = scmp.ne.s32.totalorder %s46, %s49
      %p58 = scmp.eq.s32.totalorder %s29, 3
      %p59 = por %p57, %p58
      %p60 = scmp.ne.s32.totalorder %s49, %s50
      %p61 = scmp.eq.s32.totalorder %s29, 0
      %p62 = por %p60, %p61
      %p63 = scmp.ne.s32.totalorder %s49, %s50
      %p64 = scmp.eq.s32.totalorder %s30, 3
      %p65 = por %p63, %p64
      %p67 = scmp.ne.s32.totalorder %s50, %s66
      %p68 = scmp.eq.s32.totalorder %s30, 0
      %p69 = por %p67, %p68
      %s70 = ssub.s32 %s31, %s43
      %p71 = scmp.eq.s32.totalorder %s70, 0
      %s73 = sadd.s32 %s72, 1
      %s74 = scalar_select %p71, %s72, %s73
      %p77 = pneg %p71
      %p78 = scmp.eq.s32.totalorder %s24, 3
      %p79 = por %p77, %p78
      %p80 = scmp.ne.s32.totalorder %s72, %s75
      %p81 = scmp.eq.s32.totalorder %s24, 0
      %p82 = por %p80, %p81
      %p83 = scmp.ne.s32.totalorder %s72, %s75
      %p84 = scmp.eq.s32.totalorder %s29, 3
      %p85 = por %p83, %p84
      %p86 = scmp.ne.s32.totalorder %s75, %s76
      %p87 = scmp.eq.s32.totalorder %s29, 0
      %p88 = por %p86, %p87
      %p89 = scmp.ne.s32.totalorder %s75, %s76
      %p90 = scmp.eq.s32.totalorder %s30, 3
      %p91 = por %p89, %p90
      %p93 = scmp.ne.s32.totalorder %s76, %s92
      %p94 = scmp.eq.s32.totalorder %s30, 0
      %p95 = por %p93, %p94
      %s97 = sadd.s32 %s96, 1
      %p100 = scmp.eq.s32.totalorder %s24, 3
      %p101 = scmp.ne.s32.totalorder %s96, %s98
      %p102 = scmp.eq.s32.totalorder %s24, 0
      %p103 = por %p101, %p102
      %p104 = scmp.ne.s32.totalorder %s96, %s98
      %p105 = scmp.eq.s32.totalorder %s29, 3
      %p106 = por %p104, %p105
      %p107 = scmp.ne.s32.totalorder %s98, %s99
      %p108 = scmp.eq.s32.totalorder %s29, 0
      %p109 = por %p107, %p108
      %p110 = scmp.ne.s32.totalorder %s98, %s99
      %p111 = scmp.eq.s32.totalorder %s30, 3
      %p112 = por %p110, %p111
      %p114 = scmp.ne.s32.totalorder %s99, %s113
      %p115 = scmp.eq.s32.totalorder %s30, 0
      %p116 = por %p114, %p115
      %s117 = ssub.s32 %s32, %s39
      %p118 = scmp.eq.s32.totalorder %s117, 0
      %s120 = sadd.s32 %s119, 1
      %s121 = scalar_select %p118, %s119, %s120
      %p124 = pneg %p118
      %p125 = scmp.eq.s32.totalorder %s24, 3
      %p126 = por %p124, %p125
      %p127 = scmp.ne.s32.totalorder %s119, %s122
      %p128 = scmp.eq.s32.totalorder %s24, 0
      %p129 = por %p127, %p128
      %p130 = scmp.ne.s32.totalorder %s119, %s122
      %p131 = scmp.eq.s32.totalorder %s29, 3
      %p132 = por %p130, %p131
      %p133 = scmp.ne.s32.totalorder %s122, %s123
      %p134 = scmp.eq.s32.totalorder %s29, 0
      %p135 = por %p133, %p134
      %p136 = scmp.ne.s32.totalorder %s122, %s123
      %p137 = scmp.eq.s32.totalorder %s30, 3
      %p138 = por %p136, %p137
      %p140 = scmp.ne.s32.totalorder %s123, %s139
      %p141 = scmp.eq.s32.totalorder %s30, 0
      %p142 = por %p140, %p141
      %s143 = ssub.s32 %s32, %s39
      %p144 = scmp.eq.s32.totalorder %s143, 0
      %s146 = sadd.s32 %s145, 1
      %s147 = scalar_select %p144, %s145, %s146
      %p150 = pneg %p144
      %p151 = scmp.eq.s32.totalorder %s24, 3
      %p152 = por %p150, %p151
      %p153 = scmp.ne.s32.totalorder %s145, %s148
      %p154 = scmp.eq.s32.totalorder %s24, 0
      %p155 = por %p153, %p154
      %p156 = scmp.ne.s32.totalorder %s145, %s148
      %p157 = scmp.eq.s32.totalorder %s29, 3
      %p158 = por %p156, %p157
      %p159 = scmp.ne.s32.totalorder %s148, %s149
      %p160 = scmp.eq.s32.totalorder %s29, 0
      %p161 = por %p159, %p160
      %p162 = scmp.ne.s32.totalorder %s148, %s149
      %p163 = scmp.eq.s32.totalorder %s30, 3
      %p164 = por %p162, %p163
      %p166 = scmp.ne.s32.totalorder %s149, %s165
      %p167 = scmp.eq.s32.totalorder %s30, 0
      %p168 = por %p166, %p167
      %s169 = ssub.s32 %s32, %s39
      %p170 = scmp.eq.s32.totalorder %s169, 0
      %s172 = sadd.s32 %s171, 1
      %s173 = scalar_select %p170, %s171, %s172
      %p176 = pneg %p170
      %p177 = scmp.eq.s32.totalorder %s24, 3
      %p178 = por %p176, %p177
      %p179 = scmp.ne.s32.totalorder %s171, %s174
      %p180 = scmp.eq.s32.totalorder %s24, 0
      %p181 = por %p179, %p180
      %p182 = scmp.ne.s32.totalorder %s171, %s174
      %p183 = scmp.eq.s32.totalorder %s29, 3
      %p184 = por %p182, %p183
      %p185 = scmp.ne.s32.totalorder %s174, %s175
      %p186 = scmp.eq.s32.totalorder %s29, 0
      %p187 = por %p185, %p186
      %p188 = scmp.ne.s32.totalorder %s174, %s175
      %p189 = scmp.eq.s32.totalorder %s30, 3
      %p190 = por %p188, %p189
      %p192 = scmp.ne.s32.totalorder %s175, %s191
      %p193 = scmp.eq.s32.totalorder %s30, 0
      %p194 = por %p192, %p193
      %s195 = ssub.s32 %s32, %s39
      %p196 = scmp.eq.s32.totalorder %s195, 0
      %s198 = sadd.s32 %s197, 1
      %s199 = scalar_select %p196, %s197, %s198
      %p202 = pneg %p196
      %p203 = scmp.eq.s32.totalorder %s24, 3
      %p204 = por %p202, %p203
      %p205 = scmp.ne.s32.totalorder %s197, %s200
      %p206 = scmp.eq.s32.totalorder %s24, 0
      %p207 = por %p205, %p206
      %p208 = scmp.ne.s32.totalorder %s197, %s200
      %p209 = scmp.eq.s32.totalorder %s29, 3
      %p210 = por %p208, %p209
      %p211 = scmp.ne.s32.totalorder %s200, %s201
      %p212 = scmp.eq.s32.totalorder %s29, 0
      %p213 = por %p211, %p212
      %p214 = scmp.ne.s32.totalorder %s200, %s201
      %p215 = scmp.eq.s32.totalorder %s30, 3
      %p216 = por %p214, %p215
      %p218 = scmp.ne.s32.totalorder %s201, %s217
      %p219 = scmp.eq.s32.totalorder %s30, 0
      %p220 = por %p218, %p219
      %s221 = ssub.s32 %s32, %s39
      %p222 = scmp.eq.s32.totalorder %s221, 0
      %s224 = sadd.s32 %s223, 1
      %s225 = scalar_select %p222, %s223, %s224
      %p228 = pneg %p222
      %p229 = scmp.eq.s32.totalorder %s24, 3
      %p230 = por %p228, %p229
      %p231 = scmp.ne.s32.totalorder %s223, %s226
      %p232 = scmp.eq.s32.totalorder %s24, 0
      %p233 = por %p231, %p232
      %p234 = scmp.ne.s32.totalorder %s223, %s226
      %p235 = scmp.eq.s32.totalorder %s29, 3
      %p236 = por %p234, %p235
      %p237 = scmp.ne.s32.totalorder %s226, %s227
      %p238 = scmp.eq.s32.totalorder %s29, 0
      %p239 = por %p237, %p238
      %p240 = scmp.ne.s32.totalorder %s226, %s227
      %p241 = scmp.eq.s32.totalorder %s30, 3
      %p242 = por %p240, %p241
      %p244 = scmp.ne.s32.totalorder %s227, %s243
      %p245 = scmp.eq.s32.totalorder %s30, 0
      %p246 = por %p244, %p245
      %s247 = ssub.s32 %s32, %s39
      %p248 = scmp.eq.s32.totalorder %s247, 0
      %s250 = sadd.s32 %s249, 1
      %s251 = scalar_select %p248, %s249, %s250
      %p254 = pneg %p248
      %p255 = scmp.eq.s32.totalorder %s24, 3
      %p256 = por %p254, %p255
      %p257 = scmp.ne.s32.totalorder %s249, %s252
      %p258 = scmp.eq.s32.totalorder %s24, 0
      %p259 = por %p257, %p258
      %p260 = scmp.ne.s32.totalorder %s249, %s252
      %p261 = scmp.eq.s32.totalorder %s29, 3
      %p262 = por %p260, %p261
      %p263 = scmp.ne.s32.totalorder %s252, %s253
      %p264 = scmp.eq.s32.totalorder %s29, 0
      %p265 = por %p263, %p264
      %p266 = scmp.ne.s32.totalorder %s252, %s253
      %p267 = scmp.eq.s32.totalorder %s30, 3
      %p268 = por %p266, %p267
      %p270 = scmp.ne.s32.totalorder %s253, %s269
      %p271 = scmp.eq.s32.totalorder %s30, 0
      %p272 = por %p270, %p271
      %s273 = ssub.s32 %s32, %s39
      %p274 = scmp.eq.s32.totalorder %s273, 0
      %s276 = sadd.s32 %s275, 1
      %s277 = scalar_select %p274, %s275, %s276
      %p280 = pneg %p274
      %p281 = scmp.eq.s32.totalorder %s24, 3
      %p282 = por %p280, %p281
      %p283 = scmp.ne.s32.totalorder %s275, %s278
      %p284 = scmp.eq.s32.totalorder %s24, 0
      %p285 = por %p283, %p284
      %p286 = scmp.ne.s32.totalorder %s275, %s278
      %p287 = scmp.eq.s32.totalorder %s29, 3
      %p288 = por %p286, %p287
      %p289 = scmp.ne.s32.totalorder %s278, %s279
      %p290 = scmp.eq.s32.totalorder %s29, 0
      %p291 = por %p289, %p290
      %p292 = scmp.ne.s32.totalorder %s278, %s279
      %p293 = scmp.eq.s32.totalorder %s30, 3
      %p294 = por %p292, %p293
      %p296 = scmp.ne.s32.totalorder %s279, %s295
      %p297 = scmp.eq.s32.totalorder %s30, 0
      %p298 = por %p296, %p297
      %s300 = sadd.s32 %s299, 1
      %p303 = scmp.eq.s32.totalorder %s24, 3
      %p304 = scmp.ne.s32.totalorder %s299, %s301
      %p305 = scmp.eq.s32.totalorder %s24, 0
      %p306 = por %p304, %p305
      %p307 = scmp.ne.s32.totalorder %s299, %s301
      %p308 = scmp.eq.s32.totalorder %s29, 3
      %p309 = por %p307, %p308
      %p310 = scmp.ne.s32.totalorder %s301, %s302
      %p311 = scmp.eq.s32.totalorder %s29, 0
      %p312 = por %p310, %p311
      %p313 = scmp.ne.s32.totalorder %s301, %s302
      %p314 = scmp.eq.s32.totalorder %s30, 3
      %p315 = por %p313, %p314
      %p317 = scmp.ne.s32.totalorder %s302, %s316
      %p318 = scmp.eq.s32.totalorder %s30, 0
      %p319 = por %p317, %p318
      %s321 = sadd.s32 %s320, 1
      %p324 = scmp.eq.s32.totalorder %s24, 3
      %p325 = scmp.ne.s32.totalorder %s320, %s322
      %p326 = scmp.eq.s32.totalorder %s24, 0
      %p327 = por %p325, %p326
      %p328 = scmp.ne.s32.totalorder %s320, %s322
      %p329 = scmp.eq.s32.totalorder %s29, 3
      %p330 = por %p328, %p329
      %p331 = scmp.ne.s32.totalorder %s322, %s323
      %p332 = scmp.eq.s32.totalorder %s29, 0
      %p333 = por %p331, %p332
      %p334 = scmp.ne.s32.totalorder %s322, %s323
      %p335 = scmp.eq.s32.totalorder %s30, 3
      %p336 = por %p334, %p335
      %p338 = scmp.ne.s32.totalorder %s323, %s337
      %p339 = scmp.eq.s32.totalorder %s30, 0
      %p340 = por %p338, %p339
      %s341 = ssub.s32 %s31, %s43
      %p342 = scmp.eq.s32.totalorder %s341, 0
      %s344 = sadd.s32 %s343, 1
      %s345 = scalar_select %p342, %s343, %s344
      %p348 = pneg %p342
      %p349 = scmp.eq.s32.totalorder %s24, 3
      %p350 = por %p348, %p349
      %p351 = scmp.ne.s32.totalorder %s343, %s346
      %p352 = scmp.eq.s32.totalorder %s24, 0
      %p353 = por %p351, %p352
      %p354 = scmp.ne.s32.totalorder %s343, %s346
      %p355 = scmp.eq.s32.totalorder %s29, 3
      %p356 = por %p354, %p355
      %p357 = scmp.ne.s32.totalorder %s346, %s347
      %p358 = scmp.eq.s32.totalorder %s29, 0
      %p359 = por %p357, %p358
      %p360 = scmp.ne.s32.totalorder %s346, %s347
      %p361 = scmp.eq.s32.totalorder %s30, 3
      %p362 = por %p360, %p361
      %p364 = scmp.ne.s32.totalorder %s347, %s363
      %p365 = scmp.eq.s32.totalorder %s30, 0
      %p366 = por %p364, %p365
      %s367 = ssub.s32 %s32, %s39
      %s368 = ssub.s32 %s31, %s43
      %s369 = sor.u32 %s367, %s368
      %p370 = scmp.eq.s32.totalorder %s369, 0
      %s372 = sadd.s32 %s371, 1
      %s373 = scalar_select %p370, %s371, %s372
      %p376 = pneg %p370
      %p377 = scmp.eq.s32.totalorder %s24, 3
      %p378 = por %p376, %p377
      %p379 = scmp.ne.s32.totalorder %s371, %s374
      %p380 = scmp.eq.s32.totalorder %s24, 0
      %p381 = por %p379, %p380
      %p382 = scmp.ne.s32.totalorder %s371, %s374
      %p383 = scmp.eq.s32.totalorder %s29, 3
      %p384 = por %p382, %p383
      %p385 = scmp.ne.s32.totalorder %s374, %s375
      %p386 = scmp.eq.s32.totalorder %s29, 0
      %p387 = por %p385, %p386
      %p388 = scmp.ne.s32.totalorder %s374, %s375
      %p389 = scmp.eq.s32.totalorder %s30, 3
      %p390 = por %p388, %p389
      %p392 = scmp.ne.s32.totalorder %s375, %s391
      %p393 = scmp.eq.s32.totalorder %s30, 0
      %p394 = por %p392, %p393
      %s395 = ssub.s32 %s32, %s39
      %s396 = ssub.s32 %s31, %s43
      %s397 = sor.u32 %s395, %s396
      %p398 = scmp.eq.s32.totalorder %s397, 0
      %s400 = sadd.s32 %s399, 1
      %s401 = scalar_select %p398, %s399, %s400
      %p404 = pneg %p398
      %p405 = scmp.eq.s32.totalorder %s24, 3
      %p406 = por %p404, %p405
      %p407 = scmp.ne.s32.totalorder %s399, %s402
      %p408 = scmp.eq.s32.totalorder %s24, 0
      %p409 = por %p407, %p408
      %p410 = scmp.ne.s32.totalorder %s399, %s402
      %p411 = scmp.eq.s32.totalorder %s29, 3
      %p412 = por %p410, %p411
      %p413 = scmp.ne.s32.totalorder %s402, %s403
      %p414 = scmp.eq.s32.totalorder %s29, 0
      %p415 = por %p413, %p414
      %p416 = scmp.ne.s32.totalorder %s402, %s403
      %p417 = scmp.eq.s32.totalorder %s30, 3
      %p418 = por %p416, %p417
      %p420 = scmp.ne.s32.totalorder %s403, %s419
      %p421 = scmp.eq.s32.totalorder %s30, 0
      %p422 = por %p420, %p421
      %p423 = scmp.le.s32.totalorder 1, %s24
      %p424 = scmp.lt.s32.totalorder %s24, 5
      %p425 = pnand %p423, %p424
      %p426 = pneg %p425
      // Predicated region
      $region9: #{transformer_decoder_forward.1} parent=5 // pred_check
        _
      $region10: #{transformer_decoder_forward.1} parent=5 // pred_check_branch
        %428 = sbr.rel (%p425) target = $region12
      $region11: #{transformer_decoder_forward.1} parent=5 // pred_region
        %s429 = ssub.s32 %s24, 1
        // Predicated region
        $region13: #{transformer_decoder_forward.1} parent=11 // pred_check
          %p430 = pneg %p109
        $region14: #{transformer_decoder_forward.1} parent=11 // pred_check_branch
          %432 = sbr.rel (%p430) target = $region16
        $region15: #{transformer_decoder_forward.1} parent=11 // pred_region
          _
        $region16: #{transformer_decoder_forward.1} parent=11 // pred_fallthru
          _
        // Predicated region
        $region17: #{transformer_decoder_forward.1} parent=11 // pred_check
          %p433 = pneg %p312
        $region18: #{transformer_decoder_forward.1} parent=11 // pred_check_branch
          %435 = sbr.rel (%p433) target = $region20
        $region19: #{transformer_decoder_forward.1} parent=11 // pred_region
          _
        $region20: #{transformer_decoder_forward.1} parent=11 // pred_fallthru
          _
        // Predicated region
        $region21: #{transformer_decoder_forward.1} parent=11 // pred_check
          %p436 = pneg %p333
        $region22: #{transformer_decoder_forward.1} parent=11 // pred_check_branch
          %438 = sbr.rel (%p436) target = $region24
        $region23: #{transformer_decoder_forward.1} parent=11 // pred_region
          _
        $region24: #{transformer_decoder_forward.1} parent=11 // pred_fallthru
          _
      $region12: #{transformer_decoder_forward.1} parent=5 // pred_fallthru
        _
      %p439 = scmp.lt.s32.totalorder %s24, 4
      // Predicated region
      $region25: #{transformer_decoder_forward.1} parent=5 // pred_check
        %p440 = pneg %p439
      $region26: #{transformer_decoder_forward.1} parent=5 // pred_check_branch
        %442 = sbr.rel (%p440) target = $region28
      $region27: #{transformer_decoder_forward.1} parent=5 // pred_region
        // Predicated region
        $region29: #{transformer_decoder_forward.1} parent=27 // pred_check
          %p443 = pneg %p56
        $region30: #{transformer_decoder_forward.1} parent=27 // pred_check_branch
          %445 = sbr.rel (%p443) target = $region32
        $region31: #{transformer_decoder_forward.1} parent=27 // pred_region
          %p446 = scmp.lt.s32.totalorder %s31, 1
          %s447 = scalar_select %p446, %s31, 1
          %s448 = smul.addr %s447, 8
          %s449 = scalar_lea.vmem %s0, %s448
        $region32: #{transformer_decoder_forward.1} parent=27 // pred_fallthru
          _
        // Predicated region
        $region33: #{transformer_decoder_forward.1} parent=27 // pred_check
          %p450 = pneg %p82
        $region34: #{transformer_decoder_forward.1} parent=27 // pred_check_branch
          %452 = sbr.rel (%p450) target = $region36
        $region35: #{transformer_decoder_forward.1} parent=27 // pred_region
          %p453 = scmp.lt.s32.totalorder %s31, 1
          %s454 = scalar_select %p453, %s31, 1
          %s455 = smul.addr %s454, 2
          %s456 = smul.addr %s455, 8
          %s457 = scalar_lea.vmem %s1, %s456
        $region36: #{transformer_decoder_forward.1} parent=27 // pred_fallthru
          _
        // Predicated region
        $region37: #{transformer_decoder_forward.1} parent=27 // pred_check
          %p458 = pneg %p129
        $region38: #{transformer_decoder_forward.1} parent=27 // pred_check_branch
          %460 = sbr.rel (%p458) target = $region40
        $region39: #{transformer_decoder_forward.1} parent=27 // pred_region
          %p461 = scmp.lt.s32.totalorder %s32, 1
          %s462 = scalar_select %p461, %s32, 1
          %s463 = smul.addr %s462, 8
          %s464 = smul.addr %s463, 4
          %s465 = scalar_lea.vmem %s3, %s464
        $region40: #{transformer_decoder_forward.1} parent=27 // pred_fallthru
          _
        // Predicated region
        $region41: #{transformer_decoder_forward.1} parent=27 // pred_check
          %p466 = pneg %p155
        $region42: #{transformer_decoder_forward.1} parent=27 // pred_check_branch
          %468 = sbr.rel (%p466) target = $region44
        $region43: #{transformer_decoder_forward.1} parent=27 // pred_region
          %p469 = scmp.lt.s32.totalorder %s32, 1
          %s470 = scalar_select %p469, %s32, 1
          %s471 = smul.addr %s470, 8
          %s472 = smul.addr %s471, 4
          %s473 = scalar_lea.vmem %s4, %s472
        $region44: #{transformer_decoder_forward.1} parent=27 // pred_fallthru
          _
        // Predicated region
        $region45: #{transformer_decoder_forward.1} parent=27 // pred_check
          %p474 = pneg %p181
        $region46: #{transformer_decoder_forward.1} parent=27 // pred_check_branch
          %476 = sbr.rel (%p474) target = $region48
        $region47: #{transformer_decoder_forward.1} parent=27 // pred_region
          %p477 = scmp.lt.s32.totalorder %s32, 1
          %s478 = scalar_select %p477, %s32, 1
          %s479 = smul.addr %s478, 2
          %s480 = scalar_lea.vmem %s5, %s479
        $region48: #{transformer_decoder_forward.1} parent=27 // pred_fallthru
          _
        // Predicated region
        $region49: #{transformer_decoder_forward.1} parent=27 // pred_check
          %p481 = pneg %p207
        $region50: #{transformer_decoder_forward.1} parent=27 // pred_check_branch
          %483 = sbr.rel (%p481) target = $region52
        $region51: #{transformer_decoder_forward.1} parent=27 // pred_region
          %p484 = scmp.lt.s32.totalorder %s32, 1
          %s485 = scalar_select %p484, %s32, 1
          %s486 = smul.addr %s485, 4
          %s487 = smul.addr %s486, 4
          %s488 = scalar_lea.vmem %s6, %s487
        $region52: #{transformer_decoder_forward.1} parent=27 // pred_fallthru
          _
        // Predicated region
        $region53: #{transformer_decoder_forward.1} parent=27 // pred_check
          %p489 = pneg %p233
        $region54: #{transformer_decoder_forward.1} parent=27 // pred_check_branch
          %491 = sbr.rel (%p489) target = $region56
        $region55: #{transformer_decoder_forward.1} parent=27 // pred_region
          %p492 = scmp.lt.s32.totalorder %s32, 1
          %s493 = scalar_select %p492, %s32, 1
          %s494 = scalar_lea.vmem %s7, %s493
        $region56: #{transformer_decoder_forward.1} parent=27 // pred_fallthru
          _
        // Predicated region
        $region57: #{transformer_decoder_forward.1} parent=27 // pred_check
          %p495 = pneg %p259
        $region58: #{transformer_decoder_forward.1} parent=27 // pred_check_branch
          %497 = sbr.rel (%p495) target = $region60
        $region59: #{transformer_decoder_forward.1} parent=27 // pred_region
          %p498 = scmp.lt.s32.totalorder %s32, 1
          %s499 = scalar_select %p498, %s32, 1
          %s500 = smul.addr %s499, 8
          %s501 = smul.addr %s500, 4
          %s502 = scalar_lea.vmem %s8, %s501
        $region60: #{transformer_decoder_forward.1} parent=27 // pred_fallthru
          _
        // Predicated region
        $region61: #{transformer_decoder_forward.1} parent=27 // pred_check
          %p503 = pneg %p285
        $region62: #{transformer_decoder_forward.1} parent=27 // pred_check_branch
          %505 = sbr.rel (%p503) target = $region64
        $region63: #{transformer_decoder_forward.1} parent=27 // pred_region
          %p506 = scmp.lt.s32.totalorder %s32, 1
          %s507 = scalar_select %p506, %s32, 1
          %s508 = smul.addr %s507, 2
          %s509 = smul.addr %s508, 8
          %s510 = scalar_lea.vmem %s9, %s509
        $region64: #{transformer_decoder_forward.1} parent=27 // pred_fallthru
          _
      $region28: #{transformer_decoder_forward.1} parent=5 // pred_fallthru
        _
      %p511 = scmp.le.s32.totalorder 1, %s24
      %p512 = scmp.lt.s32.totalorder %s24, 5
      %p513 = pnand %p511, %p512
      %p514 = pneg %p513
      // Predicated region
      $region65: #{transformer_decoder_forward.1} parent=5 // pred_check
        _
      $region66: #{transformer_decoder_forward.1} parent=5 // pred_check_branch
        %516 = sbr.rel (%p513) target = $region68
      $region67: #{transformer_decoder_forward.1} parent=5 // pred_region
        %s517 = ssub.s32 %s24, 1
        %p518 = scmp.lt.s32.totalorder %s33, 1
        %s519 = scalar_select %p518, %s33, 1
        %s520 = smul.addr %s519, 8
        %s521 = scalar_lea.vmem %s0, %s520
        %p522 = pneg %p62
        %p523 = pneg %p59
        %p524 = scmp.lt.s32.totalorder %s33, 1
        %s525 = scalar_select %p524, %s33, 1
        %s526 = smul.addr %s525, 2
        %s527 = smul.addr %s526, 8
        %s528 = scalar_lea.vmem %s1, %s527
        %p529 = pneg %p88
        %p530 = pneg %p85
        %p531 = pneg %p109
        %p532 = pneg %p106
        %p533 = scmp.lt.s32.totalorder %s34, 1
        %s534 = scalar_select %p533, %s34, 1
        %s535 = smul.addr %s534, 8
        %s536 = smul.addr %s535, 4
        %s537 = scalar_lea.vmem %s3, %s536
        %p538 = pneg %p135
        %p539 = pneg %p132
        %p540 = scmp.lt.s32.totalorder %s34, 1
        %s541 = scalar_select %p540, %s34, 1
        %s542 = smul.addr %s541, 8
        %s543 = smul.addr %s542, 4
        %s544 = scalar_lea.vmem %s4, %s543
        %p545 = pneg %p161
        %p546 = pneg %p158
        %p547 = scmp.lt.s32.totalorder %s34, 1
        %s548 = scalar_select %p547, %s34, 1
        %s549 = smul.addr %s548, 2
        %s550 = scalar_lea.vmem %s5, %s549
        %p551 = pneg %p187
        %p552 = pneg %p184
        %p553 = scmp.lt.s32.totalorder %s34, 1
        %s554 = scalar_select %p553, %s34, 1
        %s555 = smul.addr %s554, 4
        %s556 = smul.addr %s555, 4
        %s557 = scalar_lea.vmem %s6, %s556
        %p558 = pneg %p213
        %p559 = pneg %p210
        %p560 = scmp.lt.s32.totalorder %s34, 1
        %s561 = scalar_select %p560, %s34, 1
        %s562 = scalar_lea.vmem %s7, %s561
        %p563 = pneg %p239
        %p564 = pneg %p236
        %p565 = scmp.lt.s32.totalorder %s34, 1
        %s566 = scalar_select %p565, %s34, 1
        %s567 = smul.addr %s566, 8
        %s568 = smul.addr %s567, 4
        %s569 = scalar_lea.vmem %s8, %s568
        %p570 = pneg %p265
        %p571 = pneg %p262
        %p572 = scmp.lt.s32.totalorder %s34, 1
        %s573 = scalar_select %p572, %s34, 1
        %s574 = smul.addr %s573, 2
        %s575 = smul.addr %s574, 8
        %s576 = scalar_lea.vmem %s9, %s575
        %p577 = pneg %p291
        %p578 = pneg %p288
        %p579 = pneg %p312
        %p580 = pneg %p309
        %p581 = pneg %p333
        %p582 = pneg %p330
        %p583 = pneg %p359
        %p584 = pneg %p356
        %s585 = sand.u32 %s346, 1
        %s586 = scalar_lea.sflag [#allocation4], %s585
        %s587 = sand.u32 %s346, 1
        %s588 = smul.addr %s587, 8
        %s589 = scalar_lea.vmem [#allocation3], %s588
        %p590 = pneg %p387
        %p591 = pneg %p384
        %p592 = scmp.lt.s32.totalorder %s34, 1
        %s593 = scalar_select %p592, %s34, 1
        %p594 = scmp.lt.s32.totalorder %s33, 1
        %s595 = scalar_select %p594, %s33, 1
        %s596 = smul.addr %s593, 2
        %s597 = sadd.s32 %s595, %s596
        %s598 = smul.addr %s597, 8
        %s599 = scalar_lea.vmem %s13, %s598
        %p600 = pneg %p415
        %p601 = pneg %p412
        %p602 = scmp.lt.s32.totalorder %s34, 1
        %s603 = scalar_select %p602, %s34, 1
        %p604 = scmp.lt.s32.totalorder %s33, 1
        %s605 = scalar_select %p604, %s33, 1
        %s606 = smul.addr %s603, 2
        %s607 = sadd.s32 %s605, %s606
        %s608 = smul.addr %s607, 8
        %s609 = scalar_lea.vmem %s14, %s608
        %p610 = scmp.lt.s32.totalorder %s33, 1
        %s611 = scalar_select %p610, %s33, 1
        %s612 = smul.addr %s611, 8
        %s613 = scalar_lea.vmem %s0, %s612
        %p614 = scmp.lt.s32.totalorder %s33, 1
        %s615 = scalar_select %p614, %s33, 1
        %s616 = smul.addr %s615, 2
        %s617 = smul.addr %s616, 8
        %s618 = scalar_lea.vmem %s1, %s617
        %p619 = scmp.lt.s32.totalorder %s34, 1
        %s620 = scalar_select %p619, %s34, 1
        %s621 = smul.addr %s620, 8
        %s622 = smul.addr %s621, 4
        %s623 = scalar_lea.vmem %s3, %s622
        %p624 = scmp.lt.s32.totalorder %s34, 1
        %s625 = scalar_select %p624, %s34, 1
        %s626 = smul.addr %s625, 8
        %s627 = smul.addr %s626, 4
        %s628 = scalar_lea.vmem %s4, %s627
        %p629 = scmp.lt.s32.totalorder %s34, 1
        %s630 = scalar_select %p629, %s34, 1
        %s631 = smul.addr %s630, 2
        %s632 = scalar_lea.vmem %s5, %s631
        %p633 = scmp.lt.s32.totalorder %s34, 1
        %s634 = scalar_select %p633, %s34, 1
        %s635 = smul.addr %s634, 4
        %s636 = smul.addr %s635, 4
        %s637 = scalar_lea.vmem %s6, %s636
        %p638 = scmp.lt.s32.totalorder %s34, 1
        %s639 = scalar_select %p638, %s34, 1
        %s640 = scalar_lea.vmem %s7, %s639
        %p641 = scmp.lt.s32.totalorder %s34, 1
        %s642 = scalar_select %p641, %s34, 1
        %s643 = smul.addr %s642, 8
        %s644 = smul.addr %s643, 4
        %s645 = scalar_lea.vmem %s8, %s644
        %p646 = scmp.lt.s32.totalorder %s34, 1
        %s647 = scalar_select %p646, %s34, 1
        %s648 = smul.addr %s647, 2
        %s649 = smul.addr %s648, 8
        %s650 = scalar_lea.vmem %s9, %s649
        %p651 = scmp.lt.s32.totalorder %s34, 1
        %s652 = scalar_select %p651, %s34, 1
        %p653 = scmp.lt.s32.totalorder %s33, 1
        %s654 = scalar_select %p653, %s33, 1
        %s655 = smul.addr %s652, 2
        %s656 = sadd.s32 %s654, %s655
        %s657 = smul.addr %s656, 8
        %s658 = scalar_lea.vmem %s13, %s657
        %p659 = scmp.lt.s32.totalorder %s34, 1
        %s660 = scalar_select %p659, %s34, 1
        %p661 = scmp.lt.s32.totalorder %s33, 1
        %s662 = scalar_select %p661, %s33, 1
        %s663 = smul.addr %s660, 2
        %s664 = sadd.s32 %s662, %s663
        %s665 = smul.addr %s664, 8
        %s666 = scalar_lea.vmem %s14, %s665
        %p668 = scmp.eq.s32.totalorder %s34, 0
        // Predicated region
        $region69: #{transformer_decoder_forward.1} parent=67 // pred_check
          %p669 = pneg %p668
        $region70: #{transformer_decoder_forward.1} parent=67 // pred_check_branch
          %671 = sbr.rel (%p669) target = $region72
        $region71: #{transformer_decoder_forward.1} parent=67 // pred_region
          %v672 = vld [vmem:[%s613] sm:$0xff]
          %vm673 = vcmask 261120
          %674 = vst.msk [vmem:[#allocation2] sm:$0xff] %vm673, %v672
        $region72: #{transformer_decoder_forward.1} parent=67 // pred_fallthru
          _
        %v675 = vld [vmem:[#allocation2] sm:$0xff]
        %v676 = vld [vmem:[%s2] sm:$0xff]
        %v677 = vld [vmem:[%s623] sm:$0xf]
        %v678 = vld [vmem:[%s623 + $0x4] sm:$0xf]
        %v679 = vld [vmem:[%s623 + $0x8] sm:$0xf]
        %v680 = vld [vmem:[%s623 + $0xc] sm:$0xf]
        %s681 = scalar_lea.vmem %s623, 16
        %v682 = vld [vmem:[%s681] sm:$0xf]
        %v683 = vld [vmem:[%s681 + $0x4] sm:$0xf]
        %v684 = vld [vmem:[%s681 + $0x8] sm:$0xf]
        %v685 = vld [vmem:[%s681 + $0xc] sm:$0xf]
        %v686 = vld [vmem:[%s628] sm:$0xf]
        %v687 = vld [vmem:[%s628 + $0x4] sm:$0xf]
        %v688 = vld [vmem:[%s628 + $0x8] sm:$0xf]
        %v689 = vld [vmem:[%s628 + $0xc] sm:$0xf]
        %s690 = scalar_lea.vmem %s628, 16
        %v691 = vld [vmem:[%s690] sm:$0xf]
        %v692 = vld [vmem:[%s690 + $0x4] sm:$0xf]
        %v693 = vld [vmem:[%s690 + $0x8] sm:$0xf]
        %v694 = vld [vmem:[%s690 + $0xc] sm:$0xf]
        %v695 = vld [vmem:[%s632] sm:$0x1]
        %v696 = vld [vmem:[%s632 + $0x1] sm:$0x1]
        %v697 = vld [vmem:[%s650] sm:$0xff]
        %v698 = vld [vmem:[%s650 + $0x8] sm:$0x1]
        %v699 = vld [vmem:[%s637] sm:$0xf]
        %v700 = vld [vmem:[%s637 + $0x4] sm:$0xf]
        %v701 = vld [vmem:[%s637 + $0x8] sm:$0xf]
        %v702 = vld [vmem:[%s637 + $0xc] sm:$0xf]
        %v703 = vld [vmem:[%s640] sm:$0x1]
        %v704 = vld [vmem:[%s645] sm:$0xf]
        %v705 = vld [vmem:[%s645 + $0x4] sm:$0xf]
        %v706 = vld [vmem:[%s645 + $0x8] sm:$0xf]
        %v707 = vld [vmem:[%s645 + $0xc] sm:$0xf]
        %v708 = vld [vmem:[%s645 + $0x10] sm:$0xf]
        %v709 = vld [vmem:[%s645 + $0x14] sm:$0xf]
        %v710 = vld [vmem:[%s645 + $0x18] sm:$0xf]
        %v711 = vld [vmem:[%s645 + $0x1c] sm:$0xf]
        %v712 = vpack.c.bf16 %v675, %v675
        %v713 = vlaneseq
        %v714 = vshrl.u32 %v713, 7
        %v715 = vsub.s32 0, %v714
        %v716 = vrot.slane %v695, %v715
        %v721 = vunpack.c.l.b16 %v677
        %v722 = vunpack.c.l.b16 %v678
        %v723 = vunpack.c.l.b16 %v679
        %v724 = vunpack.c.l.b16 %v680
        %v725 = vpack.c.b16 %v722, %v721
        %v726 = vpack.c.b16 %v724, %v723
        %vm729 = vcmask 261120
        %v731 = vsel %vm729, %v712, 0
        %733 = vmatprep.subr.bf16.mxu0 0
        %734 = vmatpush1.bf16.msra.mxu0 %v725
        %735 = vmatprep.subr.bf16.mxu0 0
        %736 = vmatpush1.bf16.msra.mxu0 %v726
        %737 = vmatprep.subr.bf16.mxu0 0
        %738 = vmatpush1.bf16.msra.mxu0 0
        %739 = vmatprep.subr.bf16.mxu0 0
        %740 = vmatpush1.bf16.msra.mxu0 0
        %741 = vmatprep.subr.bf16.mxu0 0
        %742 = vmatpush1.bf16.msra.mxu0 0
        %743 = vmatprep.subr.bf16.mxu0 0
        %744 = vmatpush1.bf16.msra.mxu0 0
        %745 = vmatprep.subr.bf16.mxu0 0
        %746 = vmatpush1.bf16.msra.mxu0 0
        %747 = vmatprep.subr.bf16.mxu0 0
        %748 = vmatpush1.bf16.msra.mxu0 0
        %749 = vmatprep.subr.bf16.mxu0 0
        %750 = vmatpush1.bf16.msra.mxu0 0
        %751 = vmatprep.subr.bf16.mxu0 0
        %752 = vmatpush1.bf16.msra.mxu0 0
        %753 = vmatprep.subr.bf16.mxu0 0
        %754 = vmatpush1.bf16.msra.mxu0 0
        %755 = vmatprep.subr.bf16.mxu0 0
        %756 = vmatpush1.bf16.msra.mxu0 0
        %757 = vmatprep.subr.bf16.mxu0 0
        %758 = vmatpush1.bf16.msra.mxu0 0
        %759 = vmatprep.subr.bf16.mxu0 0
        %760 = vmatpush1.bf16.msra.mxu0 0
        %761 = vmatprep.subr.bf16.mxu0 0
        %762 = vmatpush1.bf16.msra.mxu0 0
        %763 = vmatprep.subr.bf16.mxu0 0
        %764 = vmatpush1.bf16.msra.mxu0 0
        %765 = vmatprep.mubr.bf16.mxu0 0
        %766 = vmatmul.mubr.bf16.gmra.mrb[0].mxu0 %v731
        %v767 = vpop.f32.mrb[0].mxu0
        %v768 = vadd.f32 %v716, %v767
        %v769 = vpop.f32.mrb[0].mxu0
        %v770 = vpop.f32.mrb[0].mxu0
        %v771 = vpop.f32.mrb[0].mxu0
        %772 = vdwg.mxu0
        %774 = vrot.lane.b32.xlu0 %v768, 120
        %v775 = vpop.permute.xlu0 %774
        %777 = vrot.lane.b32.xlu0 %v768, 112
        %v778 = vpop.permute.xlu0 %777
        %780 = vrot.lane.b32.xlu0 %v768, 104
        %v781 = vpop.permute.xlu0 %780
        %v783 = vpack.c.bf16 %v768, %v768
        %v784 = vpack.c.bf16 %v775, %v775
        %v785 = vpack.c.bf16 %v778, %v778
        %v786 = vpack.c.bf16 %v781, %v781
        %788 = vrot.lane.b32.xlu0 %v783, 96
        %v789 = vpop.permute.xlu0 %788
        %vm790 = vcmask 64512
        %v792 = vsel %vm790, %v783, 0
        %v795 = vsel %vm790, %v789, 0
        %797 = vmatprep.subr.bf16.mxu0 0
        %798 = vmatpush1.bf16.xpose.msra.mxu0 %v795
        %799 = vmatprep.subr.bf16.mxu0 0
        %800 = vmatpush1.bf16.xpose.msra.mxu0 0
        %801 = vmatprep.subr.bf16.mxu0 0
        %802 = vmatpush1.bf16.xpose.msra.mxu0 0
        %803 = vmatprep.subr.bf16.mxu0 0
        %804 = vmatpush1.bf16.xpose.msra.mxu0 0
        %805 = vmatprep.subr.bf16.mxu0 0
        %806 = vmatpush1.bf16.xpose.msra.mxu0 0
        %807 = vmatprep.subr.bf16.mxu0 0
        %808 = vmatpush1.bf16.xpose.msra.mxu0 0
        %809 = vmatprep.subr.bf16.mxu0 0
        %810 = vmatpush1.bf16.xpose.msra.mxu0 0
        %811 = vmatprep.subr.bf16.mxu0 0
        %812 = vmatpush1.bf16.xpose.msra.mxu0 0
        %813 = vmatprep.subr.bf16.mxu0 0
        %814 = vmatpush1.bf16.xpose.msra.mxu0 0
        %815 = vmatprep.subr.bf16.mxu0 0
        %816 = vmatpush1.bf16.xpose.msra.mxu0 0
        %817 = vmatprep.subr.bf16.mxu0 0
        %818 = vmatpush1.bf16.xpose.msra.mxu0 0
        %819 = vmatprep.subr.bf16.mxu0 0
        %820 = vmatpush1.bf16.xpose.msra.mxu0 0
        %821 = vmatprep.subr.bf16.mxu0 0
        %822 = vmatpush1.bf16.xpose.msra.mxu0 0
        %823 = vmatprep.subr.bf16.mxu0 0
        %824 = vmatpush1.bf16.xpose.msra.mxu0 0
        %825 = vmatprep.subr.bf16.mxu0 0
        %826 = vmatpush1.bf16.xpose.msra.mxu0 0
        %827 = vmatprep.subr.bf16.mxu0 0
        %828 = vmatpush1.bf16.xpose.msra.mxu0 0
        %829 = vmatprep.mubr.bf16.mxu0 0
        %830 = vmatmul.mubr.bf16.gmra.mrb[0].mxu0 %v792
        %v831 = vpop.f32.mrb[0].mxu0
        %v832 = vadd.f32 0.0, %v831
        %v833 = vpop.f32.mrb[0].mxu0
        %v834 = vpop.f32.mrb[0].mxu0
        %v835 = vpop.f32.mrb[0].mxu0
        %836 = vdwg.mxu0
        %838 = vrot.lane.b32.xlu0 %v784, 96
        %v839 = vpop.permute.xlu0 %838
        %v841 = vsel %vm790, %v784, 0
        %v844 = vsel %vm790, %v839, 0
        %846 = vmatprep.subr.bf16.mxu0 0
        %847 = vmatpush1.bf16.xpose.msra.mxu0 %v844
        %848 = vmatprep.subr.bf16.mxu0 0
        %849 = vmatpush1.bf16.xpose.msra.mxu0 0
        %850 = vmatprep.subr.bf16.mxu0 0
        %851 = vmatpush1.bf16.xpose.msra.mxu0 0
        %852 = vmatprep.subr.bf16.mxu0 0
        %853 = vmatpush1.bf16.xpose.msra.mxu0 0
        %854 = vmatprep.subr.bf16.mxu0 0
        %855 = vmatpush1.bf16.xpose.msra.mxu0 0
        %856 = vmatprep.subr.bf16.mxu0 0
        %857 = vmatpush1.bf16.xpose.msra.mxu0 0
        %858 = vmatprep.subr.bf16.mxu0 0
        %859 = vmatpush1.bf16.xpose.msra.mxu0 0
        %860 = vmatprep.subr.bf16.mxu0 0
        %861 = vmatpush1.bf16.xpose.msra.mxu0 0
        %862 = vmatprep.subr.bf16.mxu0 0
        %863 = vmatpush1.bf16.xpose.msra.mxu0 0
        %864 = vmatprep.subr.bf16.mxu0 0
        %865 = vmatpush1.bf16.xpose.msra.mxu0 0
        %866 = vmatprep.subr.bf16.mxu0 0
        %867 = vmatpush1.bf16.xpose.msra.mxu0 0
        %868 = vmatprep.subr.bf16.mxu0 0
        %869 = vmatpush1.bf16.xpose.msra.mxu0 0
        %870 = vmatprep.subr.bf16.mxu0 0
        %871 = vmatpush1.bf16.xpose.msra.mxu0 0
        %872 = vmatprep.subr.bf16.mxu0 0
        %873 = vmatpush1.bf16.xpose.msra.mxu0 0
        %874 = vmatprep.subr.bf16.mxu0 0
        %875 = vmatpush1.bf16.xpose.msra.mxu0 0
        %876 = vmatprep.subr.bf16.mxu0 0
        %877 = vmatpush1.bf16.xpose.msra.mxu0 0
        %878 = vmatprep.mubr.bf16.mxu0 0
        %879 = vmatmul.mubr.bf16.gmra.mrb[0].mxu0 %v841
        %v880 = vpop.f32.mrb[0].mxu0
        %v881 = vadd.f32 0.0, %v880
        %v882 = vpop.f32.mrb[0].mxu0
        %v883 = vpop.f32.mrb[0].mxu0
        %v884 = vpop.f32.mrb[0].mxu0
        %885 = vdwg.mxu0
        %887 = vrot.lane.b32.xlu0 %v785, 96
        %v888 = vpop.permute.xlu0 %887
        %v890 = vsel %vm790, %v785, 0
        %v893 = vsel %vm790, %v888, 0
        %895 = vmatprep.subr.bf16.mxu0 0
        %896 = vmatpush1.bf16.xpose.msra.mxu0 %v893
        %897 = vmatprep.subr.bf16.mxu0 0
        %898 = vmatpush1.bf16.xpose.msra.mxu0 0
        %899 = vmatprep.subr.bf16.mxu0 0
        %900 = vmatpush1.bf16.xpose.msra.mxu0 0
        %901 = vmatprep.subr.bf16.mxu0 0
        %902 = vmatpush1.bf16.xpose.msra.mxu0 0
        %903 = vmatprep.subr.bf16.mxu0 0
        %904 = vmatpush1.bf16.xpose.msra.mxu0 0
        %905 = vmatprep.subr.bf16.mxu0 0
        %906 = vmatpush1.bf16.xpose.msra.mxu0 0
        %907 = vmatprep.subr.bf16.mxu0 0
        %908 = vmatpush1.bf16.xpose.msra.mxu0 0
        %909 = vmatprep.subr.bf16.mxu0 0
        %910 = vmatpush1.bf16.xpose.msra.mxu0 0
        %911 = vmatprep.subr.bf16.mxu0 0
        %912 = vmatpush1.bf16.xpose.msra.mxu0 0
        %913 = vmatprep.subr.bf16.mxu0 0
        %914 = vmatpush1.bf16.xpose.msra.mxu0 0
        %915 = vmatprep.subr.bf16.mxu0 0
        %916 = vmatpush1.bf16.xpose.msra.mxu0 0
        %917 = vmatprep.subr.bf16.mxu0 0
        %918 = vmatpush1.bf16.xpose.msra.mxu0 0
        %919 = vmatprep.subr.bf16.mxu0 0
        %920 = vmatpush1.bf16.xpose.msra.mxu0 0
        %921 = vmatprep.subr.bf16.mxu0 0
        %922 = vmatpush1.bf16.xpose.msra.mxu0 0
        %923 = vmatprep.subr.bf16.mxu0 0
        %924 = vmatpush1.bf16.xpose.msra.mxu0 0
        %925 = vmatprep.subr.bf16.mxu0 0
        %926 = vmatpush1.bf16.xpose.msra.mxu0 0
        %927 = vmatprep.mubr.bf16.mxu0 0
        %928 = vmatmul.mubr.bf16.gmra.mrb[0].mxu0 %v890
        %v929 = vpop.f32.mrb[0].mxu0
        %v930 = vadd.f32 0.0, %v929
        %v931 = vpop.f32.mrb[0].mxu0
        %v932 = vpop.f32.mrb[0].mxu0
        %v933 = vpop.f32.mrb[0].mxu0
        %934 = vdwg.mxu0
        %936 = vrot.lane.b32.xlu0 %v786, 96
        %v937 = vpop.permute.xlu0 %936
        %v939 = vsel %vm790, %v786, 0
        %v942 = vsel %vm790, %v937, 0
        %944 = vmatprep.subr.bf16.mxu0 0
        %945 = vmatpush1.bf16.xpose.msra.mxu0 %v942
        %946 = vmatprep.subr.bf16.mxu0 0
        %947 = vmatpush1.bf16.xpose.msra.mxu0 0
        %948 = vmatprep.subr.bf16.mxu0 0
        %949 = vmatpush1.bf16.xpose.msra.mxu0 0
        %950 = vmatprep.subr.bf16.mxu0 0
        %951 = vmatpush1.bf16.xpose.msra.mxu0 0
        %952 = vmatprep.subr.bf16.mxu0 0
        %953 = vmatpush1.bf16.xpose.msra.mxu0 0
        %954 = vmatprep.subr.bf16.mxu0 0
        %955 = vmatpush1.bf16.xpose.msra.mxu0 0
        %956 = vmatprep.subr.bf16.mxu0 0
        %957 = vmatpush1.bf16.xpose.msra.mxu0 0
        %958 = vmatprep.subr.bf16.mxu0 0
        %959 = vmatpush1.bf16.xpose.msra.mxu0 0
        %960 = vmatprep.subr.bf16.mxu0 0
        %961 = vmatpush1.bf16.xpose.msra.mxu0 0
        %962 = vmatprep.subr.bf16.mxu0 0
        %963 = vmatpush1.bf16.xpose.msra.mxu0 0
        %964 = vmatprep.subr.bf16.mxu0 0
        %965 = vmatpush1.bf16.xpose.msra.mxu0 0
        %966 = vmatprep.subr.bf16.mxu0 0
        %967 = vmatpush1.bf16.xpose.msra.mxu0 0
        %968 = vmatprep.subr.bf16.mxu0 0
        %969 = vmatpush1.bf16.xpose.msra.mxu0 0
        %970 = vmatprep.subr.bf16.mxu0 0
        %971 = vmatpush1.bf16.xpose.msra.mxu0 0
        %972 = vmatprep.subr.bf16.mxu0 0
        %973 = vmatpush1.bf16.xpose.msra.mxu0 0
        %974 = vmatprep.subr.bf16.mxu0 0
        %975 = vmatpush1.bf16.xpose.msra.mxu0 0
        %976 = vmatprep.mubr.bf16.mxu0 0
        %977 = vmatmul.mubr.bf16.gmra.mrb[0].mxu0 %v939
        %v978 = vpop.f32.mrb[0].mxu0
        %v979 = vadd.f32 0.0, %v978
        %v980 = vpop.f32.mrb[0].mxu0
        %v981 = vpop.f32.mrb[0].mxu0
        %v982 = vpop.f32.mrb[0].mxu0
        %983 = vdwg.mxu0
        %v984 = vmul.f32 %v832, 0.35355338
        %v985 = vmul.f32 %v881, 0.35355338
        %v986 = vmul.f32 %v930, 0.35355338
        %v987 = vmul.f32 %v979, 0.35355338
        %v988 = vadd.f32 %v984, %v676
        %v989 = vadd.f32 %v985, %v676
        %v990 = vadd.f32 %v986, %v676
        %v991 = vadd.f32 %v987, %v676
        %v992 = vsel %vm790, %v988, -inf
        %993 = vmax.xlane.f32.xlu0 %v992
        %v994 = vpop.xlane.xlu0 %993
        %v995 = vsel %vm790, %v989, -inf
        %996 = vmax.xlane.f32.xlu0 %v995
        %v997 = vpop.xlane.xlu0 %996
        %v998 = vsel %vm790, %v990, -inf
        %999 = vmax.xlane.f32.xlu0 %v998
        %v1000 = vpop.xlane.xlu0 %999
        %v1001 = vsel %vm790, %v991, -inf
        %1002 = vmax.xlane.f32.xlu0 %v1001
        %v1003 = vpop.xlane.xlu0 %1002
        %v1004 = vsub.f32 %v988, %v994
        %v1005 = vsub.f32 %v989, %v997
        %v1006 = vsub.f32 %v990, %v1000
        %v1007 = vsub.f32 %v991, %v1003
        %v1008 = vmul.f32 %v1004, 1.442695
        %v1009 = vpow.pop %v1008
        %v1010 = vmul.f32 %v1005, 1.442695
        %v1011 = vpow.pop %v1010
        %v1012 = vmul.f32 %v1006, 1.442695
        %v1013 = vpow.pop %v1012
        %v1014 = vmul.f32 %v1007, 1.442695
        %v1015 = vpow.pop %v1014
        %v1016 = vsel %vm790, %v1009, 0.0
        %1017 = vadd.xlane.f32.xlu0 %v1016
        %v1018 = vpop.xlane.xlu0 %1017
        %v1019 = vsel %vm790, %v1011, 0.0
        %1020 = vadd.xlane.f32.xlu0 %v1019
        %v1021 = vpop.xlane.xlu0 %1020
        %v1022 = vsel %vm790, %v1013, 0.0
        %1023 = vadd.xlane.f32.xlu0 %v1022
        %v1024 = vpop.xlane.xlu0 %1023
        %v1025 = vsel %vm790, %v1015, 0.0
        %1026 = vadd.xlane.f32.xlu0 %v1025
        %v1027 = vpop.xlane.xlu0 %1026
        %v1028 = vrcp.pop %v1018
        %v1029 = vrcp.pop %v1021
        %v1030 = vrcp.pop %v1024
        %v1031 = vrcp.pop %v1027
        %v1032 = vmul.f32 %v1009, %v1028
        %v1033 = vmul.f32 %v1011, %v1029
        %v1034 = vmul.f32 %v1013, %v1030
        %v1035 = vmul.f32 %v1015, %v1031
        %v1036 = vpack.c.bf16 %v1032, %v1032
        %v1037 = vpack.c.bf16 %v1033, %v1033
        %v1038 = vpack.c.bf16 %v1034, %v1034
        %v1039 = vpack.c.bf16 %v1035, %v1035
        %1040 = vrot.lane.b32.xlu0 %v783, 64
        %v1041 = vpop.permute.xlu0 %1040
        %v1043 = vsel %vm790, %v1036, 0
        %vm1045 = vcmask 1043456
        %v1047 = vsel %vm1045, %v1041, 0
        %1049 = vmatprep.subr.bf16.mxu0 0
        %1050 = vmatpush1.bf16.msra.mxu0 %v1047
        %1051 = vmatprep.subr.bf16.mxu0 0
        %1052 = vmatpush1.bf16.msra.mxu0 0
        %1053 = vmatprep.subr.bf16.mxu0 0
        %1054 = vmatpush1.bf16.msra.mxu0 0
        %1055 = vmatprep.subr.bf16.mxu0 0
        %1056 = vmatpush1.bf16.msra.mxu0 0
        %1057 = vmatprep.subr.bf16.mxu0 0
        %1058 = vmatpush1.bf16.msra.mxu0 0
        %1059 = vmatprep.subr.bf16.mxu0 0
        %1060 = vmatpush1.bf16.msra.mxu0 0
        %1061 = vmatprep.subr.bf16.mxu0 0
        %1062 = vmatpush1.bf16.msra.mxu0 0
        %1063 = vmatprep.subr.bf16.mxu0 0
        %1064 = vmatpush1.bf16.msra.mxu0 0
        %1065 = vmatprep.subr.bf16.mxu0 0
        %1066 = vmatpush1.bf16.msra.mxu0 0
        %1067 = vmatprep.subr.bf16.mxu0 0
        %1068 = vmatpush1.bf16.msra.mxu0 0
        %1069 = vmatprep.subr.bf16.mxu0 0
        %1070 = vmatpush1.bf16.msra.mxu0 0
        %1071 = vmatprep.subr.bf16.mxu0 0
        %1072 = vmatpush1.bf16.msra.mxu0 0
        %1073 = vmatprep.subr.bf16.mxu0 0
        %1074 = vmatpush1.bf16.msra.mxu0 0
        %1075 = vmatprep.subr.bf16.mxu0 0
        %1076 = vmatpush1.bf16.msra.mxu0 0
        %1077 = vmatprep.subr.bf16.mxu0 0
        %1078 = vmatpush1.bf16.msra.mxu0 0
        %1079 = vmatprep.subr.bf16.mxu0 0
        %1080 = vmatpush1.bf16.msra.mxu0 0
        %1081 = vmatprep.mubr.bf16.mxu0 0
        %1082 = vmatmul.mubr.bf16.gmra.mrb[0].mxu0 %v1043
        %v1083 = vpop.f32.mrb[0].mxu0
        %v1084 = vadd.f32 0.0, %v1083
        %v1085 = vpop.f32.mrb[0].mxu0
        %v1086 = vpop.f32.mrb[0].mxu0
        %v1087 = vpop.f32.mrb[0].mxu0
        %1088 = vdwg.mxu0
        %1089 = vrot.lane.b32.xlu0 %v784, 64
        %v1090 = vpop.permute.xlu0 %1089
        %v1092 = vsel %vm790, %v1037, 0
        %v1095 = vsel %vm1045, %v1090, 0
        %1097 = vmatprep.subr.bf16.mxu0 0
        %1098 = vmatpush1.bf16.msra.mxu0 %v1095
        %1099 = vmatprep.subr.bf16.mxu0 0
        %1100 = vmatpush1.bf16.msra.mxu0 0
        %1101 = vmatprep.subr.bf16.mxu0 0
        %1102 = vmatpush1.bf16.msra.mxu0 0
        %1103 = vmatprep.subr.bf16.mxu0 0
        %1104 = vmatpush1.bf16.msra.mxu0 0
        %1105 = vmatprep.subr.bf16.mxu0 0
        %1106 = vmatpush1.bf16.msra.mxu0 0
        %1107 = vmatprep.subr.bf16.mxu0 0
        %1108 = vmatpush1.bf16.msra.mxu0 0
        %1109 = vmatprep.subr.bf16.mxu0 0
        %1110 = vmatpush1.bf16.msra.mxu0 0
        %1111 = vmatprep.subr.bf16.mxu0 0
        %1112 = vmatpush1.bf16.msra.mxu0 0
        %1113 = vmatprep.subr.bf16.mxu0 0
        %1114 = vmatpush1.bf16.msra.mxu0 0
        %1115 = vmatprep.subr.bf16.mxu0 0
        %1116 = vmatpush1.bf16.msra.mxu0 0
        %1117 = vmatprep.subr.bf16.mxu0 0
        %1118 = vmatpush1.bf16.msra.mxu0 0
        %1119 = vmatprep.subr.bf16.mxu0 0
        %1120 = vmatpush1.bf16.msra.mxu0 0
        %1121 = vmatprep.subr.bf16.mxu0 0
        %1122 = vmatpush1.bf16.msra.mxu0 0
        %1123 = vmatprep.subr.bf16.mxu0 0
        %1124 = vmatpush1.bf16.msra.mxu0 0
        %1125 = vmatprep.subr.bf16.mxu0 0
        %1126 = vmatpush1.bf16.msra.mxu0 0
        %1127 = vmatprep.subr.bf16.mxu0 0
        %1128 = vmatpush1.bf16.msra.mxu0 0
        %1129 = vmatprep.mubr.bf16.mxu0 0
        %1130 = vmatmul.mubr.bf16.gmra.mrb[0].mxu0 %v1092
        %v1131 = vpop.f32.mrb[0].mxu0
        %v1132 = vadd.f32 0.0, %v1131
        %v1133 = vpop.f32.mrb[0].mxu0
        %v1134 = vpop.f32.mrb[0].mxu0
        %v1135 = vpop.f32.mrb[0].mxu0
        %1136 = vdwg.mxu0
        %1137 = vrot.lane.b32.xlu0 %v785, 64
        %v1138 = vpop.permute.xlu0 %1137
        %v1140 = vsel %vm790, %v1038, 0
        %v1143 = vsel %vm1045, %v1138, 0
        %1145 = vmatprep.subr.bf16.mxu0 0
        %1146 = vmatpush1.bf16.msra.mxu0 %v1143
        %1147 = vmatprep.subr.bf16.mxu0 0
        %1148 = vmatpush1.bf16.msra.mxu0 0
        %1149 = vmatprep.subr.bf16.mxu0 0
        %1150 = vmatpush1.bf16.msra.mxu0 0
        %1151 = vmatprep.subr.bf16.mxu0 0
        %1152 = vmatpush1.bf16.msra.mxu0 0
        %1153 = vmatprep.subr.bf16.mxu0 0
        %1154 = vmatpush1.bf16.msra.mxu0 0
        %1155 = vmatprep.subr.bf16.mxu0 0
        %1156 = vmatpush1.bf16.msra.mxu0 0
        %1157 = vmatprep.subr.bf16.mxu0 0
        %1158 = vmatpush1.bf16.msra.mxu0 0
        %1159 = vmatprep.subr.bf16.mxu0 0
        %1160 = vmatpush1.bf16.msra.mxu0 0
        %1161 = vmatprep.subr.bf16.mxu0 0
        %1162 = vmatpush1.bf16.msra.mxu0 0
        %1163 = vmatprep.subr.bf16.mxu0 0
        %1164 = vmatpush1.bf16.msra.mxu0 0
        %1165 = vmatprep.subr.bf16.mxu0 0
        %1166 = vmatpush1.bf16.msra.mxu0 0
        %1167 = vmatprep.subr.bf16.mxu0 0
        %1168 = vmatpush1.bf16.msra.mxu0 0
        %1169 = vmatprep.subr.bf16.mxu0 0
        %1170 = vmatpush1.bf16.msra.mxu0 0
        %1171 = vmatprep.subr.bf16.mxu0 0
        %1172 = vmatpush1.bf16.msra.mxu0 0
        %1173 = vmatprep.subr.bf16.mxu0 0
        %1174 = vmatpush1.bf16.msra.mxu0 0
        %1175 = vmatprep.subr.bf16.mxu0 0
        %1176 = vmatpush1.bf16.msra.mxu0 0
        %1177 = vmatprep.mubr.bf16.mxu0 0
        %1178 = vmatmul.mubr.bf16.gmra.mrb[0].mxu0 %v1140
        %v1179 = vpop.f32.mrb[0].mxu0
        %v1180 = vadd.f32 0.0, %v1179
        %v1181 = vpop.f32.mrb[0].mxu0
        %v1182 = vpop.f32.mrb[0].mxu0
        %v1183 = vpop.f32.mrb[0].mxu0
        %1184 = vdwg.mxu0
        %1185 = vrot.lane.b32.xlu0 %v786, 64
        %v1186 = vpop.permute.xlu0 %1185
        %v1188 = vsel %vm790, %v1039, 0
        %v1191 = vsel %vm1045, %v1186, 0
        %1193 = vmatprep.subr.bf16.mxu0 0
        %1194 = vmatpush1.bf16.msra.mxu0 %v1191
        %1195 = vmatprep.subr.bf16.mxu0 0
        %1196 = vmatpush1.bf16.msra.mxu0 0
        %1197 = vmatprep.subr.bf16.mxu0 0
        %1198 = vmatpush1.bf16.msra.mxu0 0
        %1199 = vmatprep.subr.bf16.mxu0 0
        %1200 = vmatpush1.bf16.msra.mxu0 0
        %1201 = vmatprep.subr.bf16.mxu0 0
        %1202 = vmatpush1.bf16.msra.mxu0 0
        %1203 = vmatprep.subr.bf16.mxu0 0
        %1204 = vmatpush1.bf16.msra.mxu0 0
        %1205 = vmatprep.subr.bf16.mxu0 0
        %1206 = vmatpush1.bf16.msra.mxu0 0
        %1207 = vmatprep.subr.bf16.mxu0 0
        %1208 = vmatpush1.bf16.msra.mxu0 0
        %1209 = vmatprep.subr.bf16.mxu0 0
        %1210 = vmatpush1.bf16.msra.mxu0 0
        %1211 = vmatprep.subr.bf16.mxu0 0
        %1212 = vmatpush1.bf16.msra.mxu0 0
        %1213 = vmatprep.subr.bf16.mxu0 0
        %1214 = vmatpush1.bf16.msra.mxu0 0
        %1215 = vmatprep.subr.bf16.mxu0 0
        %1216 = vmatpush1.bf16.msra.mxu0 0
        %1217 = vmatprep.subr.bf16.mxu0 0
        %1218 = vmatpush1.bf16.msra.mxu0 0
        %1219 = vmatprep.subr.bf16.mxu0 0
        %1220 = vmatpush1.bf16.msra.mxu0 0
        %1221 = vmatprep.subr.bf16.mxu0 0
        %1222 = vmatpush1.bf16.msra.mxu0 0
        %1223 = vmatprep.subr.bf16.mxu0 0
        %1224 = vmatpush1.bf16.msra.mxu0 0
        %1225 = vmatprep.mubr.bf16.mxu0 0
        %1226 = vmatmul.mubr.bf16.gmra.mrb[0].mxu0 %v1188
        %v1227 = vpop.f32.mrb[0].mxu0
        %v1228 = vadd.f32 0.0, %v1227
        %v1229 = vpop.f32.mrb[0].mxu0
        %v1230 = vpop.f32.mrb[0].mxu0
        %v1231 = vpop.f32.mrb[0].mxu0
        %1232 = vdwg.mxu0
        %1234 = vrot.lane.b32.xlu0 %v1132, 8
        %v1235 = vpop.permute.xlu0 %1234
        %1238 = vrot.lane.b32.xlu0 %v1180, 16
        %v1239 = vpop.permute.xlu0 %1238
        %1242 = vrot.lane.b32.xlu0 %v1228, 24
        %v1243 = vpop.permute.xlu0 %1242
        %v1245 = vsel %vm790, %v1084, %v1235
        %vm1246 = vcmask 130048
        %v1247 = vsel %vm1246, %v1245, %v1239
        %vm1248 = vcmask 195584
        %v1249 = vsel %vm1248, %v1247, %v1243
        %v1250 = vsel %vm790, %v1032, 0.0
        %v1251 = vsel %vm790, %v1033, 0.0
        %v1252 = vadd.f32 %v1250, %v1251
        %v1253 = vsel %vm790, %v1034, 0.0
        %v1254 = vadd.f32 %v1252, %v1253
        %v1255 = vsel %vm790, %v1035, 0.0
        %v1256 = vadd.f32 %v1254, %v1255
        %v1257 = vrcp.pop 4.0
        %v1258 = vmul.f32 %v1256, %v1257
        %v1259 = vpack.c.bf16 %v1249, %v1249
        %v1260 = vlaneseq
        %v1261 = vshrl.u32 %v1260, 7
        %v1262 = vsub.s32 0, %v1261
        %v1263 = vrot.slane %v697, %v1262
        %v1268 = vunpack.c.l.b16 %v686
        %v1269 = vunpack.c.l.b16 %v687
        %v1270 = vunpack.c.l.b16 %v688
        %v1271 = vunpack.c.l.b16 %v689
        %v1272 = vpack.c.b16 %v1269, %v1268
        %v1273 = vpack.c.b16 %v1271, %v1270
        %v1277 = vsel %vm729, %v1259, 0
        %1279 = vmatprep.subr.bf16.mxu0 0
        %1280 = vmatpush1.bf16.msra.mxu0 %v1272
        %1281 = vmatprep.subr.bf16.mxu0 0
        %1282 = vmatpush1.bf16.msra.mxu0 %v1273
        %1283 = vmatprep.subr.bf16.mxu0 0
        %1284 = vmatpush1.bf16.msra.mxu0 0
        %1285 = vmatprep.subr.bf16.mxu0 0
        %1286 = vmatpush1.bf16.msra.mxu0 0
        %1287 = vmatprep.subr.bf16.mxu0 0
        %1288 = vmatpush1.bf16.msra.mxu0 0
        %1289 = vmatprep.subr.bf16.mxu0 0
        %1290 = vmatpush1.bf16.msra.mxu0 0
        %1291 = vmatprep.subr.bf16.mxu0 0
        %1292 = vmatpush1.bf16.msra.mxu0 0
        %1293 = vmatprep.subr.bf16.mxu0 0
        %1294 = vmatpush1.bf16.msra.mxu0 0
        %1295 = vmatprep.subr.bf16.mxu0 0
        %1296 = vmatpush1.bf16.msra.mxu0 0
        %1297 = vmatprep.subr.bf16.mxu0 0
        %1298 = vmatpush1.bf16.msra.mxu0 0
        %1299 = vmatprep.subr.bf16.mxu0 0
        %1300 = vmatpush1.bf16.msra.mxu0 0
        %1301 = vmatprep.subr.bf16.mxu0 0
        %1302 = vmatpush1.bf16.msra.mxu0 0
        %1303 = vmatprep.subr.bf16.mxu0 0
        %1304 = vmatpush1.bf16.msra.mxu0 0
        %1305 = vmatprep.subr.bf16.mxu0 0
        %1306 = vmatpush1.bf16.msra.mxu0 0
        %1307 = vmatprep.subr.bf16.mxu0 0
        %1308 = vmatpush1.bf16.msra.mxu0 0
        %1309 = vmatprep.subr.bf16.mxu0 0
        %1310 = vmatpush1.bf16.msra.mxu0 0
        %1311 = vmatprep.mubr.bf16.mxu0 0
        %1312 = vmatmul.mubr.bf16.gmra.mrb[0].mxu0 %v1277
        %v1313 = vpop.f32.mrb[0].mxu0
        %v1314 = vadd.f32 %v1263, %v1313
        %v1315 = vpop.f32.mrb[0].mxu0
        %v1316 = vpop.f32.mrb[0].mxu0
        %v1317 = vpop.f32.mrb[0].mxu0
        %1318 = vdwg.mxu0
        %v1319 = vadd.f32 %v675, %v1314
        %v1320 = vsel %vm729, %v1319, 0.0
        %1321 = vadd.xlane.f32.xlu0 %v1320
        %v1322 = vpop.xlane.xlu0 %1321
        %v1323 = vrcp.pop 32.0
        %v1324 = vmul.f32 %v1322, %v1323
        %v1325 = vsub.f32 %v1319, %v1324
        %v1326 = vmul.f32 %v1325, %v1325
        %v1327 = vsel %vm729, %v1326, 0.0
        %1328 = vadd.xlane.f32.xlu0 %v1327
        %v1329 = vpop.xlane.xlu0 %1328
        %v1330 = vmul.f32 %v1329, %v1323
        %v1331 = vadd.f32 %v1330, 1e-05
        %v1332 = vrsqrt.pop %v1331
        %v1333 = vmul.f32 %v1325, %v1332
        %v1334 = vlaneseq
        %v1335 = vshrl.u32 %v1334, 7
        %v1336 = vsub.s32 3, %v1335
        %v1337 = vrot.slane %v697, %v1336
        %v1338 = vmul.f32 %v1333, %v1337
        %v1339 = vlaneseq
        %v1340 = vshrl.u32 %v1339, 7
        %v1341 = vsub.s32 4, %v1340
        %v1342 = vrot.slane %v697, %v1341
        %v1343 = vadd.f32 %v1338, %v1342
        %v1344 = vld [vmem:[%s618] sm:$0xff]
        %v1345 = vld [vmem:[%s618 + $0x8] sm:$0x3]
        %v1346 = vpack.c.bf16 %v1345, %v1344
        %v1347 = vpack.c.bf16 %v1343, %v1343
        %v1348 = vlaneseq
        %v1349 = vshrl.u32 %v1348, 7
        %v1350 = vsub.s32 0, %v1349
        %v1351 = vrot.slane %v696, %v1350
        %v1356 = vunpack.c.l.b16 %v682
        %v1357 = vunpack.c.l.b16 %v683
        %v1358 = vunpack.c.l.b16 %v684
        %v1359 = vunpack.c.l.b16 %v685
        %v1360 = vpack.c.b16 %v1357, %v1356
        %v1361 = vpack.c.b16 %v1359, %v1358
        %v1365 = vsel %vm729, %v1347, 0
        %1367 = vmatprep.subr.bf16.mxu0 0
        %1368 = vmatpush1.bf16.msra.mxu0 %v1360
        %1369 = vmatprep.subr.bf16.mxu0 0
        %1370 = vmatpush1.bf16.msra.mxu0 %v1361
        %1371 = vmatprep.subr.bf16.mxu0 0
        %1372 = vmatpush1.bf16.msra.mxu0 0
        %1373 = vmatprep.subr.bf16.mxu0 0
        %1374 = vmatpush1.bf16.msra.mxu0 0
        %1375 = vmatprep.subr.bf16.mxu0 0
        %1376 = vmatpush1.bf16.msra.mxu0 0
        %1377 = vmatprep.subr.bf16.mxu0 0
        %1378 = vmatpush1.bf16.msra.mxu0 0
        %1379 = vmatprep.subr.bf16.mxu0 0
        %1380 = vmatpush1.bf16.msra.mxu0 0
        %1381 = vmatprep.subr.bf16.mxu0 0
        %1382 = vmatpush1.bf16.msra.mxu0 0
        %1383 = vmatprep.subr.bf16.mxu0 0
        %1384 = vmatpush1.bf16.msra.mxu0 0
        %1385 = vmatprep.subr.bf16.mxu0 0
        %1386 = vmatpush1.bf16.msra.mxu0 0
        %1387 = vmatprep.subr.bf16.mxu0 0
        %1388 = vmatpush1.bf16.msra.mxu0 0
        %1389 = vmatprep.subr.bf16.mxu0 0
        %1390 = vmatpush1.bf16.msra.mxu0 0
        %1391 = vmatprep.subr.bf16.mxu0 0
        %1392 = vmatpush1.bf16.msra.mxu0 0
        %1393 = vmatprep.subr.bf16.mxu0 0
        %1394 = vmatpush1.bf16.msra.mxu0 0
        %1395 = vmatprep.subr.bf16.mxu0 0
        %1396 = vmatpush1.bf16.msra.mxu0 0
        %1397 = vmatprep.subr.bf16.mxu0 0
        %1398 = vmatpush1.bf16.msra.mxu0 0
        %1399 = vmatprep.mubr.bf16.mxu0 0
        %1400 = vmatmul.mubr.bf16.gmra.mrb[0].mxu0 %v1365
        %v1401 = vpop.f32.mrb[0].mxu0
        %v1402 = vadd.f32 %v1351, %v1401
        %v1403 = vpop.f32.mrb[0].mxu0
        %v1404 = vpop.f32.mrb[0].mxu0
        %v1405 = vpop.f32.mrb[0].mxu0
        %1406 = vdwg.mxu0
        %1407 = vrot.lane.b32.xlu0 %v1360, 96
        %v1408 = vpop.permute.xlu0 %1407
        %1409 = vrot.lane.b32.xlu0 %v1361, 96
        %v1410 = vpop.permute.xlu0 %1409
        %1414 = vrot.lane.b32.xlu0 %v1351, 96
        %v1415 = vpop.permute.xlu0 %1414
        %v1418 = vsel %vm729, %v1346, 0
        %1420 = vmatprep.subr.bf16.mxu0 0
        %1421 = vmatpush1.bf16.msra.mxu0 %v1408
        %1422 = vmatprep.subr.bf16.mxu0 0
        %1423 = vmatpush1.bf16.msra.mxu0 %v1410
        %1424 = vmatprep.subr.bf16.mxu0 0
        %1425 = vmatpush1.bf16.msra.mxu0 0
        %1426 = vmatprep.subr.bf16.mxu0 0
        %1427 = vmatpush1.bf16.msra.mxu0 0
        %1428 = vmatprep.subr.bf16.mxu0 0
        %1429 = vmatpush1.bf16.msra.mxu0 0
        %1430 = vmatprep.subr.bf16.mxu0 0
        %1431 = vmatpush1.bf16.msra.mxu0 0
        %1432 = vmatprep.subr.bf16.mxu0 0
        %1433 = vmatpush1.bf16.msra.mxu0 0
        %1434 = vmatprep.subr.bf16.mxu0 0
        %1435 = vmatpush1.bf16.msra.mxu0 0
        %1436 = vmatprep.subr.bf16.mxu0 0
        %1437 = vmatpush1.bf16.msra.mxu0 0
        %1438 = vmatprep.subr.bf16.mxu0 0
        %1439 = vmatpush1.bf16.msra.mxu0 0
        %1440 = vmatprep.subr.bf16.mxu0 0
        %1441 = vmatpush1.bf16.msra.mxu0 0
        %1442 = vmatprep.subr.bf16.mxu0 0
        %1443 = vmatpush1.bf16.msra.mxu0 0
        %1444 = vmatprep.subr.bf16.mxu0 0
        %1445 = vmatpush1.bf16.msra.mxu0 0
        %1446 = vmatprep.subr.bf16.mxu0 0
        %1447 = vmatpush1.bf16.msra.mxu0 0
        %1448 = vmatprep.subr.bf16.mxu0 0
        %1449 = vmatpush1.bf16.msra.mxu0 0
        %1450 = vmatprep.subr.bf16.mxu0 0
        %1451 = vmatpush1.bf16.msra.mxu0 0
        %1452 = vmatprep.mubr.bf16.mxu0 0
        %1453 = vmatmul.mubr.bf16.gmra.mrb[0].mxu0 %v1418
        %v1454 = vpop.f32.mrb[0].mxu0
        %v1455 = vadd.f32 %v1415, %v1454
        %v1456 = vpop.f32.mrb[0].mxu0
        %v1457 = vpop.f32.mrb[0].mxu0
        %v1458 = vadd.f32 %v1415, %v1457
        %v1459 = vpop.f32.mrb[0].mxu0
        %1460 = vdwg.mxu0
        %1462 = vrot.lane.b32.xlu0 %v1402, 120
        %v1463 = vpop.permute.xlu0 %1462
        %1465 = vrot.lane.b32.xlu0 %v1402, 112
        %v1466 = vpop.permute.xlu0 %1465
        %1468 = vrot.lane.b32.xlu0 %v1402, 104
        %v1469 = vpop.permute.xlu0 %1468
        %v1471 = vpack.c.bf16 %v1402, %v1402
        %v1472 = vpack.c.bf16 %v1463, %v1463
        %v1473 = vpack.c.bf16 %v1466, %v1466
        %v1474 = vpack.c.bf16 %v1469, %v1469
        %1477 = vrot.lane.b32.xlu0 %v1455, 120
        %v1478 = vpop.permute.xlu0 %1477
        %1479 = vrot.lane.b32.xlu0 %v1458, 120
        %v1480 = vpop.permute.xlu0 %1479
        %1483 = vrot.lane.b32.xlu0 %v1455, 112
        %v1484 = vpop.permute.xlu0 %1483
        %1485 = vrot.lane.b32.xlu0 %v1458, 112
        %v1486 = vpop.permute.xlu0 %1485
        %1489 = vrot.lane.b32.xlu0 %v1455, 104
        %v1490 = vpop.permute.xlu0 %1489
        %1491 = vrot.lane.b32.xlu0 %v1458, 104
        %v1492 = vpop.permute.xlu0 %1491
        %v1495 = vpack.c.bf16 %v1458, %v1455
        %v1496 = vpack.c.bf16 %v1480, %v1478
        %v1497 = vpack.c.bf16 %v1486, %v1484
        %v1498 = vpack.c.bf16 %v1492, %v1490
        %v1500 = vsel %vm790, %v1471, 0
        %v1503 = vsel %vm790, %v1495, 0
        %1505 = vmatprep.subr.bf16.mxu0 0
        %1506 = vmatpush1.bf16.xpose.msra.mxu0 %v1503
        %1507 = vmatprep.subr.bf16.mxu0 0
        %1508 = vmatpush1.bf16.xpose.msra.mxu0 0
        %1509 = vmatprep.subr.bf16.mxu0 0
        %1510 = vmatpush1.bf16.xpose.msra.mxu0 0
        %1511 = vmatprep.subr.bf16.mxu0 0
        %1512 = vmatpush1.bf16.xpose.msra.mxu0 0
        %1513 = vmatprep.subr.bf16.mxu0 0
        %1514 = vmatpush1.bf16.xpose.msra.mxu0 0
        %1515 = vmatprep.subr.bf16.mxu0 0
        %1516 = vmatpush1.bf16.xpose.msra.mxu0 0
        %1517 = vmatprep.subr.bf16.mxu0 0
        %1518 = vmatpush1.bf16.xpose.msra.mxu0 0
        %1519 = vmatprep.subr.bf16.mxu0 0
        %1520 = vmatpush1.bf16.xpose.msra.mxu0 0
        %1521 = vmatprep.subr.bf16.mxu0 0
        %1522 = vmatpush1.bf16.xpose.msra.mxu0 0
        %1523 = vmatprep.subr.bf16.mxu0 0
        %1524 = vmatpush1.bf16.xpose.msra.mxu0 0
        %1525 = vmatprep.subr.bf16.mxu0 0
        %1526 = vmatpush1.bf16.xpose.msra.mxu0 0
        %1527 = vmatprep.subr.bf16.mxu0 0
        %1528 = vmatpush1.bf16.xpose.msra.mxu0 0
        %1529 = vmatprep.subr.bf16.mxu0 0
        %1530 = vmatpush1.bf16.xpose.msra.mxu0 0
        %1531 = vmatprep.subr.bf16.mxu0 0
        %1532 = vmatpush1.bf16.xpose.msra.mxu0 0
        %1533 = vmatprep.subr.bf16.mxu0 0
        %1534 = vmatpush1.bf16.xpose.msra.mxu0 0
        %1535 = vmatprep.subr.bf16.mxu0 0
        %1536 = vmatpush1.bf16.xpose.msra.mxu0 0
        %1537 = vmatprep.mubr.bf16.mxu0 0
        %1538 = vmatmul.mubr.bf16.gmra.mrb[0].mxu0 %v1500
        %v1539 = vpop.f32.mrb[0].mxu0
        %v1540 = vadd.f32 0.0, %v1539
        %v1541 = vpop.f32.mrb[0].mxu0
        %v1542 = vpop.f32.mrb[0].mxu0
        %v1543 = vpop.f32.mrb[0].mxu0
        %1544 = vdwg.mxu0
        %v1546 = vsel %vm790, %v1472, 0
        %v1549 = vsel %vm790, %v1496, 0
        %1551 = vmatprep.subr.bf16.mxu0 0
        %1552 = vmatpush1.bf16.xpose.msra.mxu0 %v1549
        %1553 = vmatprep.subr.bf16.mxu0 0
        %1554 = vmatpush1.bf16.xpose.msra.mxu0 0
        %1555 = vmatprep.subr.bf16.mxu0 0
        %1556 = vmatpush1.bf16.xpose.msra.mxu0 0
        %1557 = vmatprep.subr.bf16.mxu0 0
        %1558 = vmatpush1.bf16.xpose.msra.mxu0 0
        %1559 = vmatprep.subr.bf16.mxu0 0
        %1560 = vmatpush1.bf16.xpose.msra.mxu0 0
        %1561 = vmatprep.subr.bf16.mxu0 0
        %1562 = vmatpush1.bf16.xpose.msra.mxu0 0
        %1563 = vmatprep.subr.bf16.mxu0 0
        %1564 = vmatpush1.bf16.xpose.msra.mxu0 0
        %1565 = vmatprep.subr.bf16.mxu0 0
        %1566 = vmatpush1.bf16.xpose.msra.mxu0 0
        %1567 = vmatprep.subr.bf16.mxu0 0
        %1568 = vmatpush1.bf16.xpose.msra.mxu0 0
        %1569 = vmatprep.subr.bf16.mxu0 0
        %1570 = vmatpush1.bf16.xpose.msra.mxu0 0
        %1571 = vmatprep.subr.bf16.mxu0 0
        %1572 = vmatpush1.bf16.xpose.msra.mxu0 0
        %1573 = vmatprep.subr.bf16.mxu0 0
        %1574 = vmatpush1.bf16.xpose.msra.mxu0 0
        %1575 = vmatprep.subr.bf16.mxu0 0
        %1576 = vmatpush1.bf16.xpose.msra.mxu0 0
        %1577 = vmatprep.subr.bf16.mxu0 0
        %1578 = vmatpush1.bf16.xpose.msra.mxu0 0
        %1579 = vmatprep.subr.bf16.mxu0 0
        %1580 = vmatpush1.bf16.xpose.msra.mxu0 0
        %1581 = vmatprep.subr.bf16.mxu0 0
        %1582 = vmatpush1.bf16.xpose.msra.mxu0 0
        %1583 = vmatprep.mubr.bf16.mxu0 0
        %1584 = vmatmul.mubr.bf16.gmra.mrb[0].mxu0 %v1546
        %v1585 = vpop.f32.mrb[0].mxu0
        %v1586 = vadd.f32 0.0, %v1585
        %v1587 = vpop.f32.mrb[0].mxu0
        %v1588 = vpop.f32.mrb[0].mxu0
        %v1589 = vpop.f32.mrb[0].mxu0
        %1590 = vdwg.mxu0
        %v1592 = vsel %vm790, %v1473, 0
        %v1595 = vsel %vm790, %v1497, 0
        %1597 = vmatprep.subr.bf16.mxu0 0
        %1598 = vmatpush1.bf16.xpose.msra.mxu0 %v1595
        %1599 = vmatprep.subr.bf16.mxu0 0
        %1600 = vmatpush1.bf16.xpose.msra.mxu0 0
        %1601 = vmatprep.subr.bf16.mxu0 0
        %1602 = vmatpush1.bf16.xpose.msra.mxu0 0
        %1603 = vmatprep.subr.bf16.mxu0 0
        %1604 = vmatpush1.bf16.xpose.msra.mxu0 0
        %1605 = vmatprep.subr.bf16.mxu0 0
        %1606 = vmatpush1.bf16.xpose.msra.mxu0 0
        %1607 = vmatprep.subr.bf16.mxu0 0
        %1608 = vmatpush1.bf16.xpose.msra.mxu0 0
        %1609 = vmatprep.subr.bf16.mxu0 0
        %1610 = vmatpush1.bf16.xpose.msra.mxu0 0
        %1611 = vmatprep.subr.bf16.mxu0 0
        %1612 = vmatpush1.bf16.xpose.msra.mxu0 0
        %1613 = vmatprep.subr.bf16.mxu0 0
        %1614 = vmatpush1.bf16.xpose.msra.mxu0 0
        %1615 = vmatprep.subr.bf16.mxu0 0
        %1616 = vmatpush1.bf16.xpose.msra.mxu0 0
        %1617 = vmatprep.subr.bf16.mxu0 0
        %1618 = vmatpush1.bf16.xpose.msra.mxu0 0
        %1619 = vmatprep.subr.bf16.mxu0 0
        %1620 = vmatpush1.bf16.xpose.msra.mxu0 0
        %1621 = vmatprep.subr.bf16.mxu0 0
        %1622 = vmatpush1.bf16.xpose.msra.mxu0 0
        %1623 = vmatprep.subr.bf16.mxu0 0
        %1624 = vmatpush1.bf16.xpose.msra.mxu0 0
        %1625 = vmatprep.subr.bf16.mxu0 0
        %1626 = vmatpush1.bf16.xpose.msra.mxu0 0
        %1627 = vmatprep.subr.bf16.mxu0 0
        %1628 = vmatpush1.bf16.xpose.msra.mxu0 0
        %1629 = vmatprep.mubr.bf16.mxu0 0
        %1630 = vmatmul.mubr.bf16.gmra.mrb[0].mxu0 %v1592
        %v1631 = vpop.f32.mrb[0].mxu0
        %v1632 = vadd.f32 0.0, %v1631
        %v1633 = vpop.f32.mrb[0].mxu0
        %v1634 = vpop.f32.mrb[0].mxu0
        %v1635 = vpop.f32.mrb[0].mxu0
        %1636 = vdwg.mxu0
        %v1638 = vsel %vm790, %v1474, 0
        %v1641 = vsel %vm790, %v1498, 0
        %1643 = vmatprep.subr.bf16.mxu0 0
        %1644 = vmatpush1.bf16.xpose.msra.mxu0 %v1641
        %1645 = vmatprep.subr.bf16.mxu0 0
        %1646 = vmatpush1.bf16.xpose.msra.mxu0 0
        %1647 = vmatprep.subr.bf16.mxu0 0
        %1648 = vmatpush1.bf16.xpose.msra.mxu0 0
        %1649 = vmatprep.subr.bf16.mxu0 0
        %1650 = vmatpush1.bf16.xpose.msra.mxu0 0
        %1651 = vmatprep.subr.bf16.mxu0 0
        %1652 = vmatpush1.bf16.xpose.msra.mxu0 0
        %1653 = vmatprep.subr.bf16.mxu0 0
        %1654 = vmatpush1.bf16.xpose.msra.mxu0 0
        %1655 = vmatprep.subr.bf16.mxu0 0
        %1656 = vmatpush1.bf16.xpose.msra.mxu0 0
        %1657 = vmatprep.subr.bf16.mxu0 0
        %1658 = vmatpush1.bf16.xpose.msra.mxu0 0
        %1659 = vmatprep.subr.bf16.mxu0 0
        %1660 = vmatpush1.bf16.xpose.msra.mxu0 0
        %1661 = vmatprep.subr.bf16.mxu0 0
        %1662 = vmatpush1.bf16.xpose.msra.mxu0 0
        %1663 = vmatprep.subr.bf16.mxu0 0
        %1664 = vmatpush1.bf16.xpose.msra.mxu0 0
        %1665 = vmatprep.subr.bf16.mxu0 0
        %1666 = vmatpush1.bf16.xpose.msra.mxu0 0
        %1667 = vmatprep.subr.bf16.mxu0 0
        %1668 = vmatpush1.bf16.xpose.msra.mxu0 0
        %1669 = vmatprep.subr.bf16.mxu0 0
        %1670 = vmatpush1.bf16.xpose.msra.mxu0 0
        %1671 = vmatprep.subr.bf16.mxu0 0
        %1672 = vmatpush1.bf16.xpose.msra.mxu0 0
        %1673 = vmatprep.subr.bf16.mxu0 0
        %1674 = vmatpush1.bf16.xpose.msra.mxu0 0
        %1675 = vmatprep.mubr.bf16.mxu0 0
        %1676 = vmatmul.mubr.bf16.gmra.mrb[0].mxu0 %v1638
        %v1677 = vpop.f32.mrb[0].mxu0
        %v1678 = vadd.f32 0.0, %v1677
        %v1679 = vpop.f32.mrb[0].mxu0
        %v1680 = vpop.f32.mrb[0].mxu0
        %v1681 = vpop.f32.mrb[0].mxu0
        %1682 = vdwg.mxu0
        %v1683 = vmul.f32 %v1540, 0.35355338
        %v1684 = vmul.f32 %v1586, 0.35355338
        %v1685 = vmul.f32 %v1632, 0.35355338
        %v1686 = vmul.f32 %v1678, 0.35355338
        %vm1687 = vcmask 80896
        %v1688 = vsel %vm1687, %v1683, -inf
        %1689 = vmax.xlane.f32.xlu0 %v1688
        %v1690 = vpop.xlane.xlu0 %1689
        %v1691 = vsel %vm1687, %v1684, -inf
        %1692 = vmax.xlane.f32.xlu0 %v1691
        %v1693 = vpop.xlane.xlu0 %1692
        %v1694 = vsel %vm1687, %v1685, -inf
        %1695 = vmax.xlane.f32.xlu0 %v1694
        %v1696 = vpop.xlane.xlu0 %1695
        %v1697 = vsel %vm1687, %v1686, -inf
        %1698 = vmax.xlane.f32.xlu0 %v1697
        %v1699 = vpop.xlane.xlu0 %1698
        %v1700 = vsub.f32 %v1683, %v1690
        %v1701 = vsub.f32 %v1684, %v1693
        %v1702 = vsub.f32 %v1685, %v1696
        %v1703 = vsub.f32 %v1686, %v1699
        %v1704 = vmul.f32 %v1700, 1.442695
        %v1705 = vpow.pop %v1704
        %v1706 = vmul.f32 %v1701, 1.442695
        %v1707 = vpow.pop %v1706
        %v1708 = vmul.f32 %v1702, 1.442695
        %v1709 = vpow.pop %v1708
        %v1710 = vmul.f32 %v1703, 1.442695
        %v1711 = vpow.pop %v1710
        %v1712 = vsel %vm1687, %v1705, 0.0
        %1713 = vadd.xlane.f32.xlu0 %v1712
        %v1714 = vpop.xlane.xlu0 %1713
        %v1715 = vsel %vm1687, %v1707, 0.0
        %1716 = vadd.xlane.f32.xlu0 %v1715
        %v1717 = vpop.xlane.xlu0 %1716
        %v1718 = vsel %vm1687, %v1709, 0.0
        %1719 = vadd.xlane.f32.xlu0 %v1718
        %v1720 = vpop.xlane.xlu0 %1719
        %v1721 = vsel %vm1687, %v1711, 0.0
        %1722 = vadd.xlane.f32.xlu0 %v1721
        %v1723 = vpop.xlane.xlu0 %1722
        %v1724 = vrcp.pop %v1714
        %v1725 = vrcp.pop %v1717
        %v1726 = vrcp.pop %v1720
        %v1727 = vrcp.pop %v1723
        %v1728 = vmul.f32 %v1705, %v1724
        %v1729 = vmul.f32 %v1707, %v1725
        %v1730 = vmul.f32 %v1709, %v1726
        %v1731 = vmul.f32 %v1711, %v1727
        %v1732 = vpack.c.bf16 %v1728, %v1728
        %v1733 = vpack.c.bf16 %v1729, %v1729
        %v1734 = vpack.c.bf16 %v1730, %v1730
        %v1735 = vpack.c.bf16 %v1731, %v1731
        %1737 = vrot.lane.b32.xlu0 %v1495, 96
        %v1738 = vpop.permute.xlu0 %1737
        %v1740 = vsel %vm1687, %v1732, 0
        %vm1742 = vcmask 1044480
        %v1744 = vsel %vm1742, %v1738, 0
        %1746 = vmatprep.subr.bf16.mxu0 0
        %1747 = vmatpush1.bf16.msra.mxu0 %v1744
        %1748 = vmatprep.subr.bf16.mxu0 0
        %1749 = vmatpush1.bf16.msra.mxu0 0
        %1750 = vmatprep.subr.bf16.mxu0 0
        %1751 = vmatpush1.bf16.msra.mxu0 0
        %1752 = vmatprep.subr.bf16.mxu0 0
        %1753 = vmatpush1.bf16.msra.mxu0 0
        %1754 = vmatprep.subr.bf16.mxu0 0
        %1755 = vmatpush1.bf16.msra.mxu0 0
        %1756 = vmatprep.subr.bf16.mxu0 0
        %1757 = vmatpush1.bf16.msra.mxu0 0
        %1758 = vmatprep.subr.bf16.mxu0 0
        %1759 = vmatpush1.bf16.msra.mxu0 0
        %1760 = vmatprep.subr.bf16.mxu0 0
        %1761 = vmatpush1.bf16.msra.mxu0 0
        %1762 = vmatprep.subr.bf16.mxu0 0
        %1763 = vmatpush1.bf16.msra.mxu0 0
        %1764 = vmatprep.subr.bf16.mxu0 0
        %1765 = vmatpush1.bf16.msra.mxu0 0
        %1766 = vmatprep.subr.bf16.mxu0 0
        %1767 = vmatpush1.bf16.msra.mxu0 0
        %1768 = vmatprep.subr.bf16.mxu0 0
        %1769 = vmatpush1.bf16.msra.mxu0 0
        %1770 = vmatprep.subr.bf16.mxu0 0
        %1771 = vmatpush1.bf16.msra.mxu0 0
        %1772 = vmatprep.subr.bf16.mxu0 0
        %1773 = vmatpush1.bf16.msra.mxu0 0
        %1774 = vmatprep.subr.bf16.mxu0 0
        %1775 = vmatpush1.bf16.msra.mxu0 0
        %1776 = vmatprep.subr.bf16.mxu0 0
        %1777 = vmatpush1.bf16.msra.mxu0 0
        %1778 = vmatprep.mubr.bf16.mxu0 0
        %1779 = vmatmul.mubr.bf16.gmra.mrb[0].mxu0 %v1740
        %v1780 = vpop.f32.mrb[0].mxu0
        %v1781 = vadd.f32 0.0, %v1780
        %v1782 = vpop.f32.mrb[0].mxu0
        %v1783 = vpop.f32.mrb[0].mxu0
        %v1784 = vpop.f32.mrb[0].mxu0
        %1785 = vdwg.mxu0
        %1787 = vrot.lane.b32.xlu0 %v1496, 96
        %v1788 = vpop.permute.xlu0 %1787
        %v1790 = vsel %vm1687, %v1733, 0
        %v1793 = vsel %vm1742, %v1788, 0
        %1795 = vmatprep.subr.bf16.mxu0 0
        %1796 = vmatpush1.bf16.msra.mxu0 %v1793
        %1797 = vmatprep.subr.bf16.mxu0 0
        %1798 = vmatpush1.bf16.msra.mxu0 0
        %1799 = vmatprep.subr.bf16.mxu0 0
        %1800 = vmatpush1.bf16.msra.mxu0 0
        %1801 = vmatprep.subr.bf16.mxu0 0
        %1802 = vmatpush1.bf16.msra.mxu0 0
        %1803 = vmatprep.subr.bf16.mxu0 0
        %1804 = vmatpush1.bf16.msra.mxu0 0
        %1805 = vmatprep.subr.bf16.mxu0 0
        %1806 = vmatpush1.bf16.msra.mxu0 0
        %1807 = vmatprep.subr.bf16.mxu0 0
        %1808 = vmatpush1.bf16.msra.mxu0 0
        %1809 = vmatprep.subr.bf16.mxu0 0
        %1810 = vmatpush1.bf16.msra.mxu0 0
        %1811 = vmatprep.subr.bf16.mxu0 0
        %1812 = vmatpush1.bf16.msra.mxu0 0
        %1813 = vmatprep.subr.bf16.mxu0 0
        %1814 = vmatpush1.bf16.msra.mxu0 0
        %1815 = vmatprep.subr.bf16.mxu0 0
        %1816 = vmatpush1.bf16.msra.mxu0 0
        %1817 = vmatprep.subr.bf16.mxu0 0
        %1818 = vmatpush1.bf16.msra.mxu0 0
        %1819 = vmatprep.subr.bf16.mxu0 0
        %1820 = vmatpush1.bf16.msra.mxu0 0
        %1821 = vmatprep.subr.bf16.mxu0 0
        %1822 = vmatpush1.bf16.msra.mxu0 0
        %1823 = vmatprep.subr.bf16.mxu0 0
        %1824 = vmatpush1.bf16.msra.mxu0 0
        %1825 = vmatprep.subr.bf16.mxu0 0
        %1826 = vmatpush1.bf16.msra.mxu0 0
        %1827 = vmatprep.mubr.bf16.mxu0 0
        %1828 = vmatmul.mubr.bf16.gmra.mrb[0].mxu0 %v1790
        %v1829 = vpop.f32.mrb[0].mxu0
        %v1830 = vadd.f32 0.0, %v1829
        %v1831 = vpop.f32.mrb[0].mxu0
        %v1832 = vpop.f32.mrb[0].mxu0
        %v1833 = vpop.f32.mrb[0].mxu0
        %1834 = vdwg.mxu0
        %1836 = vrot.lane.b32.xlu0 %v1497, 96
        %v1837 = vpop.permute.xlu0 %1836
        %v1839 = vsel %vm1687, %v1734, 0
        %v1842 = vsel %vm1742, %v1837, 0
        %1844 = vmatprep.subr.bf16.mxu0 0
        %1845 = vmatpush1.bf16.msra.mxu0 %v1842
        %1846 = vmatprep.subr.bf16.mxu0 0
        %1847 = vmatpush1.bf16.msra.mxu0 0
        %1848 = vmatprep.subr.bf16.mxu0 0
        %1849 = vmatpush1.bf16.msra.mxu0 0
        %1850 = vmatprep.subr.bf16.mxu0 0
        %1851 = vmatpush1.bf16.msra.mxu0 0
        %1852 = vmatprep.subr.bf16.mxu0 0
        %1853 = vmatpush1.bf16.msra.mxu0 0
        %1854 = vmatprep.subr.bf16.mxu0 0
        %1855 = vmatpush1.bf16.msra.mxu0 0
        %1856 = vmatprep.subr.bf16.mxu0 0
        %1857 = vmatpush1.bf16.msra.mxu0 0
        %1858 = vmatprep.subr.bf16.mxu0 0
        %1859 = vmatpush1.bf16.msra.mxu0 0
        %1860 = vmatprep.subr.bf16.mxu0 0
        %1861 = vmatpush1.bf16.msra.mxu0 0
        %1862 = vmatprep.subr.bf16.mxu0 0
        %1863 = vmatpush1.bf16.msra.mxu0 0
        %1864 = vmatprep.subr.bf16.mxu0 0
        %1865 = vmatpush1.bf16.msra.mxu0 0
        %1866 = vmatprep.subr.bf16.mxu0 0
        %1867 = vmatpush1.bf16.msra.mxu0 0
        %1868 = vmatprep.subr.bf16.mxu0 0
        %1869 = vmatpush1.bf16.msra.mxu0 0
        %1870 = vmatprep.subr.bf16.mxu0 0
        %1871 = vmatpush1.bf16.msra.mxu0 0
        %1872 = vmatprep.subr.bf16.mxu0 0
        %1873 = vmatpush1.bf16.msra.mxu0 0
        %1874 = vmatprep.subr.bf16.mxu0 0
        %1875 = vmatpush1.bf16.msra.mxu0 0
        %1876 = vmatprep.mubr.bf16.mxu0 0
        %1877 = vmatmul.mubr.bf16.gmra.mrb[0].mxu0 %v1839
        %v1878 = vpop.f32.mrb[0].mxu0
        %v1879 = vadd.f32 0.0, %v1878
        %v1880 = vpop.f32.mrb[0].mxu0
        %v1881 = vpop.f32.mrb[0].mxu0
        %v1882 = vpop.f32.mrb[0].mxu0
        %1883 = vdwg.mxu0
        %1885 = vrot.lane.b32.xlu0 %v1498, 96
        %v1886 = vpop.permute.xlu0 %1885
        %v1888 = vsel %vm1687, %v1735, 0
        %v1891 = vsel %vm1742, %v1886, 0
        %1893 = vmatprep.subr.bf16.mxu0 0
        %1894 = vmatpush1.bf16.msra.mxu0 %v1891
        %1895 = vmatprep.subr.bf16.mxu0 0
        %1896 = vmatpush1.bf16.msra.mxu0 0
        %1897 = vmatprep.subr.bf16.mxu0 0
        %1898 = vmatpush1.bf16.msra.mxu0 0
        %1899 = vmatprep.subr.bf16.mxu0 0
        %1900 = vmatpush1.bf16.msra.mxu0 0
        %1901 = vmatprep.subr.bf16.mxu0 0
        %1902 = vmatpush1.bf16.msra.mxu0 0
        %1903 = vmatprep.subr.bf16.mxu0 0
        %1904 = vmatpush1.bf16.msra.mxu0 0
        %1905 = vmatprep.subr.bf16.mxu0 0
        %1906 = vmatpush1.bf16.msra.mxu0 0
        %1907 = vmatprep.subr.bf16.mxu0 0
        %1908 = vmatpush1.bf16.msra.mxu0 0
        %1909 = vmatprep.subr.bf16.mxu0 0
        %1910 = vmatpush1.bf16.msra.mxu0 0
        %1911 = vmatprep.subr.bf16.mxu0 0
        %1912 = vmatpush1.bf16.msra.mxu0 0
        %1913 = vmatprep.subr.bf16.mxu0 0
        %1914 = vmatpush1.bf16.msra.mxu0 0
        %1915 = vmatprep.subr.bf16.mxu0 0
        %1916 = vmatpush1.bf16.msra.mxu0 0
        %1917 = vmatprep.subr.bf16.mxu0 0
        %1918 = vmatpush1.bf16.msra.mxu0 0
        %1919 = vmatprep.subr.bf16.mxu0 0
        %1920 = vmatpush1.bf16.msra.mxu0 0
        %1921 = vmatprep.subr.bf16.mxu0 0
        %1922 = vmatpush1.bf16.msra.mxu0 0
        %1923 = vmatprep.subr.bf16.mxu0 0
        %1924 = vmatpush1.bf16.msra.mxu0 0
        %1925 = vmatprep.mubr.bf16.mxu0 0
        %1926 = vmatmul.mubr.bf16.gmra.mrb[0].mxu0 %v1888
        %v1927 = vpop.f32.mrb[0].mxu0
        %v1928 = vadd.f32 0.0, %v1927
        %v1929 = vpop.f32.mrb[0].mxu0
        %v1930 = vpop.f32.mrb[0].mxu0
        %v1931 = vpop.f32.mrb[0].mxu0
        %1932 = vdwg.mxu0
        %1934 = vrot.lane.b32.xlu0 %v1830, 8
        %v1935 = vpop.permute.xlu0 %1934
        %1938 = vrot.lane.b32.xlu0 %v1879, 16
        %v1939 = vpop.permute.xlu0 %1938
        %1942 = vrot.lane.b32.xlu0 %v1928, 24
        %v1943 = vpop.permute.xlu0 %1942
        %v1945 = vsel %vm790, %v1781, %v1935
        %v1946 = vsel %vm1246, %v1945, %v1939
        %v1947 = vsel %vm1248, %v1946, %v1943
        %v1948 = vsel %vm1687, %v1728, 0.0
        %v1949 = vsel %vm1687, %v1729, 0.0
        %v1950 = vadd.f32 %v1948, %v1949
        %v1951 = vsel %vm1687, %v1730, 0.0
        %v1952 = vadd.f32 %v1950, %v1951
        %v1953 = vsel %vm1687, %v1731, 0.0
        %v1954 = vadd.f32 %v1952, %v1953
        %v1955 = vmul.f32 %v1954, %v1257
        %v1956 = vpack.c.bf16 %v1947, %v1947
        %v1957 = vlaneseq
        %v1958 = vshrl.u32 %v1957, 7
        %v1959 = vsub.s32 1, %v1958
        %v1960 = vrot.slane %v697, %v1959
        %v1965 = vunpack.c.l.b16 %v691
        %v1966 = vunpack.c.l.b16 %v692
        %v1967 = vunpack.c.l.b16 %v693
        %v1968 = vunpack.c.l.b16 %v694
        %v1969 = vpack.c.b16 %v1966, %v1965
        %v1970 = vpack.c.b16 %v1968, %v1967
        %v1974 = vsel %vm729, %v1956, 0
        %1976 = vmatprep.subr.bf16.mxu0 0
        %1977 = vmatpush1.bf16.msra.mxu0 %v1969
        %1978 = vmatprep.subr.bf16.mxu0 0
        %1979 = vmatpush1.bf16.msra.mxu0 %v1970
        %1980 = vmatprep.subr.bf16.mxu0 0
        %1981 = vmatpush1.bf16.msra.mxu0 0
        %1982 = vmatprep.subr.bf16.mxu0 0
        %1983 = vmatpush1.bf16.msra.mxu0 0
        %1984 = vmatprep.subr.bf16.mxu0 0
        %1985 = vmatpush1.bf16.msra.mxu0 0
        %1986 = vmatprep.subr.bf16.mxu0 0
        %1987 = vmatpush1.bf16.msra.mxu0 0
        %1988 = vmatprep.subr.bf16.mxu0 0
        %1989 = vmatpush1.bf16.msra.mxu0 0
        %1990 = vmatprep.subr.bf16.mxu0 0
        %1991 = vmatpush1.bf16.msra.mxu0 0
        %1992 = vmatprep.subr.bf16.mxu0 0
        %1993 = vmatpush1.bf16.msra.mxu0 0
        %1994 = vmatprep.subr.bf16.mxu0 0
        %1995 = vmatpush1.bf16.msra.mxu0 0
        %1996 = vmatprep.subr.bf16.mxu0 0
        %1997 = vmatpush1.bf16.msra.mxu0 0
        %1998 = vmatprep.subr.bf16.mxu0 0
        %1999 = vmatpush1.bf16.msra.mxu0 0
        %2000 = vmatprep.subr.bf16.mxu0 0
        %2001 = vmatpush1.bf16.msra.mxu0 0
        %2002 = vmatprep.subr.bf16.mxu0 0
        %2003 = vmatpush1.bf16.msra.mxu0 0
        %2004 = vmatprep.subr.bf16.mxu0 0
        %2005 = vmatpush1.bf16.msra.mxu0 0
        %2006 = vmatprep.subr.bf16.mxu0 0
        %2007 = vmatpush1.bf16.msra.mxu0 0
        %2008 = vmatprep.mubr.bf16.mxu0 0
        %2009 = vmatmul.mubr.bf16.gmra.mrb[0].mxu0 %v1974
        %v2010 = vpop.f32.mrb[0].mxu0
        %v2011 = vadd.f32 %v1960, %v2010
        %v2012 = vpop.f32.mrb[0].mxu0
        %v2013 = vpop.f32.mrb[0].mxu0
        %v2014 = vpop.f32.mrb[0].mxu0
        %2015 = vdwg.mxu0
        %v2016 = vadd.f32 %v1343, %v2011
        %v2017 = vsel %vm729, %v2016, 0.0
        %2018 = vadd.xlane.f32.xlu0 %v2017
        %v2019 = vpop.xlane.xlu0 %2018
        %v2020 = vmul.f32 %v2019, %v1323
        %v2021 = vsub.f32 %v2016, %v2020
        %v2022 = vmul.f32 %v2021, %v2021
        %v2023 = vsel %vm729, %v2022, 0.0
        %2024 = vadd.xlane.f32.xlu0 %v2023
        %v2025 = vpop.xlane.xlu0 %2024
        %v2026 = vmul.f32 %v2025, %v1323
        %v2027 = vadd.f32 %v2026, 1e-05
        %v2028 = vrsqrt.pop %v2027
        %v2029 = vmul.f32 %v2021, %v2028
        %v2030 = vlaneseq
        %v2031 = vshrl.u32 %v2030, 7
        %v2032 = vsub.s32 5, %v2031
        %v2033 = vrot.slane %v697, %v2032
        %v2034 = vmul.f32 %v2029, %v2033
        %v2035 = vlaneseq
        %v2036 = vshrl.u32 %v2035, 7
        %v2037 = vsub.s32 6, %v2036
        %v2038 = vrot.slane %v697, %v2037
        %v2039 = vadd.f32 %v2034, %v2038
        %v2040 = vpack.c.bf16 %v2039, %v2039
        %v2042 = vlaneseq
        %v2043 = vshrl.u32 %v2042, 7
        %v2044 = vsub.s32 0, %v2043
        %v2045 = vrot.slane %v703, %v2044
        %v2051 = vunpack.c.l.b16 %v699
        %v2052 = vunpack.c.l.b16 %v700
        %v2053 = vunpack.c.l.b16 %v701
        %v2054 = vunpack.c.l.b16 %v702
        %v2055 = vpack.c.b16 %v2052, %v2051
        %v2056 = vpack.c.b16 %v2054, %v2053
        %v2060 = vsel %vm729, %v2040, 0
        %2062 = vmatprep.subr.bf16.mxu0 0
        %2063 = vmatpush1.bf16.msra.mxu0 %v2055
        %2064 = vmatprep.subr.bf16.mxu0 0
        %2065 = vmatpush1.bf16.msra.mxu0 %v2056
        %2066 = vmatprep.subr.bf16.mxu0 0
        %2067 = vmatpush1.bf16.msra.mxu0 0
        %2068 = vmatprep.subr.bf16.mxu0 0
        %2069 = vmatpush1.bf16.msra.mxu0 0
        %2070 = vmatprep.subr.bf16.mxu0 0
        %2071 = vmatpush1.bf16.msra.mxu0 0
        %2072 = vmatprep.subr.bf16.mxu0 0
        %2073 = vmatpush1.bf16.msra.mxu0 0
        %2074 = vmatprep.subr.bf16.mxu0 0
        %2075 = vmatpush1.bf16.msra.mxu0 0
        %2076 = vmatprep.subr.bf16.mxu0 0
        %2077 = vmatpush1.bf16.msra.mxu0 0
        %2078 = vmatprep.subr.bf16.mxu0 0
        %2079 = vmatpush1.bf16.msra.mxu0 0
        %2080 = vmatprep.subr.bf16.mxu0 0
        %2081 = vmatpush1.bf16.msra.mxu0 0
        %2082 = vmatprep.subr.bf16.mxu0 0
        %2083 = vmatpush1.bf16.msra.mxu0 0
        %2084 = vmatprep.subr.bf16.mxu0 0
        %2085 = vmatpush1.bf16.msra.mxu0 0
        %2086 = vmatprep.subr.bf16.mxu0 0
        %2087 = vmatpush1.bf16.msra.mxu0 0
        %2088 = vmatprep.subr.bf16.mxu0 0
        %2089 = vmatpush1.bf16.msra.mxu0 0
        %2090 = vmatprep.subr.bf16.mxu0 0
        %2091 = vmatpush1.bf16.msra.mxu0 0
        %2092 = vmatprep.subr.bf16.mxu0 0
        %2093 = vmatpush1.bf16.msra.mxu0 0
        %2094 = vmatprep.mubr.bf16.mxu0 0
        %2095 = vmatmul.mubr.bf16.gmra.mrb[0].mxu0 %v2060
        %v2096 = vpop.f32.mrb[0].mxu0
        %v2097 = vadd.f32 %v2045, %v2096
        %v2098 = vpop.f32.mrb[0].mxu0
        %v2099 = vpop.f32.mrb[0].mxu0
        %v2100 = vpop.f32.mrb[0].mxu0
        %2101 = vdwg.mxu0
        %v2102 = vmax.f32 %v2097, 0.0
        %v2103 = vpack.c.bf16 %v2102, %v2102
        %v2104 = vlaneseq
        %v2105 = vshrl.u32 %v2104, 7
        %v2106 = vsub.s32 2, %v2105
        %v2107 = vrot.slane %v697, %v2106
        %v2116 = vunpack.c.l.b16 %v704
        %v2117 = vunpack.c.l.b16 %v705
        %v2118 = vunpack.c.l.b16 %v706
        %v2119 = vunpack.c.l.b16 %v707
        %v2120 = vunpack.c.l.b16 %v708
        %v2121 = vunpack.c.l.b16 %v709
        %v2122 = vunpack.c.l.b16 %v710
        %v2123 = vunpack.c.l.b16 %v711
        %v2124 = vpack.c.b16 %v2117, %v2116
        %v2125 = vpack.c.b16 %v2119, %v2118
        %v2126 = vpack.c.b16 %v2121, %v2120
        %v2127 = vpack.c.b16 %v2123, %v2122
        %vm2132 = vcmask 523264
        %v2134 = vsel %vm2132, %v2103, 0
        %2136 = vmatprep.subr.bf16.mxu0 0
        %2137 = vmatpush1.bf16.msra.mxu0 %v2124
        %2138 = vmatprep.subr.bf16.mxu0 0
        %2139 = vmatpush1.bf16.msra.mxu0 %v2125
        %2140 = vmatprep.subr.bf16.mxu0 0
        %2141 = vmatpush1.bf16.msra.mxu0 %v2126
        %2142 = vmatprep.subr.bf16.mxu0 0
        %2143 = vmatpush1.bf16.msra.mxu0 %v2127
        %2144 = vmatprep.subr.bf16.mxu0 0
        %2145 = vmatpush1.bf16.msra.mxu0 0
        %2146 = vmatprep.subr.bf16.mxu0 0
        %2147 = vmatpush1.bf16.msra.mxu0 0
        %2148 = vmatprep.subr.bf16.mxu0 0
        %2149 = vmatpush1.bf16.msra.mxu0 0
        %2150 = vmatprep.subr.bf16.mxu0 0
        %2151 = vmatpush1.bf16.msra.mxu0 0
        %2152 = vmatprep.subr.bf16.mxu0 0
        %2153 = vmatpush1.bf16.msra.mxu0 0
        %2154 = vmatprep.subr.bf16.mxu0 0
        %2155 = vmatpush1.bf16.msra.mxu0 0
        %2156 = vmatprep.subr.bf16.mxu0 0
        %2157 = vmatpush1.bf16.msra.mxu0 0
        %2158 = vmatprep.subr.bf16.mxu0 0
        %2159 = vmatpush1.bf16.msra.mxu0 0
        %2160 = vmatprep.subr.bf16.mxu0 0
        %2161 = vmatpush1.bf16.msra.mxu0 0
        %2162 = vmatprep.subr.bf16.mxu0 0
        %2163 = vmatpush1.bf16.msra.mxu0 0
        %2164 = vmatprep.subr.bf16.mxu0 0
        %2165 = vmatpush1.bf16.msra.mxu0 0
        %2166 = vmatprep.subr.bf16.mxu0 0
        %2167 = vmatpush1.bf16.msra.mxu0 0
        %2168 = vmatprep.mubr.bf16.mxu0 0
        %2169 = vmatmul.mubr.bf16.gmra.mrb[0].mxu0 %v2134
        %v2170 = vpop.f32.mrb[0].mxu0
        %v2171 = vadd.f32 %v2107, %v2170
        %v2172 = vpop.f32.mrb[0].mxu0
        %v2173 = vpop.f32.mrb[0].mxu0
        %v2174 = vpop.f32.mrb[0].mxu0
        %2175 = vdwg.mxu0
        %v2176 = vadd.f32 %v2039, %v2171
        %v2177 = vsel %vm729, %v2176, 0.0
        %2178 = vadd.xlane.f32.xlu0 %v2177
        %v2179 = vpop.xlane.xlu0 %2178
        %v2180 = vmul.f32 %v2179, %v1323
        %v2181 = vsub.f32 %v2176, %v2180
        %v2182 = vmul.f32 %v2181, %v2181
        %v2183 = vsel %vm729, %v2182, 0.0
        %2184 = vadd.xlane.f32.xlu0 %v2183
        %v2185 = vpop.xlane.xlu0 %2184
        %v2186 = vmul.f32 %v2185, %v1323
        %v2187 = vadd.f32 %v2186, 1e-05
        %v2188 = vrsqrt.pop %v2187
        %v2189 = vmul.f32 %v2181, %v2188
        %v2190 = vlaneseq
        %v2191 = vshrl.u32 %v2190, 7
        %v2192 = vsub.s32 7, %v2191
        %v2193 = vrot.slane %v697, %v2192
        %v2194 = vmul.f32 %v2189, %v2193
        %v2195 = vlaneseq
        %v2196 = vshrl.u32 %v2195, 7
        %v2197 = vsub.s32 0, %v2196
        %v2198 = vrot.slane %v698, %v2197
        %v2199 = vadd.f32 %v2194, %v2198
        %2200 = vst.msk [vmem:[#allocation2] sm:$0xff] %vm729, %v2199
        %2201 = vst.msk [vmem:[%s658] sm:$0xff] %vm790, %v1258
        %2202 = vst.msk [vmem:[%s666] sm:$0xff] %vm1687, %v1955
        %p2203 = scmp.eq.s32.totalorder %s34, 1
        // Predicated region
        $region73: #{transformer_decoder_forward.1} parent=67 // pred_check
          %p2204 = pneg %p2203
        $region74: #{transformer_decoder_forward.1} parent=67 // pred_check_branch
          %2206 = sbr.rel (%p2204) target = $region76
        $region75: #{transformer_decoder_forward.1} parent=67 // pred_region
          %v2207 = vpack.c.bf16 %v2199, %v2199
          %v2208 = vld [vmem:[%s10] sm:$0xf]
          %v2209 = vld [vmem:[%s10 + $0x4] sm:$0xf]
          %v2210 = vld [vmem:[%s10 + $0x8] sm:$0xf]
          %v2211 = vld [vmem:[%s10 + $0xc] sm:$0xf]
          %v2212 = vld [vmem:[%s11] sm:$0x1]
          %v2214 = vlaneseq
          %v2215 = vshrl.u32 %v2214, 7
          %v2216 = vsub.s32 0, %v2215
          %v2217 = vrot.slane %v2212, %v2216
          %v2223 = vunpack.c.l.b16 %v2208
          %v2224 = vunpack.c.l.b16 %v2209
          %v2225 = vunpack.c.l.b16 %v2210
          %v2226 = vunpack.c.l.b16 %v2211
          %v2227 = vpack.c.b16 %v2224, %v2223
          %v2228 = vpack.c.b16 %v2226, %v2225
          %v2232 = vsel %vm729, %v2207, 0
          %2234 = vmatprep.subr.bf16.mxu0 0
          %2235 = vmatpush1.bf16.msra.mxu0 %v2227
          %2236 = vmatprep.subr.bf16.mxu0 0
          %2237 = vmatpush1.bf16.msra.mxu0 %v2228
          %2238 = vmatprep.subr.bf16.mxu0 0
          %2239 = vmatpush1.bf16.msra.mxu0 0
          %2240 = vmatprep.subr.bf16.mxu0 0
          %2241 = vmatpush1.bf16.msra.mxu0 0
          %2242 = vmatprep.subr.bf16.mxu0 0
          %2243 = vmatpush1.bf16.msra.mxu0 0
          %2244 = vmatprep.subr.bf16.mxu0 0
          %2245 = vmatpush1.bf16.msra.mxu0 0
          %2246 = vmatprep.subr.bf16.mxu0 0
          %2247 = vmatpush1.bf16.msra.mxu0 0
          %2248 = vmatprep.subr.bf16.mxu0 0
          %2249 = vmatpush1.bf16.msra.mxu0 0
          %2250 = vmatprep.subr.bf16.mxu0 0
          %2251 = vmatpush1.bf16.msra.mxu0 0
          %2252 = vmatprep.subr.bf16.mxu0 0
          %2253 = vmatpush1.bf16.msra.mxu0 0
          %2254 = vmatprep.subr.bf16.mxu0 0
          %2255 = vmatpush1.bf16.msra.mxu0 0
          %2256 = vmatprep.subr.bf16.mxu0 0
          %2257 = vmatpush1.bf16.msra.mxu0 0
          %2258 = vmatprep.subr.bf16.mxu0 0
          %2259 = vmatpush1.bf16.msra.mxu0 0
          %2260 = vmatprep.subr.bf16.mxu0 0
          %2261 = vmatpush1.bf16.msra.mxu0 0
          %2262 = vmatprep.subr.bf16.mxu0 0
          %2263 = vmatpush1.bf16.msra.mxu0 0
          %2264 = vmatprep.subr.bf16.mxu0 0
          %2265 = vmatpush1.bf16.msra.mxu0 0
          %2266 = vmatprep.mubr.bf16.mxu0 0
          %2267 = vmatmul.mubr.bf16.gmra.mrb[0].mxu0 %v2232
          %v2268 = vpop.f32.mrb[0].mxu0
          %v2269 = vadd.f32 %v2217, %v2268
          %v2270 = vpop.f32.mrb[0].mxu0
          %v2271 = vpop.f32.mrb[0].mxu0
          %v2272 = vpop.f32.mrb[0].mxu0
          %2273 = vdwg.mxu0
          %2274 = vst [vmem:[%s589] sm:$0xff] %v2269
        $region76: #{transformer_decoder_forward.1} parent=67 // pred_fallthru
          _
        %s2275 = sand.u32 %s346, 1
        %s2276 = scalar_lea.sflag [#allocation4], %s2275
        %s2277 = sand.u32 %s346, 1
        %s2278 = smul.addr %s2277, 8
        %s2279 = scalar_lea.vmem [#allocation3], %s2278
        %p2280 = scmp.lt.s32.totalorder %s34, 1
        %s2281 = scalar_select %p2280, %s34, 1
        %p2282 = scmp.lt.s32.totalorder %s33, 1
        %s2283 = scalar_select %p2282, %s33, 1
        %s2284 = smul.addr %s2281, 2
        %s2285 = sadd.s32 %s2283, %s2284
        %s2286 = smul.addr %s2285, 8
        %s2287 = scalar_lea.vmem %s13, %s2286
        %p2288 = scmp.lt.s32.totalorder %s34, 1
        %s2289 = scalar_select %p2288, %s34, 1
        %p2290 = scmp.lt.s32.totalorder %s33, 1
        %s2291 = scalar_select %p2290, %s33, 1
        %s2292 = smul.addr %s2289, 2
        %s2293 = sadd.s32 %s2291, %s2292
        %s2294 = smul.addr %s2293, 8
        %s2295 = scalar_lea.vmem %s14, %s2294
        // Predicated region
        $region77: #{transformer_decoder_forward.1} parent=67 // pred_check
          %p2296 = pneg %p356
        $region78: #{transformer_decoder_forward.1} parent=67 // pred_check_branch
          %2298 = sbr.rel (%p2296) target = $region80
        $region79: #{transformer_decoder_forward.1} parent=67 // pred_region
          %s2300 = ssub.s32 128, 128
          %2301 = vsyncadd %s2276, %s2300
          %s2302 = smul.addr %s33, 128
          %s2303 = scalar_lea.hbm %s12, %s2302
          %s2305 = sshll.u32 %s2279, 4
          %s2306 = int_to_ptr.vmem [resolvable:$true] %s2305
          %2308 = dma.vmem_to_hbm [thread:$0]  %s2306, 128, %s2303, %s2276
        $region80: #{transformer_decoder_forward.1} parent=67 // pred_fallthru
          _
        // Predicated region
        $region81: #{transformer_decoder_forward.1} parent=67 // pred_check
          %p2309 = pneg %p384
        $region82: #{transformer_decoder_forward.1} parent=67 // pred_check_branch
          %2311 = sbr.rel (%p2309) target = $region84
        $region83: #{transformer_decoder_forward.1} parent=67 // pred_region
          _
        $region84: #{transformer_decoder_forward.1} parent=67 // pred_fallthru
          _
        // Predicated region
        $region85: #{transformer_decoder_forward.1} parent=67 // pred_check
          %p2312 = pneg %p412
        $region86: #{transformer_decoder_forward.1} parent=67 // pred_check_branch
          %2314 = sbr.rel (%p2312) target = $region88
        $region87: #{transformer_decoder_forward.1} parent=67 // pred_region
          _
        $region88: #{transformer_decoder_forward.1} parent=67 // pred_fallthru
          _
      $region68: #{transformer_decoder_forward.1} parent=5 // pred_fallthru
        _
      %p2315 = scmp.le.s32.totalorder 2, %s24
      // Predicated region
      $region89: #{transformer_decoder_forward.1} parent=5 // pred_check
        %p2316 = pneg %p2315
      $region90: #{transformer_decoder_forward.1} parent=5 // pred_check_branch
        %2318 = sbr.rel (%p2316) target = $region92
      $region91: #{transformer_decoder_forward.1} parent=5 // pred_region
        %s2319 = ssub.s32 %s24, 2
        // Predicated region
        $region93: #{transformer_decoder_forward.1} parent=91 // pred_check
          %p2320 = pneg %p362
        $region94: #{transformer_decoder_forward.1} parent=91 // pred_check_branch
          %2322 = sbr.rel (%p2320) target = $region96
        $region95: #{transformer_decoder_forward.1} parent=91 // pred_region
          %s2323 = sand.u32 %s347, 1
          %s2324 = scalar_lea.sflag [#allocation4], %s2323
          %s2325 = sand.u32 %s347, 1
          %s2326 = smul.addr %s2325, 8
          %s2327 = scalar_lea.vmem [#allocation3], %s2326
          %2328 = dma.done %s2324, 128
        $region96: #{transformer_decoder_forward.1} parent=91 // pred_fallthru
          _
        // Predicated region
        $region97: #{transformer_decoder_forward.1} parent=91 // pred_check
          %p2329 = pneg %p390
        $region98: #{transformer_decoder_forward.1} parent=91 // pred_check_branch
          %2331 = sbr.rel (%p2329) target = $region100
        $region99: #{transformer_decoder_forward.1} parent=91 // pred_region
          %p2332 = scmp.lt.s32.totalorder %s36, 1
          %s2333 = scalar_select %p2332, %s36, 1
          %p2334 = scmp.lt.s32.totalorder %s35, 1
          %s2335 = scalar_select %p2334, %s35, 1
          %s2336 = smul.addr %s2333, 2
          %s2337 = sadd.s32 %s2335, %s2336
          %s2338 = smul.addr %s2337, 8
          %s2339 = scalar_lea.vmem %s13, %s2338
        $region100: #{transformer_decoder_forward.1} parent=91 // pred_fallthru
          _
        // Predicated region
        $region101: #{transformer_decoder_forward.1} parent=91 // pred_check
          %p2340 = pneg %p418
        $region102: #{transformer_decoder_forward.1} parent=91 // pred_check_branch
          %2342 = sbr.rel (%p2340) target = $region104
        $region103: #{transformer_decoder_forward.1} parent=91 // pred_region
          %p2343 = scmp.lt.s32.totalorder %s36, 1
          %s2344 = scalar_select %p2343, %s36, 1
          %p2345 = scmp.lt.s32.totalorder %s35, 1
          %s2346 = scalar_select %p2345, %s35, 1
          %s2347 = smul.addr %s2344, 2
          %s2348 = sadd.s32 %s2346, %s2347
          %s2349 = smul.addr %s2348, 8
          %s2350 = scalar_lea.vmem %s14, %s2349
        $region104: #{transformer_decoder_forward.1} parent=91 // pred_fallthru
          _
      $region92: #{transformer_decoder_forward.1} parent=5 // pred_fallthru
        _
    $region6: #{transformer_decoder_forward.1} parent=1 // loop_footer
      %s28 = sadd.s32 1, %s24
    $region7: #{transformer_decoder_forward.1} parent=1 // loop_footer_branch
      %23 = sbr.rel target = $region3
    $region8: #{transformer_decoder_forward.1} parent=1 // loop_exit
      _
    %2351 = vsyncpa [#allocation4], 1
    %s2352 = scalar_lea.sflag [#allocation4], 1
    %2353 = vsyncpa %s2352, 1

</llo_original>
